<compile_context>
chip_gen: v7x
topology: tpu7x:2x2x1
jax: 0.10.0
libtpu: 0.0.40
codegen_flags: <defaults>
</compile_context>

<pallas_src>
import functools

import jax
import jax.numpy as jnp
from jax.experimental import pallas as pl
from jax.experimental.pallas import tpu as pltpu

EPS = 1e-5


# ----------------------------------------------------------------------------
# Pallas kernels
# ----------------------------------------------------------------------------
def _conv3x3_poly_kernel(xph_ref, w_ref, y_ref, mom_ref, *, stride):
    """3x3 conv (pad=1, arbitrary stride) on one NHWC image.

    The wrapper pre-pads the image and splits it into stride*stride polyphase
    components (bf16), so every in-kernel slice is a static, unit-stride
    window.  Also emits per-image per-channel [sum, sum^2] moments (f32).
    """
    s = stride
    Ci = xph_ref.shape[3]
    _, Ho, Wo, Co = y_ref.shape

    acc = jnp.zeros((Ho * Wo, Co), jnp.float32)
    for kh in range(3):
        for kw in range(3):
            p = (kh % s) * s + (kw % s)          # polyphase component
            qh, qw = kh // s, kw // s            # offset inside the component
            xs = xph_ref[p, qh:qh + Ho, qw:qw + Wo, :]          # (Ho, Wo, Ci) bf16
            xs = xs.reshape(Ho * Wo, Ci)
            acc += jnp.dot(xs, w_ref[kh * 3 + kw],
                           preferred_element_type=jnp.float32)

    y_ref[0] = acc.reshape(Ho, Wo, Co).astype(y_ref.dtype)
    mom_ref[0, 0:1, :] = jnp.sum(acc, axis=0, keepdims=True)
    mom_ref[0, 1:2, :] = jnp.sum(acc * acc, axis=0, keepdims=True)


def _conv3x3_poly_shortcut_kernel(xph_ref, w_ref, wsc_ref,
                                  y_ref, mom_ref, ysc_ref, momsc_ref, *,
                                  stride):
    """Fused conv1 (3x3, pad=1, stride 2) + projection shortcut (1x1, stride 2)
    on one NHWC image.  The shortcut's strided pixels x[2i, 2j] are exactly
    polyphase component (1, 1) of the layout conv1 already reads, so the input
    is loaded from HBM only once for both convolutions.
    Emits [sum, sum^2] moments (f32) for both conv outputs.
    """
    s = stride
    Ci = xph_ref.shape[3]
    _, Ho, Wo, Co = y_ref.shape

    # --- conv1: 9-tap MXU accumulation over shifted polyphase windows -------
    acc = jnp.zeros((Ho * Wo, Co), jnp.float32)
    for kh in range(3):
        for kw in range(3):
            p = (kh % s) * s + (kw % s)
            qh, qw = kh // s, kw // s
            xs = xph_ref[p, qh:qh + Ho, qw:qw + Wo, :]          # (Ho, Wo, Ci) bf16
            xs = xs.reshape(Ho * Wo, Ci)
            acc += jnp.dot(xs, w_ref[kh * 3 + kw],
                           preferred_element_type=jnp.float32)

    y_ref[0] = acc.reshape(Ho, Wo, Co).astype(y_ref.dtype)
    mom_ref[0, 0:1, :] = jnp.sum(acc, axis=0, keepdims=True)
    mom_ref[0, 1:2, :] = jnp.sum(acc * acc, axis=0, keepdims=True)

    # --- shortcut: 1x1 stride-2 conv == single matmul on phase (1, 1) -------
    xs = xph_ref[s + 1, 0:Ho, 0:Wo, :].reshape(Ho * Wo, Ci)      # bf16
    accsc = jnp.dot(xs, wsc_ref[...], preferred_element_type=jnp.float32)
    ysc_ref[0] = accsc.reshape(Ho, Wo, Co).astype(ysc_ref.dtype)
    momsc_ref[0, 0:1, :] = jnp.sum(accsc, axis=0, keepdims=True)
    momsc_ref[0, 1:2, :] = jnp.sum(accsc * accsc, axis=0, keepdims=True)


def _conv3x3_s1_fused_kernel(x_ref, w_ref, s_ref, t_ref, y_ref, mom_ref,
                             xpad_ref):
    """3x3 conv (stride 1, pad 1) on one NHWC image with the previous BN+ReLU
    fused into the operand load: the kernel computes relu(x*s + t), writes it
    into a zero-padded VMEM scratch, then accumulates the 9 taps on the MXU.
    Also emits per-image per-channel [sum, sum^2] moments of the conv output.
    """
    _, H, W, Ci = x_ref.shape
    Co = y_ref.shape[3]

    # fused BN1 + ReLU on the input tile (never materialized in HBM)
    xin = jnp.maximum(x_ref[0].astype(jnp.float32) * s_ref[...] + t_ref[...],
                      0.0)                                        # (H, W, Ci)

    # zero-padded copy in VMEM (border stays 0 == conv padding)
    xpad_ref[...] = jnp.zeros_like(xpad_ref)
    xpad_ref[1:H + 1, 1:W + 1, :] = xin.astype(xpad_ref.dtype)

    acc = jnp.zeros((H * W, Co), jnp.float32)
    for kh in range(3):
        for kw in range(3):
            xs = xpad_ref[kh:kh + H, kw:kw + W, :]                # (H, W, Ci)
            xs = xs.reshape(H * W, Ci).astype(jnp.bfloat16)
            acc += jnp.dot(xs, w_ref[kh * 3 + kw],
                           preferred_element_type=jnp.float32)

    y_ref[0] = acc.reshape(H, W, Co).astype(y_ref.dtype)
    mom_ref[0, 0:1, :] = jnp.sum(acc, axis=0, keepdims=True)
    mom_ref[0, 1:2, :] = jnp.sum(acc * acc, axis=0, keepdims=True)


def _merge_bn_add_relu_kernel(y_ref, r_ref, sy_ref, sr_ref, t_ref, o_ref):
    """out = relu( y*sy + r*sr + t )  -- bn2 + shortcut-BN + add + ReLU."""
    out = (y_ref[...].astype(jnp.float32) * sy_ref[...]
           + r_ref[...].astype(jnp.float32) * sr_ref[...] + t_ref[...])
    o_ref[...] = jnp.maximum(out, 0.0).astype(o_ref.dtype)


# ----------------------------------------------------------------------------
# Pallas wrappers
# ----------------------------------------------------------------------------
def conv1_and_shortcut(x, w_taps, stride, wsc=None):
    """Direct 3x3 conv (pad=1, `stride`) over NHWC x; optionally fused with the
    1x1/stride-2 projection shortcut.  Returns (y1, mom1[, ysc, momsc])."""
    N, H, W, Ci = x.shape
    Co = w_taps.shape[2]
    s = stride
    Ho = (H - 1) // s + 1
    Wo = (W - 1) // s + 1
    Hq = -(-(H + 2) // s)
    Wq = -(-(W + 2) // s)

    # zero-pad (conv padding + phase alignment), split into s*s phases, and
    # cast to bf16 once (operands hit the MXU in bf16 anyway):
    #   xp[n, i*s + a, j*s + b, c]  ->  xph[n*s*s + a*s + b, i, j, c]
    xp = jnp.pad(x, ((0, 0), (1, Hq * s - H - 1), (1, Wq * s - W - 1), (0, 0)))
    xph = (xp.reshape(N, Hq, s, Wq, s, Ci)
             .transpose(0, 2, 4, 1, 3, 5)
             .reshape(N * s * s, Hq, Wq, Ci)
             .astype(jnp.bfloat16))

    in_specs = [
        pl.BlockSpec((s * s, Hq, Wq, Ci), lambda n: (n, 0, 0, 0)),
        pl.BlockSpec((9, Ci, Co), lambda n: (0, 0, 0)),
    ]
    y_spec = pl.BlockSpec((1, Ho, Wo, Co), lambda n: (n, 0, 0, 0))
    mom_spec = pl.BlockSpec((1, 2, Co), lambda n: (n, 0, 0))

    if wsc is None:
        return pl.pallas_call(
            functools.partial(_conv3x3_poly_kernel, stride=s),
            out_shape=(jax.ShapeDtypeStruct((N, Ho, Wo, Co), jnp.bfloat16),
                       jax.ShapeDtypeStruct((N, 2, Co), jnp.float32)),
            grid=(N,),
            in_specs=in_specs,
            out_specs=(y_spec, mom_spec),
            compiler_params=pltpu.CompilerParams(
                dimension_semantics=("parallel",)),
        )(xph, w_taps)

    # fused projection shortcut path (only valid module config: stride == 2)
    assert s == 2, "projection shortcut implies stride == 2 in this module"
    return pl.pallas_call(
        functools.partial(_conv3x3_poly_shortcut_kernel, stride=s),
        out_shape=(jax.ShapeDtypeStruct((N, Ho, Wo, Co), jnp.bfloat16),
                   jax.ShapeDtypeStruct((N, 2, Co), jnp.float32),
                   jax.ShapeDtypeStruct((N, Ho, Wo, Co), jnp.float32),
                   jax.ShapeDtypeStruct((N, 2, Co), jnp.float32)),
        grid=(N,),
        in_specs=in_specs + [pl.BlockSpec((Ci, Co), lambda n: (0, 0))],
        out_specs=(y_spec, mom_spec,
                   pl.BlockSpec((1, Ho, Wo, Co), lambda n: (n, 0, 0, 0)),
                   pl.BlockSpec((1, 2, Co), lambda n: (n, 0, 0))),
        compiler_params=pltpu.CompilerParams(
            dimension_semantics=("parallel",)),
    )(xph, w_taps, wsc)


def conv3x3_fused_bn_relu_input(x, w_taps, scale, shift):
    """3x3 conv (stride 1, pad 1) over NHWC x, with relu(x*scale+shift)
    (the folded BN of the previous conv) fused into the operand load."""
    N, H, W, Ci = x.shape
    Co = w_taps.shape[2]

    return pl.pallas_call(
        _conv3x3_s1_fused_kernel,
        out_shape=(jax.ShapeDtypeStruct((N, H, W, Co), jnp.float32),
                   jax.ShapeDtypeStruct((N, 2, Co), jnp.float32)),
        grid_spec=pltpu.PrefetchScalarGridSpec(
            num_scalar_prefetch=0,
            grid=(N,),
            in_specs=[
                pl.BlockSpec((1, H, W, Ci), lambda n: (n, 0, 0, 0)),
                pl.BlockSpec((9, Ci, Co), lambda n: (0, 0, 0)),
                pl.BlockSpec((1, Ci), lambda n: (0, 0)),
                pl.BlockSpec((1, Ci), lambda n: (0, 0)),
            ],
            out_specs=[
                pl.BlockSpec((1, H, W, Co), lambda n: (n, 0, 0, 0)),
                pl.BlockSpec((1, 2, Co), lambda n: (n, 0, 0)),
            ],
            scratch_shapes=[pltpu.VMEM((H + 2, W + 2, Ci), jnp.float32)],
        ),
        compiler_params=pltpu.CompilerParams(
            dimension_semantics=("parallel",)),
    )(x, w_taps,
      scale.reshape(1, Ci).astype(jnp.float32),
      shift.reshape(1, Ci).astype(jnp.float32))


def merge_bn_add_relu(y, r, sy, sr, t):
    """relu( y*sy + r*sr + t ) fused in one Pallas kernel (residual merge)."""
    N, Ho, Wo, C = y.shape
    return pl.pallas_call(
        _merge_bn_add_relu_kernel,
        out_shape=jax.ShapeDtypeStruct((N, Ho, Wo, C), jnp.float32),
        grid=(N,),
        in_specs=[
            pl.BlockSpec((1, Ho, Wo, C), lambda n: (n, 0, 0, 0)),
            pl.BlockSpec((1, Ho, Wo, C), lambda n: (n, 0, 0, 0)),
            pl.BlockSpec((1, C), lambda n: (0, 0)),
            pl.BlockSpec((1, C), lambda n: (0, 0)),
            pl.BlockSpec((1, C), lambda n: (0, 0)),
        ],
        out_specs=pl.BlockSpec((1, Ho, Wo, C), lambda n: (n, 0, 0, 0)),
        compiler_params=pltpu.CompilerParams(
            dimension_semantics=("parallel",)),
    )(y, r,
      sy.reshape(1, C).astype(jnp.float32),
      sr.reshape(1, C).astype(jnp.float32),
      t.reshape(1, C).astype(jnp.float32))


# ----------------------------------------------------------------------------
# Plain-JAX glue (tiny per-channel math + weight layout)
# ----------------------------------------------------------------------------
def bn_fold(mom, count, gamma, beta):
    """Fold training-mode BN into (scale, shift) from in-kernel moments."""
    tot = jnp.sum(mom, axis=0)                        # (2, C)
    mean = tot[0] / count
    var = jnp.maximum(tot[1] / count - mean * mean, 0.0)   # biased variance
    scale = gamma * jax.lax.rsqrt(var + EPS)
    shift = beta - mean * scale
    return scale, shift


def conv3x3_weight_to_taps(w):
    """(Cout, Cin, 3, 3) -> (9, Cin, Cout) bf16, tap index = kh*3 + kw."""
    Co, Ci, kh, kw = w.shape
    return (jnp.transpose(w, (2, 3, 1, 0))
              .reshape(kh * kw, Ci, Co)
              .astype(jnp.bfloat16))


def conv1x1_weight_to_matrix(w):
    """(Cout, Cin, 1, 1) -> (Cin, Cout) bf16."""
    Co, Ci = w.shape[0], w.shape[1]
    return w.reshape(Co, Ci).T.astype(jnp.bfloat16)


@functools.partial(jax.jit, static_argnums=2)
def res_block_forward(x_nchw, params, stride):
    x = jnp.transpose(x_nchw, (0, 2, 3, 1)).astype(jnp.float32)   # NCHW -> NHWC
    N, H, W, Cin = x.shape
    Cout = params["w1"].shape[0]

    # NOTE: conv biases cancel exactly under training-mode BatchNorm (the mean
    # subtraction removes them), so they are not plumbed into the kernels.
    w1 = conv3x3_weight_to_taps(params["w1"])
    w2 = conv3x3_weight_to_taps(params["w2"])

    # conv1 (+ fused projection shortcut when it exists) with in-kernel moments
    if Cin != Cout:
        wsc = conv1x1_weight_to_matrix(params["wsc"])
        y1, mom1, ysc, momsc = conv1_and_shortcut(x, w1, stride, wsc=wsc)
    else:
        y1, mom1 = conv1_and_shortcut(x, w1, stride)

    Ho, Wo = y1.shape[1], y1.shape[2]
    cnt = N * Ho * Wo
    s1, t1 = bn_fold(mom1, cnt, params["g1"], params["be1"])

    # conv2 with BN1 + ReLU fused into its operand load (+ moments)
    y2, mom2 = conv3x3_fused_bn_relu_input(y1, w2, s1, t1)
    s2, t2 = bn_fold(mom2, cnt, params["g2"], params["be2"])

    if Cin != Cout:
        ssc, tsc = bn_fold(momsc, cnt, params["gsc"], params["besc"])
        resid = ysc
    else:
        resid = x
        ssc = jnp.ones((Cout,), jnp.float32)
        tsc = jnp.zeros((Cout,), jnp.float32)

    # out = relu( bn2(conv2) + bn_sc(shortcut) ), shifts pre-combined
    out = merge_bn_add_relu(y2, resid, s2, ssc, t2 + tsc)
    return jnp.transpose(out, (0, 3, 1, 2))                        # NHWC -> NCHW


# ----------------------------------------------------------------------------
# Plain-JAX reference of the PyTorch module (training-mode BN), for checking
# ----------------------------------------------------------------------------
def res_block_reference(x_nchw, params, stride):
    def conv(x, w, b, s, pad):
        y = jax.lax.conv_general_dilated(
            x, w, window_strides=(s, s), padding=[(pad, pad), (pad, pad)],
            dimension_numbers=("NCHW", "OIHW", "NCHW"))
        return y + b[None, :, None, None]

    def bn(y, g, be):
        mean = jnp.mean(y, axis=(0, 2, 3), keepdims=True)
        var = jnp.var(y, axis=(0, 2, 3), keepdims=True)
        return (g[None, :, None, None] * (y - mean) * jax.lax.rsqrt(var + EPS)
                + be[None, :, None, None])

    x = x_nchw.astype(jnp.float32)
    h = jax.nn.relu(bn(conv(x, params["w1"], params["b1"], stride, 1),
                       params["g1"], params["be1"]))
    y2 = bn(conv(h, params["w2"], params["b2"], 1, 1),
            params["g2"], params["be2"])
    if params["w1"].shape[0] != params["w1"].shape[1]:
        sc = bn(conv(x, params["wsc"], params["bsc"], 2, 0),
                params["gsc"], params["besc"])
    else:
        sc = x
    return jax.nn.relu(y2 + sc)


def init_params(key, in_channels, out_channels):
    ks = jax.random.split(key, 10)
    p = {
        "w1": 0.1 * jax.random.normal(ks[0], (out_channels, in_channels, 3, 3), jnp.float32),
        "b1": 0.1 * jax.random.normal(ks[1], (out_channels,), jnp.float32),
        "g1": 1.0 + 0.1 * jax.random.normal(ks[2], (out_channels,), jnp.float32),
        "be1": 0.1 * jax.random.normal(ks[3], (out_channels,), jnp.float32),
        "w2": 0.1 * jax.random.normal(ks[4], (out_channels, out_channels, 3, 3), jnp.float32),
        "b2": 0.1 * jax.random.normal(ks[5], (out_channels,), jnp.float32),
        "g2": 1.0 + 0.1 * jax.random.normal(ks[6], (out_channels,), jnp.float32),
        "be2": 0.1 * jax.random.normal(ks[7], (out_channels,), jnp.float32),
    }
    if in_channels != out_channels:
        ks2 = jax.random.split(ks[8], 4)
        p["wsc"] = 0.1 * jax.random.normal(ks2[0], (out_channels, in_channels, 1, 1), jnp.float32)
        p["bsc"] = 0.1 * jax.random.normal(ks2[1], (out_channels,), jnp.float32)
        p["gsc"] = 1.0 + 0.1 * jax.random.normal(ks2[2], (out_channels,), jnp.float32)
        p["besc"] = 0.1 * jax.random.normal(ks2[3], (out_channels,), jnp.float32)
    return p


if __name__ == "__main__":
    key = jax.random.PRNGKey(0)
    k_x, k_p, k_p2 = jax.random.split(key, 3)

    # --- case 1: in != out channels -> fused conv1 + 1x1/BN shortcut (stride 2)
    in_channels, out_channels, stride = 4, 8, 2
    x = jax.random.normal(k_x, (2, in_channels, 16, 16), jnp.float32)
    params = init_params(k_p, in_channels, out_channels)

    out = jax.block_until_ready(res_block_forward(x, params, stride))
    assert out.shape == (2, out_channels, 8, 8)
    assert bool(jnp.all(jnp.isfinite(out)))
    ref = jax.block_until_ready(res_block_reference(x, params, stride))
    max_err = float(jnp.max(jnp.abs(out - ref)))
    assert max_err < 1e-1, f"max abs error vs reference (proj): {max_err}"

    # --- case 2: in == out channels -> identity shortcut (stride 1)
    params_id = init_params(k_p2, in_channels, in_channels)
    out_id = jax.block_until_ready(res_block_forward(x, params_id, 1))
    assert out_id.shape == (2, in_channels, 16, 16)
    assert bool(jnp.all(jnp.isfinite(out_id)))
    ref_id = jax.block_until_ready(res_block_reference(x, params_id, 1))
    max_err_id = float(jnp.max(jnp.abs(out_id - ref_id)))
    assert max_err_id < 1e-1, f"max abs error vs reference (id): {max_err_id}"

    print("KERNEL_OK")
</pallas_src>

<mosaic_0001>
module attributes {stable_mosaic.version = 11 : i64} {
  func.func @_conv3x3_poly_shortcut_kernel(%arg0: i32, %arg1: memref<4x9x9x4xbf16, #tpu.memory_space<vmem>>, %arg2: memref<9x4x8xbf16, #tpu.memory_space<vmem>>, %arg3: memref<4x8xbf16, #tpu.memory_space<vmem>>, %arg4: memref<1x8x8x8xbf16, #tpu.memory_space<vmem>>, %arg5: memref<1x2x8xf32, #tpu.memory_space<vmem>>, %arg6: memref<1x8x8x8xf32, #tpu.memory_space<vmem>>, %arg7: memref<1x2x8xf32, #tpu.memory_space<vmem>>) attributes {dimension_semantics = [#tpu.dimension_semantics<parallel>], iteration_bounds = array<i64: 2>, scalar_prefetch = 0 : i64, scratch_operands = 0 : i64, tpu.core_type = #tpu.core_type<tc>, window_params = [{transform_indices = @transform_0, window_bounds = array<i64: 4, 9, 9, 4>}, {pipeline_mode = #tpu.pipeline_mode<synchronous>, transform_indices = @transform_1, window_bounds = array<i64: 9, 4, 8>}, {pipeline_mode = #tpu.pipeline_mode<synchronous>, transform_indices = @transform_2, window_bounds = array<i64: 4, 8>}, {transform_indices = @transform_3, window_bounds = array<i64: 1, 8, 8, 8>}, {transform_indices = @transform_4, window_bounds = array<i64: 1, 2, 8>}, {transform_indices = @transform_5, window_bounds = array<i64: 1, 8, 8, 8>}, {transform_indices = @transform_6, window_bounds = array<i64: 1, 2, 8>}]} {
    %cst = arith.constant 0.000000e+00 : f32
    %0 = vector.broadcast %cst : f32 to vector<64x8xf32>
    %c0 = arith.constant 0 : index
    %c0_0 = arith.constant 0 : index
    %c0_1 = arith.constant 0 : index
    %c0_2 = arith.constant 0 : index
    %1 = vector.load %arg1[%c0, %c0_0, %c0_1, %c0_2] : memref<4x9x9x4xbf16, #tpu.memory_space<vmem>>, vector<1x8x8x4xbf16>
    %2 = vector.shape_cast %1 : vector<1x8x8x4xbf16> to vector<8x8x4xbf16>
    %3 = vector.shape_cast %2 : vector<8x8x4xbf16> to vector<64x4xbf16>
    %c0_3 = arith.constant 0 : index
    %c0_4 = arith.constant 0 : index
    %c0_5 = arith.constant 0 : index
    %4 = vector.load %arg2[%c0_3, %c0_4, %c0_5] : memref<9x4x8xbf16, #tpu.memory_space<vmem>>, vector<1x4x8xbf16>
    %5 = vector.shape_cast %4 : vector<1x4x8xbf16> to vector<4x8xbf16>
    %cst_6 = arith.constant dense<0.000000e+00> : vector<64x8xf32>
    %6 = tpu.matmul %3, %5, %cst_6 {dimension_numbers = #tpu.dot_dimension_numbers<[1], [0], [0], [1], [0, 0, 1, 1], [], []>} : vector<64x4xbf16>, vector<4x8xbf16>, vector<64x8xf32> -> vector<64x8xf32>
    %7 = arith.addf %0, %6 : vector<64x8xf32>
    %c1 = arith.constant 1 : index
    %c0_7 = arith.constant 0 : index
    %c0_8 = arith.constant 0 : index
    %c0_9 = arith.constant 0 : index
    %8 = vector.load %arg1[%c1, %c0_7, %c0_8, %c0_9] : memref<4x9x9x4xbf16, #tpu.memory_space<vmem>>, vector<1x8x8x4xbf16>
    %9 = vector.shape_cast %8 : vector<1x8x8x4xbf16> to vector<8x8x4xbf16>
    %10 = vector.shape_cast %9 : vector<8x8x4xbf16> to vector<64x4xbf16>
    %c1_10 = arith.constant 1 : index
    %c0_11 = arith.constant 0 : index
    %c0_12 = arith.constant 0 : index
    %11 = vector.load %arg2[%c1_10, %c0_11, %c0_12] : memref<9x4x8xbf16, #tpu.memory_space<vmem>>, vector<1x4x8xbf16>
    %12 = vector.shape_cast %11 : vector<1x4x8xbf16> to vector<4x8xbf16>
    %cst_13 = arith.constant dense<0.000000e+00> : vector<64x8xf32>
    %13 = tpu.matmul %10, %12, %cst_13 {dimension_numbers = #tpu.dot_dimension_numbers<[1], [0], [0], [1], [0, 0, 1, 1], [], []>} : vector<64x4xbf16>, vector<4x8xbf16>, vector<64x8xf32> -> vector<64x8xf32>
    %14 = arith.addf %7, %13 : vector<64x8xf32>
    %c0_14 = arith.constant 0 : index
    %c0_15 = arith.constant 0 : index
    %c1_16 = arith.constant 1 : index
    %c0_17 = arith.constant 0 : index
    %15 = vector.load %arg1[%c0_14, %c0_15, %c1_16, %c0_17] : memref<4x9x9x4xbf16, #tpu.memory_space<vmem>>, vector<1x8x8x4xbf16>
    %16 = vector.shape_cast %15 : vector<1x8x8x4xbf16> to vector<8x8x4xbf16>
    %17 = vector.shape_cast %16 : vector<8x8x4xbf16> to vector<64x4xbf16>
    %c2 = arith.constant 2 : index
    %c0_18 = arith.constant 0 : index
    %c0_19 = arith.constant 0 : index
    %18 = vector.load %arg2[%c2, %c0_18, %c0_19] : memref<9x4x8xbf16, #tpu.memory_space<vmem>>, vector<1x4x8xbf16>
    %19 = vector.shape_cast %18 : vector<1x4x8xbf16> to vector<4x8xbf16>
    %cst_20 = arith.constant dense<0.000000e+00> : vector<64x8xf32>
    %20 = tpu.matmul %17, %19, %cst_20 {dimension_numbers = #tpu.dot_dimension_numbers<[1], [0], [0], [1], [0, 0, 1, 1], [], []>} : vector<64x4xbf16>, vector<4x8xbf16>, vector<64x8xf32> -> vector<64x8xf32>
    %21 = arith.addf %14, %20 : vector<64x8xf32>
    %c2_21 = arith.constant 2 : index
    %c0_22 = arith.constant 0 : index
    %c0_23 = arith.constant 0 : index
    %c0_24 = arith.constant 0 : index
    %22 = vector.load %arg1[%c2_21, %c0_22, %c0_23, %c0_24] : memref<4x9x9x4xbf16, #tpu.memory_space<vmem>>, vector<1x8x8x4xbf16>
    %23 = vector.shape_cast %22 : vector<1x8x8x4xbf16> to vector<8x8x4xbf16>
    %24 = vector.shape_cast %23 : vector<8x8x4xbf16> to vector<64x4xbf16>
    %c3 = arith.constant 3 : index
    %c0_25 = arith.constant 0 : index
    %c0_26 = arith.constant 0 : index
    %25 = vector.load %arg2[%c3, %c0_25, %c0_26] : memref<9x4x8xbf16, #tpu.memory_space<vmem>>, vector<1x4x8xbf16>
    %26 = vector.shape_cast %25 : vector<1x4x8xbf16> to vector<4x8xbf16>
    %cst_27 = arith.constant dense<0.000000e+00> : vector<64x8xf32>
    %27 = tpu.matmul %24, %26, %cst_27 {dimension_numbers = #tpu.dot_dimension_numbers<[1], [0], [0], [1], [0, 0, 1, 1], [], []>} : vector<64x4xbf16>, vector<4x8xbf16>, vector<64x8xf32> -> vector<64x8xf32>
    %28 = arith.addf %21, %27 : vector<64x8xf32>
    %c3_28 = arith.constant 3 : index
    %c0_29 = arith.constant 0 : index
    %c0_30 = arith.constant 0 : index
    %c0_31 = arith.constant 0 : index
    %29 = vector.load %arg1[%c3_28, %c0_29, %c0_30, %c0_31] : memref<4x9x9x4xbf16, #tpu.memory_space<vmem>>, vector<1x8x8x4xbf16>
    %30 = vector.shape_cast %29 : vector<1x8x8x4xbf16> to vector<8x8x4xbf16>
    %31 = vector.shape_cast %30 : vector<8x8x4xbf16> to vector<64x4xbf16>
    %c4 = arith.constant 4 : index
    %c0_32 = arith.constant 0 : index
    %c0_33 = arith.constant 0 : index
    %32 = vector.load %arg2[%c4, %c0_32, %c0_33] : memref<9x4x8xbf16, #tpu.memory_space<vmem>>, vector<1x4x8xbf16>
    %33 = vector.shape_cast %32 : vector<1x4x8xbf16> to vector<4x8xbf16>
    %cst_34 = arith.constant dense<0.000000e+00> : vector<64x8xf32>
    %34 = tpu.matmul %31, %33, %cst_34 {dimension_numbers = #tpu.dot_dimension_numbers<[1], [0], [0], [1], [0, 0, 1, 1], [], []>} : vector<64x4xbf16>, vector<4x8xbf16>, vector<64x8xf32> -> vector<64x8xf32>
    %35 = arith.addf %28, %34 : vector<64x8xf32>
    %c2_35 = arith.constant 2 : index
    %c0_36 = arith.constant 0 : index
    %c1_37 = arith.constant 1 : index
    %c0_38 = arith.constant 0 : index
    %36 = vector.load %arg1[%c2_35, %c0_36, %c1_37, %c0_38] : memref<4x9x9x4xbf16, #tpu.memory_space<vmem>>, vector<1x8x8x4xbf16>
    %37 = vector.shape_cast %36 : vector<1x8x8x4xbf16> to vector<8x8x4xbf16>
    %38 = vector.shape_cast %37 : vector<8x8x4xbf16> to vector<64x4xbf16>
    %c5 = arith.constant 5 : index
    %c0_39 = arith.constant 0 : index
    %c0_40 = arith.constant 0 : index
    %39 = vector.load %arg2[%c5, %c0_39, %c0_40] : memref<9x4x8xbf16, #tpu.memory_space<vmem>>, vector<1x4x8xbf16>
    %40 = vector.shape_cast %39 : vector<1x4x8xbf16> to vector<4x8xbf16>
    %cst_41 = arith.constant dense<0.000000e+00> : vector<64x8xf32>
    %41 = tpu.matmul %38, %40, %cst_41 {dimension_numbers = #tpu.dot_dimension_numbers<[1], [0], [0], [1], [0, 0, 1, 1], [], []>} : vector<64x4xbf16>, vector<4x8xbf16>, vector<64x8xf32> -> vector<64x8xf32>
    %42 = arith.addf %35, %41 : vector<64x8xf32>
    %c0_42 = arith.constant 0 : index
    %c1_43 = arith.constant 1 : index
    %c0_44 = arith.constant 0 : index
    %c0_45 = arith.constant 0 : index
    %43 = vector.load %arg1[%c0_42, %c1_43, %c0_44, %c0_45] : memref<4x9x9x4xbf16, #tpu.memory_space<vmem>>, vector<1x8x8x4xbf16>
    %44 = vector.shape_cast %43 : vector<1x8x8x4xbf16> to vector<8x8x4xbf16>
    %45 = vector.shape_cast %44 : vector<8x8x4xbf16> to vector<64x4xbf16>
    %c6 = arith.constant 6 : index
    %c0_46 = arith.constant 0 : index
    %c0_47 = arith.constant 0 : index
    %46 = vector.load %arg2[%c6, %c0_46, %c0_47] : memref<9x4x8xbf16, #tpu.memory_space<vmem>>, vector<1x4x8xbf16>
    %47 = vector.shape_cast %46 : vector<1x4x8xbf16> to vector<4x8xbf16>
    %cst_48 = arith.constant dense<0.000000e+00> : vector<64x8xf32>
    %48 = tpu.matmul %45, %47, %cst_48 {dimension_numbers = #tpu.dot_dimension_numbers<[1], [0], [0], [1], [0, 0, 1, 1], [], []>} : vector<64x4xbf16>, vector<4x8xbf16>, vector<64x8xf32> -> vector<64x8xf32>
    %49 = arith.addf %42, %48 : vector<64x8xf32>
    %c1_49 = arith.constant 1 : index
    %c1_50 = arith.constant 1 : index
    %c0_51 = arith.constant 0 : index
    %c0_52 = arith.constant 0 : index
    %50 = vector.load %arg1[%c1_49, %c1_50, %c0_51, %c0_52] : memref<4x9x9x4xbf16, #tpu.memory_space<vmem>>, vector<1x8x8x4xbf16>
    %51 = vector.shape_cast %50 : vector<1x8x8x4xbf16> to vector<8x8x4xbf16>
    %52 = vector.shape_cast %51 : vector<8x8x4xbf16> to vector<64x4xbf16>
    %c7 = arith.constant 7 : index
    %c0_53 = arith.constant 0 : index
    %c0_54 = arith.constant 0 : index
    %53 = vector.load %arg2[%c7, %c0_53, %c0_54] : memref<9x4x8xbf16, #tpu.memory_space<vmem>>, vector<1x4x8xbf16>
    %54 = vector.shape_cast %53 : vector<1x4x8xbf16> to vector<4x8xbf16>
    %cst_55 = arith.constant dense<0.000000e+00> : vector<64x8xf32>
    %55 = tpu.matmul %52, %54, %cst_55 {dimension_numbers = #tpu.dot_dimension_numbers<[1], [0], [0], [1], [0, 0, 1, 1], [], []>} : vector<64x4xbf16>, vector<4x8xbf16>, vector<64x8xf32> -> vector<64x8xf32>
    %56 = arith.addf %49, %55 : vector<64x8xf32>
    %c0_56 = arith.constant 0 : index
    %c1_57 = arith.constant 1 : index
    %c1_58 = arith.constant 1 : index
    %c0_59 = arith.constant 0 : index
    %57 = vector.load %arg1[%c0_56, %c1_57, %c1_58, %c0_59] : memref<4x9x9x4xbf16, #tpu.memory_space<vmem>>, vector<1x8x8x4xbf16>
    %58 = vector.shape_cast %57 : vector<1x8x8x4xbf16> to vector<8x8x4xbf16>
    %59 = vector.shape_cast %58 : vector<8x8x4xbf16> to vector<64x4xbf16>
    %c8 = arith.constant 8 : index
    %c0_60 = arith.constant 0 : index
    %c0_61 = arith.constant 0 : index
    %60 = vector.load %arg2[%c8, %c0_60, %c0_61] : memref<9x4x8xbf16, #tpu.memory_space<vmem>>, vector<1x4x8xbf16>
    %61 = vector.shape_cast %60 : vector<1x4x8xbf16> to vector<4x8xbf16>
    %cst_62 = arith.constant dense<0.000000e+00> : vector<64x8xf32>
    %62 = tpu.matmul %59, %61, %cst_62 {dimension_numbers = #tpu.dot_dimension_numbers<[1], [0], [0], [1], [0, 0, 1, 1], [], []>} : vector<64x4xbf16>, vector<4x8xbf16>, vector<64x8xf32> -> vector<64x8xf32>
    %63 = arith.addf %56, %62 : vector<64x8xf32>
    %64 = vector.shape_cast %63 : vector<64x8xf32> to vector<8x8x8xf32>
    %65 = arith.truncf %64 : vector<8x8x8xf32> to vector<8x8x8xbf16>
    %c0_63 = arith.constant 0 : index
    %c0_64 = arith.constant 0 : index
    %c0_65 = arith.constant 0 : index
    %c0_66 = arith.constant 0 : index
    %66 = vector.load %arg4[%c0_63, %c0_64, %c0_65, %c0_66] : memref<1x8x8x8xbf16, #tpu.memory_space<vmem>>, vector<1x8x8x8xbf16>
    %67 = vector.shape_cast %66 : vector<1x8x8x8xbf16> to vector<8x8x8xbf16>
    %68 = vector.shape_cast %65 : vector<8x8x8xbf16> to vector<1x8x8x8xbf16>
    tpu.vector_store %arg4[%c0_63, %c0_64, %c0_65, %c0_66], %68 {strides = array<i32>} : memref<1x8x8x8xbf16, #tpu.memory_space<vmem>>, vector<1x8x8x8xbf16>,
    %cst_67 = arith.constant dense<0.000000e+00> : vector<8xf32>
    %69 = vector.multi_reduction <add>, %63, %cst_67 [0] : vector<64x8xf32> to vector<8xf32>
    %70 = vector.shape_cast %69 : vector<8xf32> to vector<1x8xf32>
    %c0_68 = arith.constant 0 : index
    %c0_69 = arith.constant 0 : index
    %c0_70 = arith.constant 0 : index
    %71 = vector.load %arg5[%c0_68, %c0_69, %c0_70] : memref<1x2x8xf32, #tpu.memory_space<vmem>>, vector<1x1x8xf32>
    %72 = vector.shape_cast %71 : vector<1x1x8xf32> to vector<1x8xf32>
    %73 = vector.shape_cast %70 : vector<1x8xf32> to vector<1x1x8xf32>
    tpu.vector_store %arg5[%c0_68, %c0_69, %c0_70], %73 {strides = array<i32>} : memref<1x2x8xf32, #tpu.memory_space<vmem>>, vector<1x1x8xf32>,
    %74 = arith.mulf %63, %63 : vector<64x8xf32>
    %cst_71 = arith.constant dense<0.000000e+00> : vector<8xf32>
    %75 = vector.multi_reduction <add>, %74, %cst_71 [0] : vector<64x8xf32> to vector<8xf32>
    %76 = vector.shape_cast %75 : vector<8xf32> to vector<1x8xf32>
    %c0_72 = arith.constant 0 : index
    %c1_73 = arith.constant 1 : index
    %c0_74 = arith.constant 0 : index
    %77 = vector.load %arg5[%c0_72, %c1_73, %c0_74] : memref<1x2x8xf32, #tpu.memory_space<vmem>>, vector<1x1x8xf32>
    %78 = vector.shape_cast %77 : vector<1x1x8xf32> to vector<1x8xf32>
    %79 = vector.shape_cast %76 : vector<1x8xf32> to vector<1x1x8xf32>
    tpu.vector_store %arg5[%c0_72, %c1_73, %c0_74], %79 {strides = array<i32>} : memref<1x2x8xf32, #tpu.memory_space<vmem>>, vector<1x1x8xf32>,
    %c3_75 = arith.constant 3 : index
    %c0_76 = arith.constant 0 : index
    %c0_77 = arith.constant 0 : index
    %c0_78 = arith.constant 0 : index
    %80 = vector.load %arg1[%c3_75, %c0_76, %c0_77, %c0_78] : memref<4x9x9x4xbf16, #tpu.memory_space<vmem>>, vector<1x8x8x4xbf16>
    %81 = vector.shape_cast %80 : vector<1x8x8x4xbf16> to vector<8x8x4xbf16>
    %82 = vector.shape_cast %81 : vector<8x8x4xbf16> to vector<64x4xbf16>
    %c0_79 = arith.constant 0 : index
    %c0_80 = arith.constant 0 : index
    %83 = vector.load %arg3[%c0_79, %c0_80] : memref<4x8xbf16, #tpu.memory_space<vmem>>, vector<4x8xbf16>
    %cst_81 = arith.constant dense<0.000000e+00> : vector<64x8xf32>
    %84 = tpu.matmul %82, %83, %cst_81 {dimension_numbers = #tpu.dot_dimension_numbers<[1], [0], [0], [1], [0, 0, 1, 1], [], []>} : vector<64x4xbf16>, vector<4x8xbf16>, vector<64x8xf32> -> vector<64x8xf32>
    %85 = vector.shape_cast %84 : vector<64x8xf32> to vector<8x8x8xf32>
    %c0_82 = arith.constant 0 : index
    %c0_83 = arith.constant 0 : index
    %c0_84 = arith.constant 0 : index
    %c0_85 = arith.constant 0 : index
    %86 = vector.load %arg6[%c0_82, %c0_83, %c0_84, %c0_85] : memref<1x8x8x8xf32, #tpu.memory_space<vmem>>, vector<1x8x8x8xf32>
    %87 = vector.shape_cast %86 : vector<1x8x8x8xf32> to vector<8x8x8xf32>
    %88 = vector.shape_cast %85 : vector<8x8x8xf32> to vector<1x8x8x8xf32>
    tpu.vector_store %arg6[%c0_82, %c0_83, %c0_84, %c0_85], %88 {strides = array<i32>} : memref<1x8x8x8xf32, #tpu.memory_space<vmem>>, vector<1x8x8x8xf32>,
    %cst_86 = arith.constant dense<0.000000e+00> : vector<8xf32>
    %89 = vector.multi_reduction <add>, %84, %cst_86 [0] : vector<64x8xf32> to vector<8xf32>
    %90 = vector.shape_cast %89 : vector<8xf32> to vector<1x8xf32>
    %c0_87 = arith.constant 0 : index
    %c0_88 = arith.constant 0 : index
    %c0_89 = arith.constant 0 : index
    %91 = vector.load %arg7[%c0_87, %c0_88, %c0_89] : memref<1x2x8xf32, #tpu.memory_space<vmem>>, vector<1x1x8xf32>
    %92 = vector.shape_cast %91 : vector<1x1x8xf32> to vector<1x8xf32>
    %93 = vector.shape_cast %90 : vector<1x8xf32> to vector<1x1x8xf32>
    tpu.vector_store %arg7[%c0_87, %c0_88, %c0_89], %93 {strides = array<i32>} : memref<1x2x8xf32, #tpu.memory_space<vmem>>, vector<1x1x8xf32>,
    %94 = arith.mulf %84, %84 : vector<64x8xf32>
    %cst_90 = arith.constant dense<0.000000e+00> : vector<8xf32>
    %95 = vector.multi_reduction <add>, %94, %cst_90 [0] : vector<64x8xf32> to vector<8xf32>
    %96 = vector.shape_cast %95 : vector<8xf32> to vector<1x8xf32>
    %c0_91 = arith.constant 0 : index
    %c1_92 = arith.constant 1 : index
    %c0_93 = arith.constant 0 : index
    %97 = vector.load %arg7[%c0_91, %c1_92, %c0_93] : memref<1x2x8xf32, #tpu.memory_space<vmem>>, vector<1x1x8xf32>
    %98 = vector.shape_cast %97 : vector<1x1x8xf32> to vector<1x8xf32>
    %99 = vector.shape_cast %96 : vector<1x8xf32> to vector<1x1x8xf32>
    tpu.vector_store %arg7[%c0_91, %c1_92, %c0_93], %99 {strides = array<i32>} : memref<1x2x8xf32, #tpu.memory_space<vmem>>, vector<1x1x8xf32>,
    return
  }
  func.func @transform_0(%arg0: i32) -> (i32, i32, i32, i32) {
    %c0_i32 = arith.constant 0 : i32
    %c0_i32_0 = arith.constant 0 : i32
    %c0_i32_1 = arith.constant 0 : i32
    %c0_i32_2 = arith.constant 0 : i32
    return %arg0, %c0_i32, %c0_i32_0, %c0_i32_1 : i32, i32, i32, i32
  }
  func.func @transform_1(%arg0: i32) -> (i32, i32, i32) {
    %c0_i32 = arith.constant 0 : i32
    %c0_i32_0 = arith.constant 0 : i32
    %c0_i32_1 = arith.constant 0 : i32
    %c0_i32_2 = arith.constant 0 : i32
    return %c0_i32, %c0_i32_0, %c0_i32_1 : i32, i32, i32
  }
  func.func @transform_2(%arg0: i32) -> (i32, i32) {
    %c0_i32 = arith.constant 0 : i32
    %c0_i32_0 = arith.constant 0 : i32
    %c0_i32_1 = arith.constant 0 : i32
    return %c0_i32, %c0_i32_0 : i32, i32
  }
  func.func @transform_3(%arg0: i32) -> (i32, i32, i32, i32) {
    %c0_i32 = arith.constant 0 : i32
    %c0_i32_0 = arith.constant 0 : i32
    %c0_i32_1 = arith.constant 0 : i32
    %c0_i32_2 = arith.constant 0 : i32
    return %arg0, %c0_i32, %c0_i32_0, %c0_i32_1 : i32, i32, i32, i32
  }
  func.func @transform_4(%arg0: i32) -> (i32, i32, i32) {
    %c0_i32 = arith.constant 0 : i32
    %c0_i32_0 = arith.constant 0 : i32
    %c0_i32_1 = arith.constant 0 : i32
    return %arg0, %c0_i32, %c0_i32_0 : i32, i32, i32
  }
  func.func @transform_5(%arg0: i32) -> (i32, i32, i32, i32) {
    %c0_i32 = arith.constant 0 : i32
    %c0_i32_0 = arith.constant 0 : i32
    %c0_i32_1 = arith.constant 0 : i32
    %c0_i32_2 = arith.constant 0 : i32
    return %arg0, %c0_i32, %c0_i32_0, %c0_i32_1 : i32, i32, i32, i32
  }
  func.func @transform_6(%arg0: i32) -> (i32, i32, i32) {
    %c0_i32 = arith.constant 0 : i32
    %c0_i32_0 = arith.constant 0 : i32
    %c0_i32_1 = arith.constant 0 : i32
    return %arg0, %c0_i32, %c0_i32_0 : i32, i32, i32
  }
}

module attributes {stable_mosaic.version = 11 : i64} {
  func.func @_conv3x3_s1_fused_kernel(%arg0: i32, %arg1: memref<1x8x8x8xbf16, #tpu.memory_space<vmem>>, %arg2: memref<9x8x8xbf16, #tpu.memory_space<vmem>>, %arg3: memref<1x8xf32, #tpu.memory_space<vmem>>, %arg4: memref<1x8xf32, #tpu.memory_space<vmem>>, %arg5: memref<1x8x8x8xf32, #tpu.memory_space<vmem>>, %arg6: memref<1x2x8xf32, #tpu.memory_space<vmem>>, %arg7: memref<10x10x8xf32, #tpu.memory_space<vmem>>) attributes {dimension_semantics = [#tpu.dimension_semantics<parallel>], iteration_bounds = array<i64: 2>, scalar_prefetch = 0 : i64, scratch_operands = 1 : i64, tpu.core_type = #tpu.core_type<tc>, window_params = [{transform_indices = @transform_0, window_bounds = array<i64: 1, 8, 8, 8>}, {pipeline_mode = #tpu.pipeline_mode<synchronous>, transform_indices = @transform_1, window_bounds = array<i64: 9, 8, 8>}, {pipeline_mode = #tpu.pipeline_mode<synchronous>, transform_indices = @transform_2, window_bounds = array<i64: 1, 8>}, {pipeline_mode = #tpu.pipeline_mode<synchronous>, transform_indices = @transform_3, window_bounds = array<i64: 1, 8>}, {transform_indices = @transform_4, window_bounds = array<i64: 1, 8, 8, 8>}, {transform_indices = @transform_5, window_bounds = array<i64: 1, 2, 8>}]} {
    %c0 = arith.constant 0 : index
    %c0_0 = arith.constant 0 : index
    %c0_1 = arith.constant 0 : index
    %c0_2 = arith.constant 0 : index
    %0 = vector.load %arg1[%c0, %c0_0, %c0_1, %c0_2] : memref<1x8x8x8xbf16, #tpu.memory_space<vmem>>, vector<1x8x8x8xbf16>
    %1 = vector.shape_cast %0 : vector<1x8x8x8xbf16> to vector<8x8x8xbf16>
    %2 = arith.extf %1 : vector<8x8x8xbf16> to vector<8x8x8xf32>
    %c0_3 = arith.constant 0 : index
    %c0_4 = arith.constant 0 : index
    %3 = vector.load %arg3[%c0_3, %c0_4] : memref<1x8xf32, #tpu.memory_space<vmem>>, vector<1x8xf32>
    %4 = vector.shape_cast %3 : vector<1x8xf32> to vector<1x1x8xf32>
    %5 = vector.broadcast %4 : vector<1x1x8xf32> to vector<8x8x8xf32>
    %6 = arith.mulf %2, %5 : vector<8x8x8xf32>
    %c0_5 = arith.constant 0 : index
    %c0_6 = arith.constant 0 : index
    %7 = vector.load %arg4[%c0_5, %c0_6] : memref<1x8xf32, #tpu.memory_space<vmem>>, vector<1x8xf32>
    %8 = vector.shape_cast %7 : vector<1x8xf32> to vector<1x1x8xf32>
    %9 = vector.broadcast %8 : vector<1x1x8xf32> to vector<8x8x8xf32>
    %10 = arith.addf %6, %9 : vector<8x8x8xf32>
    %cst = arith.constant 0.000000e+00 : f32
    %11 = vector.broadcast %cst : f32 to vector<8x8x8xf32>
    %12 = arith.maximumf %10, %11 : vector<8x8x8xf32>
    %cst_7 = arith.constant 0.000000e+00 : f32
    %13 = vector.broadcast %cst_7 : f32 to vector<10x10x8xf32>
    %c0_8 = arith.constant 0 : index
    %c0_9 = arith.constant 0 : index
    %c0_10 = arith.constant 0 : index
    %14 = vector.load %arg7[%c0_8, %c0_9, %c0_10] : memref<10x10x8xf32, #tpu.memory_space<vmem>>, vector<10x10x8xf32>
    tpu.vector_store %arg7[%c0_8, %c0_9, %c0_10], %13 {strides = array<i32>} : memref<10x10x8xf32, #tpu.memory_space<vmem>>, vector<10x10x8xf32>,
    %c1 = arith.constant 1 : index
    %c1_11 = arith.constant 1 : index
    %c0_12 = arith.constant 0 : index
    %15 = vector.load %arg7[%c1, %c1_11, %c0_12] : memref<10x10x8xf32, #tpu.memory_space<vmem>>, vector<8x8x8xf32>
    tpu.vector_store %arg7[%c1, %c1_11, %c0_12], %12 {strides = array<i32>} : memref<10x10x8xf32, #tpu.memory_space<vmem>>, vector<8x8x8xf32>,
    %cst_13 = arith.constant 0.000000e+00 : f32
    %16 = vector.broadcast %cst_13 : f32 to vector<64x8xf32>
    %c0_14 = arith.constant 0 : index
    %c0_15 = arith.constant 0 : index
    %c0_16 = arith.constant 0 : index
    %17 = vector.load %arg7[%c0_14, %c0_15, %c0_16] : memref<10x10x8xf32, #tpu.memory_space<vmem>>, vector<8x8x8xf32>
    %18 = vector.shape_cast %17 : vector<8x8x8xf32> to vector<64x8xf32>
    %19 = arith.truncf %18 : vector<64x8xf32> to vector<64x8xbf16>
    %c0_17 = arith.constant 0 : index
    %c0_18 = arith.constant 0 : index
    %c0_19 = arith.constant 0 : index
    %20 = vector.load %arg2[%c0_17, %c0_18, %c0_19] : memref<9x8x8xbf16, #tpu.memory_space<vmem>>, vector<1x8x8xbf16>
    %21 = vector.shape_cast %20 : vector<1x8x8xbf16> to vector<8x8xbf16>
    %cst_20 = arith.constant dense<0.000000e+00> : vector<64x8xf32>
    %22 = tpu.matmul %19, %21, %cst_20 {dimension_numbers = #tpu.dot_dimension_numbers<[1], [0], [0], [1], [0, 0, 1, 1], [], []>} : vector<64x8xbf16>, vector<8x8xbf16>, vector<64x8xf32> -> vector<64x8xf32>
    %23 = arith.addf %16, %22 : vector<64x8xf32>
    %c0_21 = arith.constant 0 : index
    %c1_22 = arith.constant 1 : index
    %c0_23 = arith.constant 0 : index
    %24 = vector.load %arg7[%c0_21, %c1_22, %c0_23] : memref<10x10x8xf32, #tpu.memory_space<vmem>>, vector<8x8x8xf32>
    %25 = vector.shape_cast %24 : vector<8x8x8xf32> to vector<64x8xf32>
    %26 = arith.truncf %25 : vector<64x8xf32> to vector<64x8xbf16>
    %c1_24 = arith.constant 1 : index
    %c0_25 = arith.constant 0 : index
    %c0_26 = arith.constant 0 : index
    %27 = vector.load %arg2[%c1_24, %c0_25, %c0_26] : memref<9x8x8xbf16, #tpu.memory_space<vmem>>, vector<1x8x8xbf16>
    %28 = vector.shape_cast %27 : vector<1x8x8xbf16> to vector<8x8xbf16>
    %cst_27 = arith.constant dense<0.000000e+00> : vector<64x8xf32>
    %29 = tpu.matmul %26, %28, %cst_27 {dimension_numbers = #tpu.dot_dimension_numbers<[1], [0], [0], [1], [0, 0, 1, 1], [], []>} : vector<64x8xbf16>, vector<8x8xbf16>, vector<64x8xf32> -> vector<64x8xf32>
    %30 = arith.addf %23, %29 : vector<64x8xf32>
    %c0_28 = arith.constant 0 : index
    %c2 = arith.constant 2 : index
    %c0_29 = arith.constant 0 : index
    %31 = vector.load %arg7[%c0_28, %c2, %c0_29] : memref<10x10x8xf32, #tpu.memory_space<vmem>>, vector<8x8x8xf32>
    %32 = vector.shape_cast %31 : vector<8x8x8xf32> to vector<64x8xf32>
    %33 = arith.truncf %32 : vector<64x8xf32> to vector<64x8xbf16>
    %c2_30 = arith.constant 2 : index
    %c0_31 = arith.constant 0 : index
    %c0_32 = arith.constant 0 : index
    %34 = vector.load %arg2[%c2_30, %c0_31, %c0_32] : memref<9x8x8xbf16, #tpu.memory_space<vmem>>, vector<1x8x8xbf16>
    %35 = vector.shape_cast %34 : vector<1x8x8xbf16> to vector<8x8xbf16>
    %cst_33 = arith.constant dense<0.000000e+00> : vector<64x8xf32>
    %36 = tpu.matmul %33, %35, %cst_33 {dimension_numbers = #tpu.dot_dimension_numbers<[1], [0], [0], [1], [0, 0, 1, 1], [], []>} : vector<64x8xbf16>, vector<8x8xbf16>, vector<64x8xf32> -> vector<64x8xf32>
    %37 = arith.addf %30, %36 : vector<64x8xf32>
    %c1_34 = arith.constant 1 : index
    %c0_35 = arith.constant 0 : index
    %c0_36 = arith.constant 0 : index
    %38 = vector.load %arg7[%c1_34, %c0_35, %c0_36] : memref<10x10x8xf32, #tpu.memory_space<vmem>>, vector<8x8x8xf32>
    %39 = vector.shape_cast %38 : vector<8x8x8xf32> to vector<64x8xf32>
    %40 = arith.truncf %39 : vector<64x8xf32> to vector<64x8xbf16>
    %c3 = arith.constant 3 : index
    %c0_37 = arith.constant 0 : index
    %c0_38 = arith.constant 0 : index
    %41 = vector.load %arg2[%c3, %c0_37, %c0_38] : memref<9x8x8xbf16, #tpu.memory_space<vmem>>, vector<1x8x8xbf16>
    %42 = vector.shape_cast %41 : vector<1x8x8xbf16> to vector<8x8xbf16>
    %cst_39 = arith.constant dense<0.000000e+00> : vector<64x8xf32>
    %43 = tpu.matmul %40, %42, %cst_39 {dimension_numbers = #tpu.dot_dimension_numbers<[1], [0], [0], [1], [0, 0, 1, 1], [], []>} : vector<64x8xbf16>, vector<8x8xbf16>, vector<64x8xf32> -> vector<64x8xf32>
    %44 = arith.addf %37, %43 : vector<64x8xf32>
    %c1_40 = arith.constant 1 : index
    %c1_41 = arith.constant 1 : index
    %c0_42 = arith.constant 0 : index
    %45 = vector.load %arg7[%c1_40, %c1_41, %c0_42] : memref<10x10x8xf32, #tpu.memory_space<vmem>>, vector<8x8x8xf32>
    %46 = vector.shape_cast %45 : vector<8x8x8xf32> to vector<64x8xf32>
    %47 = arith.truncf %46 : vector<64x8xf32> to vector<64x8xbf16>
    %c4 = arith.constant 4 : index
    %c0_43 = arith.constant 0 : index
    %c0_44 = arith.constant 0 : index
    %48 = vector.load %arg2[%c4, %c0_43, %c0_44] : memref<9x8x8xbf16, #tpu.memory_space<vmem>>, vector<1x8x8xbf16>
    %49 = vector.shape_cast %48 : vector<1x8x8xbf16> to vector<8x8xbf16>
    %cst_45 = arith.constant dense<0.000000e+00> : vector<64x8xf32>
    %50 = tpu.matmul %47, %49, %cst_45 {dimension_numbers = #tpu.dot_dimension_numbers<[1], [0], [0], [1], [0, 0, 1, 1], [], []>} : vector<64x8xbf16>, vector<8x8xbf16>, vector<64x8xf32> -> vector<64x8xf32>
    %51 = arith.addf %44, %50 : vector<64x8xf32>
    %c1_46 = arith.constant 1 : index
    %c2_47 = arith.constant 2 : index
    %c0_48 = arith.constant 0 : index
    %52 = vector.load %arg7[%c1_46, %c2_47, %c0_48] : memref<10x10x8xf32, #tpu.memory_space<vmem>>, vector<8x8x8xf32>
    %53 = vector.shape_cast %52 : vector<8x8x8xf32> to vector<64x8xf32>
    %54 = arith.truncf %53 : vector<64x8xf32> to vector<64x8xbf16>
    %c5 = arith.constant 5 : index
    %c0_49 = arith.constant 0 : index
    %c0_50 = arith.constant 0 : index
    %55 = vector.load %arg2[%c5, %c0_49, %c0_50] : memref<9x8x8xbf16, #tpu.memory_space<vmem>>, vector<1x8x8xbf16>
    %56 = vector.shape_cast %55 : vector<1x8x8xbf16> to vector<8x8xbf16>
    %cst_51 = arith.constant dense<0.000000e+00> : vector<64x8xf32>
    %57 = tpu.matmul %54, %56, %cst_51 {dimension_numbers = #tpu.dot_dimension_numbers<[1], [0], [0], [1], [0, 0, 1, 1], [], []>} : vector<64x8xbf16>, vector<8x8xbf16>, vector<64x8xf32> -> vector<64x8xf32>
    %58 = arith.addf %51, %57 : vector<64x8xf32>
    %c2_52 = arith.constant 2 : index
    %c0_53 = arith.constant 0 : index
    %c0_54 = arith.constant 0 : index
    %59 = vector.load %arg7[%c2_52, %c0_53, %c0_54] : memref<10x10x8xf32, #tpu.memory_space<vmem>>, vector<8x8x8xf32>
    %60 = vector.shape_cast %59 : vector<8x8x8xf32> to vector<64x8xf32>
    %61 = arith.truncf %60 : vector<64x8xf32> to vector<64x8xbf16>
    %c6 = arith.constant 6 : index
    %c0_55 = arith.constant 0 : index
    %c0_56 = arith.constant 0 : index
    %62 = vector.load %arg2[%c6, %c0_55, %c0_56] : memref<9x8x8xbf16, #tpu.memory_space<vmem>>, vector<1x8x8xbf16>
    %63 = vector.shape_cast %62 : vector<1x8x8xbf16> to vector<8x8xbf16>
    %cst_57 = arith.constant dense<0.000000e+00> : vector<64x8xf32>
    %64 = tpu.matmul %61, %63, %cst_57 {dimension_numbers = #tpu.dot_dimension_numbers<[1], [0], [0], [1], [0, 0, 1, 1], [], []>} : vector<64x8xbf16>, vector<8x8xbf16>, vector<64x8xf32> -> vector<64x8xf32>
    %65 = arith.addf %58, %64 : vector<64x8xf32>
    %c2_58 = arith.constant 2 : index
    %c1_59 = arith.constant 1 : index
    %c0_60 = arith.constant 0 : index
    %66 = vector.load %arg7[%c2_58, %c1_59, %c0_60] : memref<10x10x8xf32, #tpu.memory_space<vmem>>, vector<8x8x8xf32>
    %67 = vector.shape_cast %66 : vector<8x8x8xf32> to vector<64x8xf32>
    %68 = arith.truncf %67 : vector<64x8xf32> to vector<64x8xbf16>
    %c7 = arith.constant 7 : index
    %c0_61 = arith.constant 0 : index
    %c0_62 = arith.constant 0 : index
    %69 = vector.load %arg2[%c7, %c0_61, %c0_62] : memref<9x8x8xbf16, #tpu.memory_space<vmem>>, vector<1x8x8xbf16>
    %70 = vector.shape_cast %69 : vector<1x8x8xbf16> to vector<8x8xbf16>
    %cst_63 = arith.constant dense<0.000000e+00> : vector<64x8xf32>
    %71 = tpu.matmul %68, %70, %cst_63 {dimension_numbers = #tpu.dot_dimension_numbers<[1], [0], [0], [1], [0, 0, 1, 1], [], []>} : vector<64x8xbf16>, vector<8x8xbf16>, vector<64x8xf32> -> vector<64x8xf32>
    %72 = arith.addf %65, %71 : vector<64x8xf32>
    %c2_64 = arith.constant 2 : index
    %c2_65 = arith.constant 2 : index
    %c0_66 = arith.constant 0 : index
    %73 = vector.load %arg7[%c2_64, %c2_65, %c0_66] : memref<10x10x8xf32, #tpu.memory_space<vmem>>, vector<8x8x8xf32>
    %74 = vector.shape_cast %73 : vector<8x8x8xf32> to vector<64x8xf32>
    %75 = arith.truncf %74 : vector<64x8xf32> to vector<64x8xbf16>
    %c8 = arith.constant 8 : index
    %c0_67 = arith.constant 0 : index
    %c0_68 = arith.constant 0 : index
    %76 = vector.load %arg2[%c8, %c0_67, %c0_68] : memref<9x8x8xbf16, #tpu.memory_space<vmem>>, vector<1x8x8xbf16>
    %77 = vector.shape_cast %76 : vector<1x8x8xbf16> to vector<8x8xbf16>
    %cst_69 = arith.constant dense<0.000000e+00> : vector<64x8xf32>
    %78 = tpu.matmul %75, %77, %cst_69 {dimension_numbers = #tpu.dot_dimension_numbers<[1], [0], [0], [1], [0, 0, 1, 1], [], []>} : vector<64x8xbf16>, vector<8x8xbf16>, vector<64x8xf32> -> vector<64x8xf32>
    %79 = arith.addf %72, %78 : vector<64x8xf32>
    %80 = vector.shape_cast %79 : vector<64x8xf32> to vector<8x8x8xf32>
    %c0_70 = arith.constant 0 : index
    %c0_71 = arith.constant 0 : index
    %c0_72 = arith.constant 0 : index
    %c0_73 = arith.constant 0 : index
    %81 = vector.load %arg5[%c0_70, %c0_71, %c0_72, %c0_73] : memref<1x8x8x8xf32, #tpu.memory_space<vmem>>, vector<1x8x8x8xf32>
    %82 = vector.shape_cast %81 : vector<1x8x8x8xf32> to vector<8x8x8xf32>
    %83 = vector.shape_cast %80 : vector<8x8x8xf32> to vector<1x8x8x8xf32>
    tpu.vector_store %arg5[%c0_70, %c0_71, %c0_72, %c0_73], %83 {strides = array<i32>} : memref<1x8x8x8xf32, #tpu.memory_space<vmem>>, vector<1x8x8x8xf32>,
    %cst_74 = arith.constant dense<0.000000e+00> : vector<8xf32>
    %84 = vector.multi_reduction <add>, %79, %cst_74 [0] : vector<64x8xf32> to vector<8xf32>
    %85 = vector.shape_cast %84 : vector<8xf32> to vector<1x8xf32>
    %c0_75 = arith.constant 0 : index
    %c0_76 = arith.constant 0 : index
    %c0_77 = arith.constant 0 : index
    %86 = vector.load %arg6[%c0_75, %c0_76, %c0_77] : memref<1x2x8xf32, #tpu.memory_space<vmem>>, vector<1x1x8xf32>
    %87 = vector.shape_cast %86 : vector<1x1x8xf32> to vector<1x8xf32>
    %88 = vector.shape_cast %85 : vector<1x8xf32> to vector<1x1x8xf32>
    tpu.vector_store %arg6[%c0_75, %c0_76, %c0_77], %88 {strides = array<i32>} : memref<1x2x8xf32, #tpu.memory_space<vmem>>, vector<1x1x8xf32>,
    %89 = arith.mulf %79, %79 : vector<64x8xf32>
    %cst_78 = arith.constant dense<0.000000e+00> : vector<8xf32>
    %90 = vector.multi_reduction <add>, %89, %cst_78 [0] : vector<64x8xf32> to vector<8xf32>
    %91 = vector.shape_cast %90 : vector<8xf32> to vector<1x8xf32>
    %c0_79 = arith.constant 0 : index
    %c1_80 = arith.constant 1 : index
    %c0_81 = arith.constant 0 : index
    %92 = vector.load %arg6[%c0_79, %c1_80, %c0_81] : memref<1x2x8xf32, #tpu.memory_space<vmem>>, vector<1x1x8xf32>
    %93 = vector.shape_cast %92 : vector<1x1x8xf32> to vector<1x8xf32>
    %94 = vector.shape_cast %91 : vector<1x8xf32> to vector<1x1x8xf32>
    tpu.vector_store %arg6[%c0_79, %c1_80, %c0_81], %94 {strides = array<i32>} : memref<1x2x8xf32, #tpu.memory_space<vmem>>, vector<1x1x8xf32>,
    return
  }
  func.func @transform_0(%arg0: i32) -> (i32, i32, i32, i32) {
    %c0_i32 = arith.constant 0 : i32
    %c0_i32_0 = arith.constant 0 : i32
    %c0_i32_1 = arith.constant 0 : i32
    %c0_i32_2 = arith.constant 0 : i32
    return %arg0, %c0_i32, %c0_i32_0, %c0_i32_1 : i32, i32, i32, i32
  }
  func.func @transform_1(%arg0: i32) -> (i32, i32, i32) {
    %c0_i32 = arith.constant 0 : i32
    %c0_i32_0 = arith.constant 0 : i32
    %c0_i32_1 = arith.constant 0 : i32
    %c0_i32_2 = arith.constant 0 : i32
    return %c0_i32, %c0_i32_0, %c0_i32_1 : i32, i32, i32
  }
  func.func @transform_2(%arg0: i32) -> (i32, i32) {
    %c0_i32 = arith.constant 0 : i32
    %c0_i32_0 = arith.constant 0 : i32
    %c0_i32_1 = arith.constant 0 : i32
    return %c0_i32, %c0_i32_0 : i32, i32
  }
  func.func @transform_3(%arg0: i32) -> (i32, i32) {
    %c0_i32 = arith.constant 0 : i32
    %c0_i32_0 = arith.constant 0 : i32
    %c0_i32_1 = arith.constant 0 : i32
    return %c0_i32, %c0_i32_0 : i32, i32
  }
  func.func @transform_4(%arg0: i32) -> (i32, i32, i32, i32) {
    %c0_i32 = arith.constant 0 : i32
    %c0_i32_0 = arith.constant 0 : i32
    %c0_i32_1 = arith.constant 0 : i32
    %c0_i32_2 = arith.constant 0 : i32
    return %arg0, %c0_i32, %c0_i32_0, %c0_i32_1 : i32, i32, i32, i32
  }
  func.func @transform_5(%arg0: i32) -> (i32, i32, i32) {
    %c0_i32 = arith.constant 0 : i32
    %c0_i32_0 = arith.constant 0 : i32
    %c0_i32_1 = arith.constant 0 : i32
    return %arg0, %c0_i32, %c0_i32_0 : i32, i32, i32
  }
}

module attributes {stable_mosaic.version = 11 : i64} {
  func.func @_merge_bn_add_relu_kernel(%arg0: i32, %arg1: memref<1x8x8x8xf32, #tpu.memory_space<vmem>>, %arg2: memref<1x8x8x8xf32, #tpu.memory_space<vmem>>, %arg3: memref<1x8xf32, #tpu.memory_space<vmem>>, %arg4: memref<1x8xf32, #tpu.memory_space<vmem>>, %arg5: memref<1x8xf32, #tpu.memory_space<vmem>>, %arg6: memref<1x8x8x8xf32, #tpu.memory_space<vmem>>) attributes {dimension_semantics = [#tpu.dimension_semantics<parallel>], iteration_bounds = array<i64: 2>, scalar_prefetch = 0 : i64, scratch_operands = 0 : i64, tpu.core_type = #tpu.core_type<tc>, window_params = [{transform_indices = @transform_0, window_bounds = array<i64: 1, 8, 8, 8>}, {transform_indices = @transform_1, window_bounds = array<i64: 1, 8, 8, 8>}, {pipeline_mode = #tpu.pipeline_mode<synchronous>, transform_indices = @transform_2, window_bounds = array<i64: 1, 8>}, {pipeline_mode = #tpu.pipeline_mode<synchronous>, transform_indices = @transform_3, window_bounds = array<i64: 1, 8>}, {pipeline_mode = #tpu.pipeline_mode<synchronous>, transform_indices = @transform_4, window_bounds = array<i64: 1, 8>}, {transform_indices = @transform_5, window_bounds = array<i64: 1, 8, 8, 8>}]} {
    %c0 = arith.constant 0 : index
    %c0_0 = arith.constant 0 : index
    %c0_1 = arith.constant 0 : index
    %c0_2 = arith.constant 0 : index
    %0 = vector.load %arg1[%c0, %c0_0, %c0_1, %c0_2] : memref<1x8x8x8xf32, #tpu.memory_space<vmem>>, vector<1x8x8x8xf32>
    %c0_3 = arith.constant 0 : index
    %c0_4 = arith.constant 0 : index
    %1 = vector.load %arg3[%c0_3, %c0_4] : memref<1x8xf32, #tpu.memory_space<vmem>>, vector<1x8xf32>
    %2 = vector.shape_cast %1 : vector<1x8xf32> to vector<1x1x1x8xf32>
    %3 = vector.broadcast %2 : vector<1x1x1x8xf32> to vector<1x8x8x8xf32>
    %4 = arith.mulf %0, %3 : vector<1x8x8x8xf32>
    %c0_5 = arith.constant 0 : index
    %c0_6 = arith.constant 0 : index
    %c0_7 = arith.constant 0 : index
    %c0_8 = arith.constant 0 : index
    %5 = vector.load %arg2[%c0_5, %c0_6, %c0_7, %c0_8] : memref<1x8x8x8xf32, #tpu.memory_space<vmem>>, vector<1x8x8x8xf32>
    %c0_9 = arith.constant 0 : index
    %c0_10 = arith.constant 0 : index
    %6 = vector.load %arg4[%c0_9, %c0_10] : memref<1x8xf32, #tpu.memory_space<vmem>>, vector<1x8xf32>
    %7 = vector.shape_cast %6 : vector<1x8xf32> to vector<1x1x1x8xf32>
    %8 = vector.broadcast %7 : vector<1x1x1x8xf32> to vector<1x8x8x8xf32>
    %9 = arith.mulf %5, %8 : vector<1x8x8x8xf32>
    %10 = arith.addf %4, %9 : vector<1x8x8x8xf32>
    %c0_11 = arith.constant 0 : index
    %c0_12 = arith.constant 0 : index
    %11 = vector.load %arg5[%c0_11, %c0_12] : memref<1x8xf32, #tpu.memory_space<vmem>>, vector<1x8xf32>
    %12 = vector.shape_cast %11 : vector<1x8xf32> to vector<1x1x1x8xf32>
    %13 = vector.broadcast %12 : vector<1x1x1x8xf32> to vector<1x8x8x8xf32>
    %14 = arith.addf %10, %13 : vector<1x8x8x8xf32>
    %cst = arith.constant 0.000000e+00 : f32
    %15 = vector.broadcast %cst : f32 to vector<1x8x8x8xf32>
    %16 = arith.maximumf %14, %15 : vector<1x8x8x8xf32>
    %c0_13 = arith.constant 0 : index
    %c0_14 = arith.constant 0 : index
    %c0_15 = arith.constant 0 : index
    %c0_16 = arith.constant 0 : index
    %17 = vector.load %arg6[%c0_13, %c0_14, %c0_15, %c0_16] : memref<1x8x8x8xf32, #tpu.memory_space<vmem>>, vector<1x8x8x8xf32>
    tpu.vector_store %arg6[%c0_13, %c0_14, %c0_15, %c0_16], %16 {strides = array<i32>} : memref<1x8x8x8xf32, #tpu.memory_space<vmem>>, vector<1x8x8x8xf32>,
    return
  }
  func.func @transform_0(%arg0: i32) -> (i32, i32, i32, i32) {
    %c0_i32 = arith.constant 0 : i32
    %c0_i32_0 = arith.constant 0 : i32
    %c0_i32_1 = arith.constant 0 : i32
    %c0_i32_2 = arith.constant 0 : i32
    return %arg0, %c0_i32, %c0_i32_0, %c0_i32_1 : i32, i32, i32, i32
  }
  func.func @transform_1(%arg0: i32) -> (i32, i32, i32, i32) {
    %c0_i32 = arith.constant 0 : i32
    %c0_i32_0 = arith.constant 0 : i32
    %c0_i32_1 = arith.constant 0 : i32
    %c0_i32_2 = arith.constant 0 : i32
    return %arg0, %c0_i32, %c0_i32_0, %c0_i32_1 : i32, i32, i32, i32
  }
  func.func @transform_2(%arg0: i32) -> (i32, i32) {
    %c0_i32 = arith.constant 0 : i32
    %c0_i32_0 = arith.constant 0 : i32
    %c0_i32_1 = arith.constant 0 : i32
    return %c0_i32, %c0_i32_0 : i32, i32
  }
  func.func @transform_3(%arg0: i32) -> (i32, i32) {
    %c0_i32 = arith.constant 0 : i32
    %c0_i32_0 = arith.constant 0 : i32
    %c0_i32_1 = arith.constant 0 : i32
    return %c0_i32, %c0_i32_0 : i32, i32
  }
  func.func @transform_4(%arg0: i32) -> (i32, i32) {
    %c0_i32 = arith.constant 0 : i32
    %c0_i32_0 = arith.constant 0 : i32
    %c0_i32_1 = arith.constant 0 : i32
    return %c0_i32, %c0_i32_0 : i32, i32
  }
  func.func @transform_5(%arg0: i32) -> (i32, i32, i32, i32) {
    %c0_i32 = arith.constant 0 : i32
    %c0_i32_0 = arith.constant 0 : i32
    %c0_i32_1 = arith.constant 0 : i32
    %c0_i32_2 = arith.constant 0 : i32
    return %arg0, %c0_i32, %c0_i32_0, %c0_i32_1 : i32, i32, i32, i32
  }
}

</mosaic_0001>

<llo_original>
// kernel: res_block_forward.5
$region0: #{res_block_forward.5}
  #allocation0 [shape = 'u32[]', space=smem, size = 0x4, offset = 0x4, fixed_abs, tag = 'smem constant byte address 0x4 - core index']
  #allocation1 [shape = 'u32[144,128]{1,0:T(1,128)}', space=vmem, size = 0x12000, scoped, tag = 'internal scratch']
  %s0 = inlined_call_operand.vmem [shape: f32[2,8,8,8], index: 0, kind: input, shape index: {}]
  %s1 = inlined_call_operand.vmem [shape: f32[2,8,8,8], index: 1, kind: input, shape index: {}]
  %s2 = inlined_call_operand.vmem [shape: f32[1,8], index: 2, kind: input, shape index: {}]
  %s3 = inlined_call_operand.vmem [shape: f32[1,8], index: 3, kind: input, shape index: {}]
  %s4 = inlined_call_operand.vmem [shape: f32[1,8], index: 4, kind: input, shape index: {}]
  %s5 = inlined_call_operand.vmem [shape: f32[2,8,8,8], index: 5, kind: output, shape index: {}]
  %s6 = sld [smem:[#allocation0]]
  $region53: #{res_block_forward.5} parent=0
    _
  %s8 = ssub.s32 1, %s6
  %s9 = scalar_select 0, %s8, %s6
  loop: start=0, step=1, limit=4
  $region2: #{res_block_forward.5} parent=0 // loop_pre_header
    _
  $region3: #{res_block_forward.5} parent=0 // loop_header
    %s11 = sphi 0, %s15
    %p12 = scmp.ge.s32.totalorder %s11, 4
    %s21 = sphi 0, %s23
    %s24 = sphi 0, %s21
    %s25 = sphi 0, %s24
    %s41 = sphi 0, %s25
    %s47 = sphi 0, %s49
    %s50 = sphi 0, %s47
    %s51 = sphi 0, %s50
    %s67 = sphi 0, %s51
    %s71 = sphi 0, %s71
    %s73 = sphi 0, %s71
    %s74 = sphi 0, %s73
    %s88 = sphi 0, %s74
    %s92 = sphi 0, %s92
    %s94 = sphi 0, %s92
    %s95 = sphi 0, %s94
    %s109 = sphi 0, %s95
    %s113 = sphi 0, %s113
    %s115 = sphi 0, %s113
    %s116 = sphi 0, %s115
    %s130 = sphi 0, %s116
    %s136 = sphi 0, %s138
    %s139 = sphi 0, %s136
    %s140 = sphi 0, %s139
    %s156 = sphi 0, %s140
  $region4: #{res_block_forward.5} parent=0 // loop_header_branch
    %14 = sbr.rel (%p12) target = $region8
  $region5: #{res_block_forward.5} parent=0 // loop_body
    %s16 = ssub.s32 %s11, 1
    %s17 = ssub.s32 %s11, 2
    %s18 = sadd.s32 %s11, 1
    %s19 = ssub.s32 %s11, %s18
    %p20 = scmp.eq.s32.totalorder %s19, 0
    %s22 = sadd.s32 %s21, 1
    %s23 = scalar_select %p20, %s21, %s22
    %p26 = pneg %p20
    %p27 = scmp.eq.s32.totalorder %s11, 1
    %p28 = por %p26, %p27
    %p29 = scmp.ne.s32.totalorder %s21, %s24
    %p30 = scmp.eq.s32.totalorder %s11, 0
    %p31 = por %p29, %p30
    %p32 = scmp.ne.s32.totalorder %s21, %s24
    %p33 = scmp.eq.s32.totalorder %s16, 1
    %p34 = por %p32, %p33
    %p35 = scmp.ne.s32.totalorder %s24, %s25
    %p36 = scmp.eq.s32.totalorder %s16, 0
    %p37 = por %p35, %p36
    %p38 = scmp.ne.s32.totalorder %s24, %s25
    %p39 = scmp.eq.s32.totalorder %s17, 1
    %p40 = por %p38, %p39
    %p42 = scmp.ne.s32.totalorder %s25, %s41
    %p43 = scmp.eq.s32.totalorder %s17, 0
    %p44 = por %p42, %p43
    %s45 = ssub.s32 %s11, %s18
    %p46 = scmp.eq.s32.totalorder %s45, 0
    %s48 = sadd.s32 %s47, 1
    %s49 = scalar_select %p46, %s47, %s48
    %p52 = pneg %p46
    %p53 = scmp.eq.s32.totalorder %s11, 1
    %p54 = por %p52, %p53
    %p55 = scmp.ne.s32.totalorder %s47, %s50
    %p56 = scmp.eq.s32.totalorder %s11, 0
    %p57 = por %p55, %p56
    %p58 = scmp.ne.s32.totalorder %s47, %s50
    %p59 = scmp.eq.s32.totalorder %s16, 1
    %p60 = por %p58, %p59
    %p61 = scmp.ne.s32.totalorder %s50, %s51
    %p62 = scmp.eq.s32.totalorder %s16, 0
    %p63 = por %p61, %p62
    %p64 = scmp.ne.s32.totalorder %s50, %s51
    %p65 = scmp.eq.s32.totalorder %s17, 1
    %p66 = por %p64, %p65
    %p68 = scmp.ne.s32.totalorder %s51, %s67
    %p69 = scmp.eq.s32.totalorder %s17, 0
    %p70 = por %p68, %p69
    %s72 = sadd.s32 %s71, 1
    %p75 = scmp.eq.s32.totalorder %s11, 1
    %p76 = scmp.ne.s32.totalorder %s71, %s73
    %p77 = scmp.eq.s32.totalorder %s11, 0
    %p78 = por %p76, %p77
    %p79 = scmp.ne.s32.totalorder %s71, %s73
    %p80 = scmp.eq.s32.totalorder %s16, 1
    %p81 = por %p79, %p80
    %p82 = scmp.ne.s32.totalorder %s73, %s74
    %p83 = scmp.eq.s32.totalorder %s16, 0
    %p84 = por %p82, %p83
    %p85 = scmp.ne.s32.totalorder %s73, %s74
    %p86 = scmp.eq.s32.totalorder %s17, 1
    %p87 = por %p85, %p86
    %p89 = scmp.ne.s32.totalorder %s74, %s88
    %p90 = scmp.eq.s32.totalorder %s17, 0
    %p91 = por %p89, %p90
    %s93 = sadd.s32 %s92, 1
    %p96 = scmp.eq.s32.totalorder %s11, 1
    %p97 = scmp.ne.s32.totalorder %s92, %s94
    %p98 = scmp.eq.s32.totalorder %s11, 0
    %p99 = por %p97, %p98
    %p100 = scmp.ne.s32.totalorder %s92, %s94
    %p101 = scmp.eq.s32.totalorder %s16, 1
    %p102 = por %p100, %p101
    %p103 = scmp.ne.s32.totalorder %s94, %s95
    %p104 = scmp.eq.s32.totalorder %s16, 0
    %p105 = por %p103, %p104
    %p106 = scmp.ne.s32.totalorder %s94, %s95
    %p107 = scmp.eq.s32.totalorder %s17, 1
    %p108 = por %p106, %p107
    %p110 = scmp.ne.s32.totalorder %s95, %s109
    %p111 = scmp.eq.s32.totalorder %s17, 0
    %p112 = por %p110, %p111
    %s114 = sadd.s32 %s113, 1
    %p117 = scmp.eq.s32.totalorder %s11, 1
    %p118 = scmp.ne.s32.totalorder %s113, %s115
    %p119 = scmp.eq.s32.totalorder %s11, 0
    %p120 = por %p118, %p119
    %p121 = scmp.ne.s32.totalorder %s113, %s115
    %p122 = scmp.eq.s32.totalorder %s16, 1
    %p123 = por %p121, %p122
    %p124 = scmp.ne.s32.totalorder %s115, %s116
    %p125 = scmp.eq.s32.totalorder %s16, 0
    %p126 = por %p124, %p125
    %p127 = scmp.ne.s32.totalorder %s115, %s116
    %p128 = scmp.eq.s32.totalorder %s17, 1
    %p129 = por %p127, %p128
    %p131 = scmp.ne.s32.totalorder %s116, %s130
    %p132 = scmp.eq.s32.totalorder %s17, 0
    %p133 = por %p131, %p132
    %s134 = ssub.s32 %s11, %s18
    %p135 = scmp.eq.s32.totalorder %s134, 0
    %s137 = sadd.s32 %s136, 1
    %s138 = scalar_select %p135, %s136, %s137
    %p141 = pneg %p135
    %p142 = scmp.eq.s32.totalorder %s11, 1
    %p143 = por %p141, %p142
    %p144 = scmp.ne.s32.totalorder %s136, %s139
    %p145 = scmp.eq.s32.totalorder %s11, 0
    %p146 = por %p144, %p145
    %p147 = scmp.ne.s32.totalorder %s136, %s139
    %p148 = scmp.eq.s32.totalorder %s16, 1
    %p149 = por %p147, %p148
    %p150 = scmp.ne.s32.totalorder %s139, %s140
    %p151 = scmp.eq.s32.totalorder %s16, 0
    %p152 = por %p150, %p151
    %p153 = scmp.ne.s32.totalorder %s139, %s140
    %p154 = scmp.eq.s32.totalorder %s17, 1
    %p155 = por %p153, %p154
    %p157 = scmp.ne.s32.totalorder %s140, %s156
    %p158 = scmp.eq.s32.totalorder %s17, 0
    %p159 = por %p157, %p158
    %p160 = scmp.le.s32.totalorder 1, %s11
    %p161 = scmp.lt.s32.totalorder %s11, 3
    %p162 = pnand %p160, %p161
    %p163 = pneg %p162
    // Predicated region
    $region9: #{res_block_forward.5} parent=5 // pred_check
      _
    $region10: #{res_block_forward.5} parent=5 // pred_check_branch
      %165 = sbr.rel (%p162) target = $region12
    $region11: #{res_block_forward.5} parent=5 // pred_region
      %s166 = ssub.s32 %s11, 1
      // Predicated region
      $region13: #{res_block_forward.5} parent=11 // pred_check
        %p167 = pneg %p84
      $region14: #{res_block_forward.5} parent=11 // pred_check_branch
        %169 = sbr.rel (%p167) target = $region16
      $region15: #{res_block_forward.5} parent=11 // pred_region
        _
      $region16: #{res_block_forward.5} parent=11 // pred_fallthru
        _
      // Predicated region
      $region17: #{res_block_forward.5} parent=11 // pred_check
        %p170 = pneg %p105
      $region18: #{res_block_forward.5} parent=11 // pred_check_branch
        %172 = sbr.rel (%p170) target = $region20
      $region19: #{res_block_forward.5} parent=11 // pred_region
        _
      $region20: #{res_block_forward.5} parent=11 // pred_fallthru
        _
      // Predicated region
      $region21: #{res_block_forward.5} parent=11 // pred_check
        %p173 = pneg %p126
      $region22: #{res_block_forward.5} parent=11 // pred_check_branch
        %175 = sbr.rel (%p173) target = $region24
      $region23: #{res_block_forward.5} parent=11 // pred_region
        _
      $region24: #{res_block_forward.5} parent=11 // pred_fallthru
        _
    $region12: #{res_block_forward.5} parent=5 // pred_fallthru
      _
    %p176 = scmp.lt.s32.totalorder %s11, 2
    // Predicated region
    $region25: #{res_block_forward.5} parent=5 // pred_check
      %p177 = pneg %p176
    $region26: #{res_block_forward.5} parent=5 // pred_check_branch
      %179 = sbr.rel (%p177) target = $region28
    $region27: #{res_block_forward.5} parent=5 // pred_region
      // Predicated region
      $region29: #{res_block_forward.5} parent=27 // pred_check
        %p180 = pneg %p31
      $region30: #{res_block_forward.5} parent=27 // pred_check_branch
        %182 = sbr.rel (%p180) target = $region32
      $region31: #{res_block_forward.5} parent=27 // pred_region
        %p183 = scmp.lt.s32.totalorder %s11, 1
        %s184 = scalar_select %p183, %s11, 1
        %s185 = smul.addr %s184, 8
        %s186 = smul.addr %s185, 8
        %s187 = scalar_lea.vmem %s0, %s186
      $region32: #{res_block_forward.5} parent=27 // pred_fallthru
        _
      // Predicated region
      $region33: #{res_block_forward.5} parent=27 // pred_check
        %p188 = pneg %p57
      $region34: #{res_block_forward.5} parent=27 // pred_check_branch
        %190 = sbr.rel (%p188) target = $region36
      $region35: #{res_block_forward.5} parent=27 // pred_region
        %p191 = scmp.lt.s32.totalorder %s11, 1
        %s192 = scalar_select %p191, %s11, 1
        %s193 = smul.addr %s192, 8
        %s194 = smul.addr %s193, 8
        %s195 = scalar_lea.vmem %s1, %s194
      $region36: #{res_block_forward.5} parent=27 // pred_fallthru
        _
    $region28: #{res_block_forward.5} parent=5 // pred_fallthru
      _
    %p196 = scmp.le.s32.totalorder 1, %s11
    %p197 = scmp.lt.s32.totalorder %s11, 3
    %p198 = pnand %p196, %p197
    %p199 = pneg %p198
    // Predicated region
    $region37: #{res_block_forward.5} parent=5 // pred_check
      _
    $region38: #{res_block_forward.5} parent=5 // pred_check_branch
      %201 = sbr.rel (%p198) target = $region40
    $region39: #{res_block_forward.5} parent=5 // pred_region
      %s202 = ssub.s32 %s11, 1
      %p203 = scmp.lt.s32.totalorder %s16, 1
      %s204 = scalar_select %p203, %s16, 1
      %s205 = smul.addr %s204, 8
      %s206 = smul.addr %s205, 8
      %s207 = scalar_lea.vmem %s0, %s206
      %p208 = pneg %p37
      %p209 = pneg %p34
      %p210 = scmp.lt.s32.totalorder %s16, 1
      %s211 = scalar_select %p210, %s16, 1
      %s212 = smul.addr %s211, 8
      %s213 = smul.addr %s212, 8
      %s214 = scalar_lea.vmem %s1, %s213
      %p215 = pneg %p63
      %p216 = pneg %p60
      %p217 = pneg %p84
      %p218 = pneg %p81
      %p219 = pneg %p105
      %p220 = pneg %p102
      %p221 = pneg %p126
      %p222 = pneg %p123
      %p223 = pneg %p152
      %p224 = pneg %p149
      %p225 = scmp.lt.s32.totalorder %s16, 1
      %s226 = scalar_select %p225, %s16, 1
      %s227 = smul.addr %s226, 8
      %s228 = smul.addr %s227, 8
      %s229 = scalar_lea.vmem %s5, %s228
      %p230 = scmp.lt.s32.totalorder %s16, 1
      %s231 = scalar_select %p230, %s16, 1
      %s232 = smul.addr %s231, 8
      %s233 = smul.addr %s232, 8
      %s234 = scalar_lea.vmem %s0, %s233
      %p235 = scmp.lt.s32.totalorder %s16, 1
      %s236 = scalar_select %p235, %s16, 1
      %s237 = smul.addr %s236, 8
      %s238 = smul.addr %s237, 8
      %s239 = scalar_lea.vmem %s1, %s238
      %p240 = scmp.lt.s32.totalorder %s16, 1
      %s241 = scalar_select %p240, %s16, 1
      %s242 = smul.addr %s241, 8
      %s243 = smul.addr %s242, 8
      %s244 = scalar_lea.vmem %s5, %s243
      %v245 = vld [vmem:[%s234] sm:$0xff]
      %v246 = vld [vmem:[%s234 + $0x8] sm:$0xff]
      %v247 = vld [vmem:[%s234 + $0x10] sm:$0xff]
      %v248 = vld [vmem:[%s234 + $0x18] sm:$0xff]
      %v249 = vld [vmem:[%s234 + $0x20] sm:$0xff]
      %v250 = vld [vmem:[%s234 + $0x28] sm:$0xff]
      %v251 = vld [vmem:[%s234 + $0x30] sm:$0xff]
      %v252 = vld [vmem:[%s234 + $0x38] sm:$0xff]
      %v253 = vld [vmem:[%s2] sm:$0x1]
      %v255 = vlaneseq
      %v256 = vshrl.u32 %v255, 7
      %v257 = vsub.s32 0, %v256
      %v258 = vrot.slane %v253, %v257
      %v260 = vmul.f32 %v245, %v258
      %v261 = vmul.f32 %v246, %v258
      %v262 = vmul.f32 %v247, %v258
      %v263 = vmul.f32 %v248, %v258
      %v264 = vmul.f32 %v249, %v258
      %v265 = vmul.f32 %v250, %v258
      %v266 = vmul.f32 %v251, %v258
      %v267 = vmul.f32 %v252, %v258
      %v268 = vld [vmem:[%s239] sm:$0xff]
      %v269 = vld [vmem:[%s239 + $0x8] sm:$0xff]
      %v270 = vld [vmem:[%s239 + $0x10] sm:$0xff]
      %v271 = vld [vmem:[%s239 + $0x18] sm:$0xff]
      %v272 = vld [vmem:[%s239 + $0x20] sm:$0xff]
      %v273 = vld [vmem:[%s239 + $0x28] sm:$0xff]
      %v274 = vld [vmem:[%s239 + $0x30] sm:$0xff]
      %v275 = vld [vmem:[%s239 + $0x38] sm:$0xff]
      %v276 = vld [vmem:[%s3] sm:$0x1]
      %v278 = vlaneseq
      %v279 = vshrl.u32 %v278, 7
      %v280 = vsub.s32 0, %v279
      %v281 = vrot.slane %v276, %v280
      %v283 = vmul.f32 %v268, %v281
      %v284 = vmul.f32 %v269, %v281
      %v285 = vmul.f32 %v270, %v281
      %v286 = vmul.f32 %v271, %v281
      %v287 = vmul.f32 %v272, %v281
      %v288 = vmul.f32 %v273, %v281
      %v289 = vmul.f32 %v274, %v281
      %v290 = vmul.f32 %v275, %v281
      %v291 = vadd.f32 %v260, %v283
      %v292 = vadd.f32 %v261, %v284
      %v293 = vadd.f32 %v262, %v285
      %v294 = vadd.f32 %v263, %v286
      %v295 = vadd.f32 %v264, %v287
      %v296 = vadd.f32 %v265, %v288
      %v297 = vadd.f32 %v266, %v289
      %v298 = vadd.f32 %v267, %v290
      %v299 = vld [vmem:[%s4] sm:$0x1]
      %v301 = vlaneseq
      %v302 = vshrl.u32 %v301, 7
      %v303 = vsub.s32 0, %v302
      %v304 = vrot.slane %v299, %v303
      %v306 = vadd.f32 %v291, %v304
      %v307 = vadd.f32 %v292, %v304
      %v308 = vadd.f32 %v293, %v304
      %v309 = vadd.f32 %v294, %v304
      %v310 = vadd.f32 %v295, %v304
      %v311 = vadd.f32 %v296, %v304
      %v312 = vadd.f32 %v297, %v304
      %v313 = vadd.f32 %v298, %v304
      %v314 = vmax.f32 %v306, 0.0
      %v315 = vmax.f32 %v307, 0.0
      %v316 = vmax.f32 %v308, 0.0
      %v317 = vmax.f32 %v309, 0.0
      %v318 = vmax.f32 %v310, 0.0
      %v319 = vmax.f32 %v311, 0.0
      %v320 = vmax.f32 %v312, 0.0
      %v321 = vmax.f32 %v313, 0.0
      %vm322 = vcmask 64512
      %323 = vst.msk [vmem:[%s244] sm:$0xff] %vm322, %v314
      %324 = vst.msk [vmem:[%s244 + $0x8] sm:$0xff] %vm322, %v315
      %325 = vst.msk [vmem:[%s244 + $0x10] sm:$0xff] %vm322, %v316
      %326 = vst.msk [vmem:[%s244 + $0x18] sm:$0xff] %vm322, %v317
      %327 = vst.msk [vmem:[%s244 + $0x20] sm:$0xff] %vm322, %v318
      %328 = vst.msk [vmem:[%s244 + $0x28] sm:$0xff] %vm322, %v319
      %329 = vst.msk [vmem:[%s244 + $0x30] sm:$0xff] %vm322, %v320
      %330 = vst.msk [vmem:[%s244 + $0x38] sm:$0xff] %vm322, %v321
      %p331 = scmp.lt.s32.totalorder %s16, 1
      %s332 = scalar_select %p331, %s16, 1
      %s333 = smul.addr %s332, 8
      %s334 = smul.addr %s333, 8
      %s335 = scalar_lea.vmem %s5, %s334
      // Predicated region
      $region41: #{res_block_forward.5} parent=39 // pred_check
        %p336 = pneg %p149
      $region42: #{res_block_forward.5} parent=39 // pred_check_branch
        %338 = sbr.rel (%p336) target = $region44
      $region43: #{res_block_forward.5} parent=39 // pred_region
        _
      $region44: #{res_block_forward.5} parent=39 // pred_fallthru
        _
    $region40: #{res_block_forward.5} parent=5 // pred_fallthru
      _
    %p339 = scmp.le.s32.totalorder 2, %s11
    // Predicated region
    $region45: #{res_block_forward.5} parent=5 // pred_check
      %p340 = pneg %p339
    $region46: #{res_block_forward.5} parent=5 // pred_check_branch
      %342 = sbr.rel (%p340) target = $region48
    $region47: #{res_block_forward.5} parent=5 // pred_region
      %s343 = ssub.s32 %s11, 2
      // Predicated region
      $region49: #{res_block_forward.5} parent=47 // pred_check
        %p344 = pneg %p155
      $region50: #{res_block_forward.5} parent=47 // pred_check_branch
        %346 = sbr.rel (%p344) target = $region52
      $region51: #{res_block_forward.5} parent=47 // pred_region
        %p347 = scmp.lt.s32.totalorder %s17, 1
        %s348 = scalar_select %p347, %s17, 1
        %s349 = smul.addr %s348, 8
        %s350 = smul.addr %s349, 8
        %s351 = scalar_lea.vmem %s5, %s350
      $region52: #{res_block_forward.5} parent=47 // pred_fallthru
        _
    $region48: #{res_block_forward.5} parent=5 // pred_fallthru
      _
  $region6: #{res_block_forward.5} parent=0 // loop_footer
    %s15 = sadd.s32 1, %s11
  $region7: #{res_block_forward.5} parent=0 // loop_footer_branch
    %10 = sbr.rel target = $region3
  $region8: #{res_block_forward.5} parent=0 // loop_exit
    _

// kernel: res_block_forward.4
$region0: #{res_block_forward.4}
  #allocation0 [shape = 'u32[]', space=smem, size = 0x4, offset = 0x4, fixed_abs, tag = 'smem constant byte address 0x4 - core index']
  #allocation1 [shape = 'u32[144,128]{1,0:T(1,128)}', space=vmem, size = 0x12000, scoped, tag = 'internal scratch']
  #allocation2 [shape = 'f32[10,10,8]{2,1,0:T(8,128)}', space=vmem, size = 0x14000, scoped, tag = 'scratch operand']
  %s0 = inlined_call_operand.vmem [shape: bf16[2,8,8,8], index: 0, kind: input, shape index: {}]
  %s1 = inlined_call_operand.vmem [shape: bf16[9,8,8], index: 1, kind: input, shape index: {}]
  %s2 = inlined_call_operand.vmem [shape: f32[1,8], index: 2, kind: input, shape index: {}]
  %s3 = inlined_call_operand.vmem [shape: f32[1,8], index: 3, kind: input, shape index: {}]
  %s4 = inlined_call_operand.vmem [shape: f32[2,8,8,8], index: 4, kind: output, shape index: {0}]
  %s5 = inlined_call_operand.vmem [shape: f32[2,2,8], index: 5, kind: output, shape index: {1}]
  %6 = xla_tuple %s4, %s5
  %s7 = sld [smem:[#allocation0]]
  $region57: #{res_block_forward.4} parent=0
    _
  %s9 = ssub.s32 1, %s7
  %s10 = scalar_select 0, %s9, %s7
  loop: start=0, step=1, limit=4
  $region2: #{res_block_forward.4} parent=0 // loop_pre_header
    _
  $region3: #{res_block_forward.4} parent=0 // loop_header
    %s12 = sphi 0, %s16
    %p13 = scmp.ge.s32.totalorder %s12, 4
    %s22 = sphi 0, %s24
    %s25 = sphi 0, %s22
    %s26 = sphi 0, %s25
    %s42 = sphi 0, %s26
    %s46 = sphi 0, %s46
    %s48 = sphi 0, %s46
    %s49 = sphi 0, %s48
    %s63 = sphi 0, %s49
    %s67 = sphi 0, %s67
    %s69 = sphi 0, %s67
    %s70 = sphi 0, %s69
    %s84 = sphi 0, %s70
    %s88 = sphi 0, %s88
    %s90 = sphi 0, %s88
    %s91 = sphi 0, %s90
    %s105 = sphi 0, %s91
    %s111 = sphi 0, %s113
    %s114 = sphi 0, %s111
    %s115 = sphi 0, %s114
    %s131 = sphi 0, %s115
    %s137 = sphi 0, %s139
    %s140 = sphi 0, %s137
    %s141 = sphi 0, %s140
    %s157 = sphi 0, %s141
  $region4: #{res_block_forward.4} parent=0 // loop_header_branch
    %15 = sbr.rel (%p13) target = $region8
  $region5: #{res_block_forward.4} parent=0 // loop_body
    %s17 = ssub.s32 %s12, 1
    %s18 = ssub.s32 %s12, 2
    %s19 = sadd.s32 %s12, 1
    %s20 = ssub.s32 %s12, %s19
    %p21 = scmp.eq.s32.totalorder %s20, 0
    %s23 = sadd.s32 %s22, 1
    %s24 = scalar_select %p21, %s22, %s23
    %p27 = pneg %p21
    %p28 = scmp.eq.s32.totalorder %s12, 1
    %p29 = por %p27, %p28
    %p30 = scmp.ne.s32.totalorder %s22, %s25
    %p31 = scmp.eq.s32.totalorder %s12, 0
    %p32 = por %p30, %p31
    %p33 = scmp.ne.s32.totalorder %s22, %s25
    %p34 = scmp.eq.s32.totalorder %s17, 1
    %p35 = por %p33, %p34
    %p36 = scmp.ne.s32.totalorder %s25, %s26
    %p37 = scmp.eq.s32.totalorder %s17, 0
    %p38 = por %p36, %p37
    %p39 = scmp.ne.s32.totalorder %s25, %s26
    %p40 = scmp.eq.s32.totalorder %s18, 1
    %p41 = por %p39, %p40
    %p43 = scmp.ne.s32.totalorder %s26, %s42
    %p44 = scmp.eq.s32.totalorder %s18, 0
    %p45 = por %p43, %p44
    %s47 = sadd.s32 %s46, 1
    %p50 = scmp.eq.s32.totalorder %s12, 1
    %p51 = scmp.ne.s32.totalorder %s46, %s48
    %p52 = scmp.eq.s32.totalorder %s12, 0
    %p53 = por %p51, %p52
    %p54 = scmp.ne.s32.totalorder %s46, %s48
    %p55 = scmp.eq.s32.totalorder %s17, 1
    %p56 = por %p54, %p55
    %p57 = scmp.ne.s32.totalorder %s48, %s49
    %p58 = scmp.eq.s32.totalorder %s17, 0
    %p59 = por %p57, %p58
    %p60 = scmp.ne.s32.totalorder %s48, %s49
    %p61 = scmp.eq.s32.totalorder %s18, 1
    %p62 = por %p60, %p61
    %p64 = scmp.ne.s32.totalorder %s49, %s63
    %p65 = scmp.eq.s32.totalorder %s18, 0
    %p66 = por %p64, %p65
    %s68 = sadd.s32 %s67, 1
    %p71 = scmp.eq.s32.totalorder %s12, 1
    %p72 = scmp.ne.s32.totalorder %s67, %s69
    %p73 = scmp.eq.s32.totalorder %s12, 0
    %p74 = por %p72, %p73
    %p75 = scmp.ne.s32.totalorder %s67, %s69
    %p76 = scmp.eq.s32.totalorder %s17, 1
    %p77 = por %p75, %p76
    %p78 = scmp.ne.s32.totalorder %s69, %s70
    %p79 = scmp.eq.s32.totalorder %s17, 0
    %p80 = por %p78, %p79
    %p81 = scmp.ne.s32.totalorder %s69, %s70
    %p82 = scmp.eq.s32.totalorder %s18, 1
    %p83 = por %p81, %p82
    %p85 = scmp.ne.s32.totalorder %s70, %s84
    %p86 = scmp.eq.s32.totalorder %s18, 0
    %p87 = por %p85, %p86
    %s89 = sadd.s32 %s88, 1
    %p92 = scmp.eq.s32.totalorder %s12, 1
    %p93 = scmp.ne.s32.totalorder %s88, %s90
    %p94 = scmp.eq.s32.totalorder %s12, 0
    %p95 = por %p93, %p94
    %p96 = scmp.ne.s32.totalorder %s88, %s90
    %p97 = scmp.eq.s32.totalorder %s17, 1
    %p98 = por %p96, %p97
    %p99 = scmp.ne.s32.totalorder %s90, %s91
    %p100 = scmp.eq.s32.totalorder %s17, 0
    %p101 = por %p99, %p100
    %p102 = scmp.ne.s32.totalorder %s90, %s91
    %p103 = scmp.eq.s32.totalorder %s18, 1
    %p104 = por %p102, %p103
    %p106 = scmp.ne.s32.totalorder %s91, %s105
    %p107 = scmp.eq.s32.totalorder %s18, 0
    %p108 = por %p106, %p107
    %s109 = ssub.s32 %s12, %s19
    %p110 = scmp.eq.s32.totalorder %s109, 0
    %s112 = sadd.s32 %s111, 1
    %s113 = scalar_select %p110, %s111, %s112
    %p116 = pneg %p110
    %p117 = scmp.eq.s32.totalorder %s12, 1
    %p118 = por %p116, %p117
    %p119 = scmp.ne.s32.totalorder %s111, %s114
    %p120 = scmp.eq.s32.totalorder %s12, 0
    %p121 = por %p119, %p120
    %p122 = scmp.ne.s32.totalorder %s111, %s114
    %p123 = scmp.eq.s32.totalorder %s17, 1
    %p124 = por %p122, %p123
    %p125 = scmp.ne.s32.totalorder %s114, %s115
    %p126 = scmp.eq.s32.totalorder %s17, 0
    %p127 = por %p125, %p126
    %p128 = scmp.ne.s32.totalorder %s114, %s115
    %p129 = scmp.eq.s32.totalorder %s18, 1
    %p130 = por %p128, %p129
    %p132 = scmp.ne.s32.totalorder %s115, %s131
    %p133 = scmp.eq.s32.totalorder %s18, 0
    %p134 = por %p132, %p133
    %s135 = ssub.s32 %s12, %s19
    %p136 = scmp.eq.s32.totalorder %s135, 0
    %s138 = sadd.s32 %s137, 1
    %s139 = scalar_select %p136, %s137, %s138
    %p142 = pneg %p136
    %p143 = scmp.eq.s32.totalorder %s12, 1
    %p144 = por %p142, %p143
    %p145 = scmp.ne.s32.totalorder %s137, %s140
    %p146 = scmp.eq.s32.totalorder %s12, 0
    %p147 = por %p145, %p146
    %p148 = scmp.ne.s32.totalorder %s137, %s140
    %p149 = scmp.eq.s32.totalorder %s17, 1
    %p150 = por %p148, %p149
    %p151 = scmp.ne.s32.totalorder %s140, %s141
    %p152 = scmp.eq.s32.totalorder %s17, 0
    %p153 = por %p151, %p152
    %p154 = scmp.ne.s32.totalorder %s140, %s141
    %p155 = scmp.eq.s32.totalorder %s18, 1
    %p156 = por %p154, %p155
    %p158 = scmp.ne.s32.totalorder %s141, %s157
    %p159 = scmp.eq.s32.totalorder %s18, 0
    %p160 = por %p158, %p159
    %p161 = scmp.le.s32.totalorder 1, %s12
    %p162 = scmp.lt.s32.totalorder %s12, 3
    %p163 = pnand %p161, %p162
    %p164 = pneg %p163
    // Predicated region
    $region9: #{res_block_forward.4} parent=5 // pred_check
      _
    $region10: #{res_block_forward.4} parent=5 // pred_check_branch
      %166 = sbr.rel (%p163) target = $region12
    $region11: #{res_block_forward.4} parent=5 // pred_region
      %s167 = ssub.s32 %s12, 1
      // Predicated region
      $region13: #{res_block_forward.4} parent=11 // pred_check
        %p168 = pneg %p59
      $region14: #{res_block_forward.4} parent=11 // pred_check_branch
        %170 = sbr.rel (%p168) target = $region16
      $region15: #{res_block_forward.4} parent=11 // pred_region
        _
      $region16: #{res_block_forward.4} parent=11 // pred_fallthru
        _
      // Predicated region
      $region17: #{res_block_forward.4} parent=11 // pred_check
        %p171 = pneg %p80
      $region18: #{res_block_forward.4} parent=11 // pred_check_branch
        %173 = sbr.rel (%p171) target = $region20
      $region19: #{res_block_forward.4} parent=11 // pred_region
        _
      $region20: #{res_block_forward.4} parent=11 // pred_fallthru
        _
      // Predicated region
      $region21: #{res_block_forward.4} parent=11 // pred_check
        %p174 = pneg %p101
      $region22: #{res_block_forward.4} parent=11 // pred_check_branch
        %176 = sbr.rel (%p174) target = $region24
      $region23: #{res_block_forward.4} parent=11 // pred_region
        _
      $region24: #{res_block_forward.4} parent=11 // pred_fallthru
        _
    $region12: #{res_block_forward.4} parent=5 // pred_fallthru
      _
    %p177 = scmp.lt.s32.totalorder %s12, 2
    // Predicated region
    $region25: #{res_block_forward.4} parent=5 // pred_check
      %p178 = pneg %p177
    $region26: #{res_block_forward.4} parent=5 // pred_check_branch
      %180 = sbr.rel (%p178) target = $region28
    $region27: #{res_block_forward.4} parent=5 // pred_region
      // Predicated region
      $region29: #{res_block_forward.4} parent=27 // pred_check
        %p181 = pneg %p32
      $region30: #{res_block_forward.4} parent=27 // pred_check_branch
        %183 = sbr.rel (%p181) target = $region32
      $region31: #{res_block_forward.4} parent=27 // pred_region
        %p184 = scmp.lt.s32.totalorder %s12, 1
        %s185 = scalar_select %p184, %s12, 1
        %s186 = smul.addr %s185, 8
        %s187 = smul.addr %s186, 4
        %s188 = scalar_lea.vmem %s0, %s187
      $region32: #{res_block_forward.4} parent=27 // pred_fallthru
        _
    $region28: #{res_block_forward.4} parent=5 // pred_fallthru
      _
    %p189 = scmp.le.s32.totalorder 1, %s12
    %p190 = scmp.lt.s32.totalorder %s12, 3
    %p191 = pnand %p189, %p190
    %p192 = pneg %p191
    // Predicated region
    $region33: #{res_block_forward.4} parent=5 // pred_check
      _
    $region34: #{res_block_forward.4} parent=5 // pred_check_branch
      %194 = sbr.rel (%p191) target = $region36
    $region35: #{res_block_forward.4} parent=5 // pred_region
      %s195 = ssub.s32 %s12, 1
      %p196 = scmp.lt.s32.totalorder %s17, 1
      %s197 = scalar_select %p196, %s17, 1
      %s198 = smul.addr %s197, 8
      %s199 = smul.addr %s198, 4
      %s200 = scalar_lea.vmem %s0, %s199
      %p201 = pneg %p38
      %p202 = pneg %p35
      %p203 = pneg %p59
      %p204 = pneg %p56
      %p205 = pneg %p80
      %p206 = pneg %p77
      %p207 = pneg %p101
      %p208 = pneg %p98
      %p209 = pneg %p127
      %p210 = pneg %p124
      %p211 = scmp.lt.s32.totalorder %s17, 1
      %s212 = scalar_select %p211, %s17, 1
      %s213 = smul.addr %s212, 8
      %s214 = smul.addr %s213, 8
      %s215 = scalar_lea.vmem %s4, %s214
      %p216 = pneg %p153
      %p217 = pneg %p150
      %p218 = scmp.lt.s32.totalorder %s17, 1
      %s219 = scalar_select %p218, %s17, 1
      %s220 = smul.addr %s219, 2
      %s221 = scalar_lea.vmem %s5, %s220
      %p222 = scmp.lt.s32.totalorder %s17, 1
      %s223 = scalar_select %p222, %s17, 1
      %s224 = smul.addr %s223, 8
      %s225 = smul.addr %s224, 4
      %s226 = scalar_lea.vmem %s0, %s225
      %p227 = scmp.lt.s32.totalorder %s17, 1
      %s228 = scalar_select %p227, %s17, 1
      %s229 = smul.addr %s228, 8
      %s230 = smul.addr %s229, 8
      %s231 = scalar_lea.vmem %s4, %s230
      %p232 = scmp.lt.s32.totalorder %s17, 1
      %s233 = scalar_select %p232, %s17, 1
      %s234 = smul.addr %s233, 2
      %s235 = scalar_lea.vmem %s5, %s234
      %v237 = vld [vmem:[%s226] sm:$0xf]
      %v238 = vld [vmem:[%s226 + $0x4] sm:$0xf]
      %v239 = vld [vmem:[%s226 + $0x8] sm:$0xf]
      %v240 = vld [vmem:[%s226 + $0xc] sm:$0xf]
      %v241 = vld [vmem:[%s226 + $0x10] sm:$0xf]
      %v242 = vld [vmem:[%s226 + $0x14] sm:$0xf]
      %v243 = vld [vmem:[%s226 + $0x18] sm:$0xf]
      %v244 = vld [vmem:[%s226 + $0x1c] sm:$0xf]
      %v245 = vunpack.c.l.bf16 %v237
      %v246 = vunpack.c.l.bf16 %v238
      %v247 = vunpack.c.l.bf16 %v239
      %v248 = vunpack.c.l.bf16 %v240
      %v249 = vunpack.c.l.bf16 %v241
      %v250 = vunpack.c.l.bf16 %v242
      %v251 = vunpack.c.l.bf16 %v243
      %v252 = vunpack.c.l.bf16 %v244
      %v253 = vld [vmem:[%s2] sm:$0x1]
      %v255 = vlaneseq
      %v256 = vshrl.u32 %v255, 7
      %v257 = vsub.s32 0, %v256
      %v258 = vrot.slane %v253, %v257
      %v260 = vmul.f32 %v245, %v258
      %v261 = vmul.f32 %v246, %v258
      %v262 = vmul.f32 %v247, %v258
      %v263 = vmul.f32 %v248, %v258
      %v264 = vmul.f32 %v249, %v258
      %v265 = vmul.f32 %v250, %v258
      %v266 = vmul.f32 %v251, %v258
      %v267 = vmul.f32 %v252, %v258
      %v268 = vld [vmem:[%s3] sm:$0x1]
      %v270 = vlaneseq
      %v271 = vshrl.u32 %v270, 7
      %v272 = vsub.s32 0, %v271
      %v273 = vrot.slane %v268, %v272
      %v275 = vadd.f32 %v260, %v273
      %v276 = vadd.f32 %v261, %v273
      %v277 = vadd.f32 %v262, %v273
      %v278 = vadd.f32 %v263, %v273
      %v279 = vadd.f32 %v264, %v273
      %v280 = vadd.f32 %v265, %v273
      %v281 = vadd.f32 %v266, %v273
      %v282 = vadd.f32 %v267, %v273
      %v283 = vmax.f32 %v275, 0.0
      %v284 = vmax.f32 %v276, 0.0
      %v285 = vmax.f32 %v277, 0.0
      %v286 = vmax.f32 %v278, 0.0
      %v287 = vmax.f32 %v279, 0.0
      %v288 = vmax.f32 %v280, 0.0
      %v289 = vmax.f32 %v281, 0.0
      %v290 = vmax.f32 %v282, 0.0
      %vm291 = vcmask 64512
      %292 = vst.msk [vmem:[#allocation2] sm:$0xff] %vm291, 0.0
      %vm293 = vcmask 58368
      %294 = vst.msk [vmem:[#allocation2 + $0x8] sm:$0x3] %vm293, 0.0
      %295 = vst.msk [vmem:[#allocation2 + $0x10] sm:$0xff] %vm291, 0.0
      %296 = vst.msk [vmem:[#allocation2 + $0x18] sm:$0x3] %vm293, 0.0
      %297 = vst.msk [vmem:[#allocation2 + $0x20] sm:$0xff] %vm291, 0.0
      %298 = vst.msk [vmem:[#allocation2 + $0x28] sm:$0x3] %vm293, 0.0
      %299 = vst.msk [vmem:[#allocation2 + $0x30] sm:$0xff] %vm291, 0.0
      %300 = vst.msk [vmem:[#allocation2 + $0x38] sm:$0x3] %vm293, 0.0
      %301 = vst.msk [vmem:[#allocation2 + $0x40] sm:$0xff] %vm291, 0.0
      %302 = vst.msk [vmem:[#allocation2 + $0x48] sm:$0x3] %vm293, 0.0
      %303 = vst.msk [vmem:[#allocation2 + $0x50] sm:$0xff] %vm291, 0.0
      %304 = vst.msk [vmem:[#allocation2 + $0x58] sm:$0x3] %vm293, 0.0
      %305 = vst.msk [vmem:[#allocation2 + $0x60] sm:$0xff] %vm291, 0.0
      %306 = vst.msk [vmem:[#allocation2 + $0x68] sm:$0x3] %vm293, 0.0
      %307 = vst.msk [vmem:[#allocation2 + $0x70] sm:$0xff] %vm291, 0.0
      %308 = vst.msk [vmem:[#allocation2 + $0x78] sm:$0x3] %vm293, 0.0
      %309 = vst.msk [vmem:[#allocation2 + $0x80] sm:$0xff] %vm291, 0.0
      %310 = vst.msk [vmem:[#allocation2 + $0x88] sm:$0x3] %vm293, 0.0
      %311 = vst.msk [vmem:[#allocation2 + $0x90] sm:$0xff] %vm291, 0.0
      %312 = vst.msk [vmem:[#allocation2 + $0x98] sm:$0x3] %vm293, 0.0
      %s313 = scalar_lea.vmem [#allocation2], 16
      %314 = vst.msk [vmem:[%s313 + $0x1] sm:$0xff] %vm291, %v283
      %315 = vst.msk [vmem:[%s313 + $0x11] sm:$0xff] %vm291, %v284
      %316 = vst.msk [vmem:[%s313 + $0x21] sm:$0xff] %vm291, %v285
      %317 = vst.msk [vmem:[%s313 + $0x31] sm:$0xff] %vm291, %v286
      %318 = vst.msk [vmem:[%s313 + $0x41] sm:$0xff] %vm291, %v287
      %319 = vst.msk [vmem:[%s313 + $0x51] sm:$0xff] %vm291, %v288
      %320 = vst.msk [vmem:[%s313 + $0x61] sm:$0xff] %vm291, %v289
      %321 = vst.msk [vmem:[%s313 + $0x71] sm:$0xff] %vm291, %v290
      %v322 = vld [vmem:[#allocation2] sm:$0xff]
      %v323 = vld [vmem:[#allocation2 + $0x10] sm:$0xff]
      %v324 = vld [vmem:[#allocation2 + $0x20] sm:$0xff]
      %v325 = vld [vmem:[#allocation2 + $0x30] sm:$0xff]
      %v326 = vld [vmem:[#allocation2 + $0x40] sm:$0xff]
      %v327 = vld [vmem:[#allocation2 + $0x50] sm:$0xff]
      %v328 = vld [vmem:[#allocation2 + $0x60] sm:$0xff]
      %v329 = vld [vmem:[#allocation2 + $0x70] sm:$0xff]
      %v330 = vpack.c.bf16 %v323, %v322
      %v331 = vpack.c.bf16 %v325, %v324
      %v332 = vpack.c.bf16 %v327, %v326
      %v333 = vpack.c.bf16 %v329, %v328
      %v334 = vld [vmem:[%s1] sm:$0xf]
      %v335 = vld [vmem:[#allocation2 + $0x1] sm:$0xff]
      %v336 = vld [vmem:[#allocation2 + $0x11] sm:$0xff]
      %v337 = vld [vmem:[#allocation2 + $0x21] sm:$0xff]
      %v338 = vld [vmem:[#allocation2 + $0x31] sm:$0xff]
      %v339 = vld [vmem:[#allocation2 + $0x41] sm:$0xff]
      %v340 = vld [vmem:[#allocation2 + $0x51] sm:$0xff]
      %v341 = vld [vmem:[#allocation2 + $0x61] sm:$0xff]
      %v342 = vld [vmem:[#allocation2 + $0x71] sm:$0xff]
      %v343 = vpack.c.bf16 %v336, %v335
      %v344 = vpack.c.bf16 %v338, %v337
      %v345 = vpack.c.bf16 %v340, %v339
      %v346 = vpack.c.bf16 %v342, %v341
      %s347 = scalar_lea.vmem %s1, 4
      %v348 = vld [vmem:[%s347] sm:$0xf]
      %v350 = vsel %vm291, %v343, 0
      %v353 = vsel %vm291, %v344, 0
      %v356 = vsel %vm291, %v345, 0
      %v359 = vsel %vm291, %v346, 0
      %vm361 = vcmask 1043456
      %v363 = vsel %vm361, %v348, 0
      %365 = vmatprep.subr.bf16.mxu0 0
      %366 = vmatpush1.bf16.msra.mxu0 %v363
      %367 = vmatprep.subr.bf16.mxu0 0
      %368 = vmatpush1.bf16.msra.mxu0 0
      %369 = vmatprep.subr.bf16.mxu0 0
      %370 = vmatpush1.bf16.msra.mxu0 0
      %371 = vmatprep.subr.bf16.mxu0 0
      %372 = vmatpush1.bf16.msra.mxu0 0
      %373 = vmatprep.subr.bf16.mxu0 0
      %374 = vmatpush1.bf16.msra.mxu0 0
      %375 = vmatprep.subr.bf16.mxu0 0
      %376 = vmatpush1.bf16.msra.mxu0 0
      %377 = vmatprep.subr.bf16.mxu0 0
      %378 = vmatpush1.bf16.msra.mxu0 0
      %379 = vmatprep.subr.bf16.mxu0 0
      %380 = vmatpush1.bf16.msra.mxu0 0
      %381 = vmatprep.subr.bf16.mxu0 0
      %382 = vmatpush1.bf16.msra.mxu0 0
      %383 = vmatprep.subr.bf16.mxu0 0
      %384 = vmatpush1.bf16.msra.mxu0 0
      %385 = vmatprep.subr.bf16.mxu0 0
      %386 = vmatpush1.bf16.msra.mxu0 0
      %387 = vmatprep.subr.bf16.mxu0 0
      %388 = vmatpush1.bf16.msra.mxu0 0
      %389 = vmatprep.subr.bf16.mxu0 0
      %390 = vmatpush1.bf16.msra.mxu0 0
      %391 = vmatprep.subr.bf16.mxu0 0
      %392 = vmatpush1.bf16.msra.mxu0 0
      %393 = vmatprep.subr.bf16.mxu0 0
      %394 = vmatpush1.bf16.msra.mxu0 0
      %395 = vmatprep.subr.bf16.mxu0 0
      %396 = vmatpush1.bf16.msra.mxu0 0
      %397 = vmatprep.mubr.bf16.mxu0 0
      %398 = vmatmul.mubr.bf16.gmra.mrb[0].mxu0 %v350
      %v399 = vpop.f32.mrb[0].mxu0
      %v400 = vadd.f32 0.0, %v399
      %v401 = vpop.f32.mrb[0].mxu0
      %v402 = vpop.f32.mrb[0].mxu0
      %v403 = vadd.f32 0.0, %v402
      %v404 = vpop.f32.mrb[0].mxu0
      %405 = vmatprep.mubr.bf16.mxu0 0
      %406 = vmatmul.mubr.bf16.gmra.mrb[0].mxu0 %v353
      %v407 = vpop.f32.mrb[0].mxu0
      %v408 = vadd.f32 0.0, %v407
      %v409 = vpop.f32.mrb[0].mxu0
      %v410 = vpop.f32.mrb[0].mxu0
      %v411 = vadd.f32 0.0, %v410
      %v412 = vpop.f32.mrb[0].mxu0
      %413 = vmatprep.mubr.bf16.mxu0 0
      %414 = vmatmul.mubr.bf16.gmra.mrb[0].mxu0 %v356
      %v415 = vpop.f32.mrb[0].mxu0
      %v416 = vadd.f32 0.0, %v415
      %v417 = vpop.f32.mrb[0].mxu0
      %v418 = vpop.f32.mrb[0].mxu0
      %v419 = vadd.f32 0.0, %v418
      %v420 = vpop.f32.mrb[0].mxu0
      %421 = vmatprep.mubr.bf16.mxu0 0
      %422 = vmatmul.mubr.bf16.gmra.mrb[0].mxu0 %v359
      %v423 = vpop.f32.mrb[0].mxu0
      %v424 = vadd.f32 0.0, %v423
      %v425 = vpop.f32.mrb[0].mxu0
      %v426 = vpop.f32.mrb[0].mxu0
      %v427 = vadd.f32 0.0, %v426
      %v428 = vpop.f32.mrb[0].mxu0
      %429 = vdwg.mxu0
      %v431 = vsel %vm291, %v330, 0
      %v434 = vsel %vm291, %v331, 0
      %v437 = vsel %vm291, %v332, 0
      %v440 = vsel %vm291, %v333, 0
      %v443 = vsel %vm361, %v334, 0
      %445 = vmatprep.subr.bf16.mxu0 0
      %446 = vmatpush1.bf16.msra.mxu0 %v443
      %447 = vmatprep.subr.bf16.mxu0 0
      %448 = vmatpush1.bf16.msra.mxu0 0
      %449 = vmatprep.subr.bf16.mxu0 0
      %450 = vmatpush1.bf16.msra.mxu0 0
      %451 = vmatprep.subr.bf16.mxu0 0
      %452 = vmatpush1.bf16.msra.mxu0 0
      %453 = vmatprep.subr.bf16.mxu0 0
      %454 = vmatpush1.bf16.msra.mxu0 0
      %455 = vmatprep.subr.bf16.mxu0 0
      %456 = vmatpush1.bf16.msra.mxu0 0
      %457 = vmatprep.subr.bf16.mxu0 0
      %458 = vmatpush1.bf16.msra.mxu0 0
      %459 = vmatprep.subr.bf16.mxu0 0
      %460 = vmatpush1.bf16.msra.mxu0 0
      %461 = vmatprep.subr.bf16.mxu0 0
      %462 = vmatpush1.bf16.msra.mxu0 0
      %463 = vmatprep.subr.bf16.mxu0 0
      %464 = vmatpush1.bf16.msra.mxu0 0
      %465 = vmatprep.subr.bf16.mxu0 0
      %466 = vmatpush1.bf16.msra.mxu0 0
      %467 = vmatprep.subr.bf16.mxu0 0
      %468 = vmatpush1.bf16.msra.mxu0 0
      %469 = vmatprep.subr.bf16.mxu0 0
      %470 = vmatpush1.bf16.msra.mxu0 0
      %471 = vmatprep.subr.bf16.mxu0 0
      %472 = vmatpush1.bf16.msra.mxu0 0
      %473 = vmatprep.subr.bf16.mxu0 0
      %474 = vmatpush1.bf16.msra.mxu0 0
      %475 = vmatprep.subr.bf16.mxu0 0
      %476 = vmatpush1.bf16.msra.mxu0 0
      %477 = vmatprep.mubr.bf16.mxu0 0
      %478 = vmatmul.mubr.bf16.gmra.mrb[0].mxu0 %v431
      %v479 = vpop.f32.mrb[0].mxu0
      %v480 = vadd.f32 %v400, %v479
      %v481 = vpop.f32.mrb[0].mxu0
      %v482 = vpop.f32.mrb[0].mxu0
      %v483 = vadd.f32 %v403, %v482
      %v484 = vpop.f32.mrb[0].mxu0
      %485 = vmatprep.mubr.bf16.mxu0 0
      %486 = vmatmul.mubr.bf16.gmra.mrb[0].mxu0 %v434
      %v487 = vpop.f32.mrb[0].mxu0
      %v488 = vadd.f32 %v408, %v487
      %v489 = vpop.f32.mrb[0].mxu0
      %v490 = vpop.f32.mrb[0].mxu0
      %v491 = vadd.f32 %v411, %v490
      %v492 = vpop.f32.mrb[0].mxu0
      %493 = vmatprep.mubr.bf16.mxu0 0
      %494 = vmatmul.mubr.bf16.gmra.mrb[0].mxu0 %v437
      %v495 = vpop.f32.mrb[0].mxu0
      %v496 = vadd.f32 %v416, %v495
      %v497 = vpop.f32.mrb[0].mxu0
      %v498 = vpop.f32.mrb[0].mxu0
      %v499 = vadd.f32 %v419, %v498
      %v500 = vpop.f32.mrb[0].mxu0
      %501 = vmatprep.mubr.bf16.mxu0 0
      %502 = vmatmul.mubr.bf16.gmra.mrb[0].mxu0 %v440
      %v503 = vpop.f32.mrb[0].mxu0
      %v504 = vadd.f32 %v424, %v503
      %v505 = vpop.f32.mrb[0].mxu0
      %v506 = vpop.f32.mrb[0].mxu0
      %v507 = vadd.f32 %v427, %v506
      %v508 = vpop.f32.mrb[0].mxu0
      %509 = vdwg.mxu0
      %v510 = vld [vmem:[#allocation2 + $0x2] sm:$0xff]
      %v511 = vld [vmem:[#allocation2 + $0x12] sm:$0xff]
      %v512 = vld [vmem:[#allocation2 + $0x22] sm:$0xff]
      %v513 = vld [vmem:[#allocation2 + $0x32] sm:$0xff]
      %v514 = vld [vmem:[#allocation2 + $0x42] sm:$0xff]
      %v515 = vld [vmem:[#allocation2 + $0x52] sm:$0xff]
      %v516 = vld [vmem:[#allocation2 + $0x62] sm:$0xff]
      %v517 = vld [vmem:[#allocation2 + $0x72] sm:$0xff]
      %v518 = vpack.c.bf16 %v511, %v510
      %v519 = vpack.c.bf16 %v513, %v512
      %v520 = vpack.c.bf16 %v515, %v514
      %v521 = vpack.c.bf16 %v517, %v516
      %s522 = scalar_lea.vmem %s1, 8
      %v523 = vld [vmem:[%s522] sm:$0xf]
      %v525 = vsel %vm291, %v518, 0
      %v528 = vsel %vm291, %v519, 0
      %v531 = vsel %vm291, %v520, 0
      %v534 = vsel %vm291, %v521, 0
      %v537 = vsel %vm361, %v523, 0
      %539 = vmatprep.subr.bf16.mxu0 0
      %540 = vmatpush1.bf16.msra.mxu0 %v537
      %541 = vmatprep.subr.bf16.mxu0 0
      %542 = vmatpush1.bf16.msra.mxu0 0
      %543 = vmatprep.subr.bf16.mxu0 0
      %544 = vmatpush1.bf16.msra.mxu0 0
      %545 = vmatprep.subr.bf16.mxu0 0
      %546 = vmatpush1.bf16.msra.mxu0 0
      %547 = vmatprep.subr.bf16.mxu0 0
      %548 = vmatpush1.bf16.msra.mxu0 0
      %549 = vmatprep.subr.bf16.mxu0 0
      %550 = vmatpush1.bf16.msra.mxu0 0
      %551 = vmatprep.subr.bf16.mxu0 0
      %552 = vmatpush1.bf16.msra.mxu0 0
      %553 = vmatprep.subr.bf16.mxu0 0
      %554 = vmatpush1.bf16.msra.mxu0 0
      %555 = vmatprep.subr.bf16.mxu0 0
      %556 = vmatpush1.bf16.msra.mxu0 0
      %557 = vmatprep.subr.bf16.mxu0 0
      %558 = vmatpush1.bf16.msra.mxu0 0
      %559 = vmatprep.subr.bf16.mxu0 0
      %560 = vmatpush1.bf16.msra.mxu0 0
      %561 = vmatprep.subr.bf16.mxu0 0
      %562 = vmatpush1.bf16.msra.mxu0 0
      %563 = vmatprep.subr.bf16.mxu0 0
      %564 = vmatpush1.bf16.msra.mxu0 0
      %565 = vmatprep.subr.bf16.mxu0 0
      %566 = vmatpush1.bf16.msra.mxu0 0
      %567 = vmatprep.subr.bf16.mxu0 0
      %568 = vmatpush1.bf16.msra.mxu0 0
      %569 = vmatprep.subr.bf16.mxu0 0
      %570 = vmatpush1.bf16.msra.mxu0 0
      %571 = vmatprep.mubr.bf16.mxu0 0
      %572 = vmatmul.mubr.bf16.gmra.mrb[0].mxu0 %v525
      %v573 = vpop.f32.mrb[0].mxu0
      %v574 = vadd.f32 0.0, %v573
      %v575 = vpop.f32.mrb[0].mxu0
      %v576 = vpop.f32.mrb[0].mxu0
      %v577 = vadd.f32 0.0, %v576
      %v578 = vpop.f32.mrb[0].mxu0
      %579 = vmatprep.mubr.bf16.mxu0 0
      %580 = vmatmul.mubr.bf16.gmra.mrb[0].mxu0 %v528
      %v581 = vpop.f32.mrb[0].mxu0
      %v582 = vadd.f32 0.0, %v581
      %v583 = vpop.f32.mrb[0].mxu0
      %v584 = vpop.f32.mrb[0].mxu0
      %v585 = vadd.f32 0.0, %v584
      %v586 = vpop.f32.mrb[0].mxu0
      %587 = vmatprep.mubr.bf16.mxu0 0
      %588 = vmatmul.mubr.bf16.gmra.mrb[0].mxu0 %v531
      %v589 = vpop.f32.mrb[0].mxu0
      %v590 = vadd.f32 0.0, %v589
      %v591 = vpop.f32.mrb[0].mxu0
      %v592 = vpop.f32.mrb[0].mxu0
      %v593 = vadd.f32 0.0, %v592
      %v594 = vpop.f32.mrb[0].mxu0
      %595 = vmatprep.mubr.bf16.mxu0 0
      %596 = vmatmul.mubr.bf16.gmra.mrb[0].mxu0 %v534
      %v597 = vpop.f32.mrb[0].mxu0
      %v598 = vadd.f32 0.0, %v597
      %v599 = vpop.f32.mrb[0].mxu0
      %v600 = vpop.f32.mrb[0].mxu0
      %v601 = vadd.f32 0.0, %v600
      %v602 = vpop.f32.mrb[0].mxu0
      %603 = vdwg.mxu0
      %v604 = vadd.f32 %v480, %v574
      %v605 = vadd.f32 %v483, %v577
      %v606 = vadd.f32 %v488, %v582
      %v607 = vadd.f32 %v491, %v585
      %v608 = vadd.f32 %v496, %v590
      %v609 = vadd.f32 %v499, %v593
      %v610 = vadd.f32 %v504, %v598
      %v611 = vadd.f32 %v507, %v601
      %v612 = vld [vmem:[%s313] sm:$0xff]
      %v613 = vld [vmem:[%s313 + $0x10] sm:$0xff]
      %v614 = vld [vmem:[%s313 + $0x20] sm:$0xff]
      %v615 = vld [vmem:[%s313 + $0x30] sm:$0xff]
      %v616 = vld [vmem:[%s313 + $0x40] sm:$0xff]
      %v617 = vld [vmem:[%s313 + $0x50] sm:$0xff]
      %v618 = vld [vmem:[%s313 + $0x60] sm:$0xff]
      %v619 = vld [vmem:[%s313 + $0x70] sm:$0xff]
      %v620 = vpack.c.bf16 %v613, %v612
      %v621 = vpack.c.bf16 %v615, %v614
      %v622 = vpack.c.bf16 %v617, %v616
      %v623 = vpack.c.bf16 %v619, %v618
      %s624 = scalar_lea.vmem %s1, 12
      %v625 = vld [vmem:[%s624] sm:$0xf]
      %v627 = vsel %vm291, %v620, 0
      %v630 = vsel %vm291, %v621, 0
      %v633 = vsel %vm291, %v622, 0
      %v636 = vsel %vm291, %v623, 0
      %v639 = vsel %vm361, %v625, 0
      %641 = vmatprep.subr.bf16.mxu0 0
      %642 = vmatpush1.bf16.msra.mxu0 %v639
      %643 = vmatprep.subr.bf16.mxu0 0
      %644 = vmatpush1.bf16.msra.mxu0 0
      %645 = vmatprep.subr.bf16.mxu0 0
      %646 = vmatpush1.bf16.msra.mxu0 0
      %647 = vmatprep.subr.bf16.mxu0 0
      %648 = vmatpush1.bf16.msra.mxu0 0
      %649 = vmatprep.subr.bf16.mxu0 0
      %650 = vmatpush1.bf16.msra.mxu0 0
      %651 = vmatprep.subr.bf16.mxu0 0
      %652 = vmatpush1.bf16.msra.mxu0 0
      %653 = vmatprep.subr.bf16.mxu0 0
      %654 = vmatpush1.bf16.msra.mxu0 0
      %655 = vmatprep.subr.bf16.mxu0 0
      %656 = vmatpush1.bf16.msra.mxu0 0
      %657 = vmatprep.subr.bf16.mxu0 0
      %658 = vmatpush1.bf16.msra.mxu0 0
      %659 = vmatprep.subr.bf16.mxu0 0
      %660 = vmatpush1.bf16.msra.mxu0 0
      %661 = vmatprep.subr.bf16.mxu0 0
      %662 = vmatpush1.bf16.msra.mxu0 0
      %663 = vmatprep.subr.bf16.mxu0 0
      %664 = vmatpush1.bf16.msra.mxu0 0
      %665 = vmatprep.subr.bf16.mxu0 0
      %666 = vmatpush1.bf16.msra.mxu0 0
      %667 = vmatprep.subr.bf16.mxu0 0
      %668 = vmatpush1.bf16.msra.mxu0 0
      %669 = vmatprep.subr.bf16.mxu0 0
      %670 = vmatpush1.bf16.msra.mxu0 0
      %671 = vmatprep.subr.bf16.mxu0 0
      %672 = vmatpush1.bf16.msra.mxu0 0
      %673 = vmatprep.mubr.bf16.mxu0 0
      %674 = vmatmul.mubr.bf16.gmra.mrb[0].mxu0 %v627
      %v675 = vpop.f32.mrb[0].mxu0
      %v676 = vadd.f32 0.0, %v675
      %v677 = vpop.f32.mrb[0].mxu0
      %v678 = vpop.f32.mrb[0].mxu0
      %v679 = vadd.f32 0.0, %v678
      %v680 = vpop.f32.mrb[0].mxu0
      %681 = vmatprep.mubr.bf16.mxu0 0
      %682 = vmatmul.mubr.bf16.gmra.mrb[0].mxu0 %v630
      %v683 = vpop.f32.mrb[0].mxu0
      %v684 = vadd.f32 0.0, %v683
      %v685 = vpop.f32.mrb[0].mxu0
      %v686 = vpop.f32.mrb[0].mxu0
      %v687 = vadd.f32 0.0, %v686
      %v688 = vpop.f32.mrb[0].mxu0
      %689 = vmatprep.mubr.bf16.mxu0 0
      %690 = vmatmul.mubr.bf16.gmra.mrb[0].mxu0 %v633
      %v691 = vpop.f32.mrb[0].mxu0
      %v692 = vadd.f32 0.0, %v691
      %v693 = vpop.f32.mrb[0].mxu0
      %v694 = vpop.f32.mrb[0].mxu0
      %v695 = vadd.f32 0.0, %v694
      %v696 = vpop.f32.mrb[0].mxu0
      %697 = vmatprep.mubr.bf16.mxu0 0
      %698 = vmatmul.mubr.bf16.gmra.mrb[0].mxu0 %v636
      %v699 = vpop.f32.mrb[0].mxu0
      %v700 = vadd.f32 0.0, %v699
      %v701 = vpop.f32.mrb[0].mxu0
      %v702 = vpop.f32.mrb[0].mxu0
      %v703 = vadd.f32 0.0, %v702
      %v704 = vpop.f32.mrb[0].mxu0
      %705 = vdwg.mxu0
      %v706 = vadd.f32 %v604, %v676
      %v707 = vadd.f32 %v605, %v679
      %v708 = vadd.f32 %v606, %v684
      %v709 = vadd.f32 %v607, %v687
      %v710 = vadd.f32 %v608, %v692
      %v711 = vadd.f32 %v609, %v695
      %v712 = vadd.f32 %v610, %v700
      %v713 = vadd.f32 %v611, %v703
      %v714 = vld [vmem:[%s313 + $0x1] sm:$0xff]
      %v715 = vld [vmem:[%s313 + $0x11] sm:$0xff]
      %v716 = vld [vmem:[%s313 + $0x21] sm:$0xff]
      %v717 = vld [vmem:[%s313 + $0x31] sm:$0xff]
      %v718 = vld [vmem:[%s313 + $0x41] sm:$0xff]
      %v719 = vld [vmem:[%s313 + $0x51] sm:$0xff]
      %v720 = vld [vmem:[%s313 + $0x61] sm:$0xff]
      %v721 = vld [vmem:[%s313 + $0x71] sm:$0xff]
      %v722 = vpack.c.bf16 %v715, %v714
      %v723 = vpack.c.bf16 %v717, %v716
      %v724 = vpack.c.bf16 %v719, %v718
      %v725 = vpack.c.bf16 %v721, %v720
      %s726 = scalar_lea.vmem %s1, 16
      %v727 = vld [vmem:[%s726] sm:$0xf]
      %v729 = vsel %vm291, %v722, 0
      %v732 = vsel %vm291, %v723, 0
      %v735 = vsel %vm291, %v724, 0
      %v738 = vsel %vm291, %v725, 0
      %v741 = vsel %vm361, %v727, 0
      %743 = vmatprep.subr.bf16.mxu0 0
      %744 = vmatpush1.bf16.msra.mxu0 %v741
      %745 = vmatprep.subr.bf16.mxu0 0
      %746 = vmatpush1.bf16.msra.mxu0 0
      %747 = vmatprep.subr.bf16.mxu0 0
      %748 = vmatpush1.bf16.msra.mxu0 0
      %749 = vmatprep.subr.bf16.mxu0 0
      %750 = vmatpush1.bf16.msra.mxu0 0
      %751 = vmatprep.subr.bf16.mxu0 0
      %752 = vmatpush1.bf16.msra.mxu0 0
      %753 = vmatprep.subr.bf16.mxu0 0
      %754 = vmatpush1.bf16.msra.mxu0 0
      %755 = vmatprep.subr.bf16.mxu0 0
      %756 = vmatpush1.bf16.msra.mxu0 0
      %757 = vmatprep.subr.bf16.mxu0 0
      %758 = vmatpush1.bf16.msra.mxu0 0
      %759 = vmatprep.subr.bf16.mxu0 0
      %760 = vmatpush1.bf16.msra.mxu0 0
      %761 = vmatprep.subr.bf16.mxu0 0
      %762 = vmatpush1.bf16.msra.mxu0 0
      %763 = vmatprep.subr.bf16.mxu0 0
      %764 = vmatpush1.bf16.msra.mxu0 0
      %765 = vmatprep.subr.bf16.mxu0 0
      %766 = vmatpush1.bf16.msra.mxu0 0
      %767 = vmatprep.subr.bf16.mxu0 0
      %768 = vmatpush1.bf16.msra.mxu0 0
      %769 = vmatprep.subr.bf16.mxu0 0
      %770 = vmatpush1.bf16.msra.mxu0 0
      %771 = vmatprep.subr.bf16.mxu0 0
      %772 = vmatpush1.bf16.msra.mxu0 0
      %773 = vmatprep.subr.bf16.mxu0 0
      %774 = vmatpush1.bf16.msra.mxu0 0
      %775 = vmatprep.mubr.bf16.mxu0 0
      %776 = vmatmul.mubr.bf16.gmra.mrb[0].mxu0 %v729
      %v777 = vpop.f32.mrb[0].mxu0
      %v778 = vadd.f32 0.0, %v777
      %v779 = vpop.f32.mrb[0].mxu0
      %v780 = vpop.f32.mrb[0].mxu0
      %v781 = vadd.f32 0.0, %v780
      %v782 = vpop.f32.mrb[0].mxu0
      %783 = vmatprep.mubr.bf16.mxu0 0
      %784 = vmatmul.mubr.bf16.gmra.mrb[0].mxu0 %v732
      %v785 = vpop.f32.mrb[0].mxu0
      %v786 = vadd.f32 0.0, %v785
      %v787 = vpop.f32.mrb[0].mxu0
      %v788 = vpop.f32.mrb[0].mxu0
      %v789 = vadd.f32 0.0, %v788
      %v790 = vpop.f32.mrb[0].mxu0
      %791 = vmatprep.mubr.bf16.mxu0 0
      %792 = vmatmul.mubr.bf16.gmra.mrb[0].mxu0 %v735
      %v793 = vpop.f32.mrb[0].mxu0
      %v794 = vadd.f32 0.0, %v793
      %v795 = vpop.f32.mrb[0].mxu0
      %v796 = vpop.f32.mrb[0].mxu0
      %v797 = vadd.f32 0.0, %v796
      %v798 = vpop.f32.mrb[0].mxu0
      %799 = vmatprep.mubr.bf16.mxu0 0
      %800 = vmatmul.mubr.bf16.gmra.mrb[0].mxu0 %v738
      %v801 = vpop.f32.mrb[0].mxu0
      %v802 = vadd.f32 0.0, %v801
      %v803 = vpop.f32.mrb[0].mxu0
      %v804 = vpop.f32.mrb[0].mxu0
      %v805 = vadd.f32 0.0, %v804
      %v806 = vpop.f32.mrb[0].mxu0
      %807 = vdwg.mxu0
      %v808 = vadd.f32 %v706, %v778
      %v809 = vadd.f32 %v707, %v781
      %v810 = vadd.f32 %v708, %v786
      %v811 = vadd.f32 %v709, %v789
      %v812 = vadd.f32 %v710, %v794
      %v813 = vadd.f32 %v711, %v797
      %v814 = vadd.f32 %v712, %v802
      %v815 = vadd.f32 %v713, %v805
      %v816 = vld [vmem:[%s313 + $0x2] sm:$0xff]
      %v817 = vld [vmem:[%s313 + $0x12] sm:$0xff]
      %v818 = vld [vmem:[%s313 + $0x22] sm:$0xff]
      %v819 = vld [vmem:[%s313 + $0x32] sm:$0xff]
      %v820 = vld [vmem:[%s313 + $0x42] sm:$0xff]
      %v821 = vld [vmem:[%s313 + $0x52] sm:$0xff]
      %v822 = vld [vmem:[%s313 + $0x62] sm:$0xff]
      %v823 = vld [vmem:[%s313 + $0x72] sm:$0xff]
      %v824 = vpack.c.bf16 %v817, %v816
      %v825 = vpack.c.bf16 %v819, %v818
      %v826 = vpack.c.bf16 %v821, %v820
      %v827 = vpack.c.bf16 %v823, %v822
      %s828 = scalar_lea.vmem %s1, 20
      %v829 = vld [vmem:[%s828] sm:$0xf]
      %v831 = vsel %vm291, %v824, 0
      %v834 = vsel %vm291, %v825, 0
      %v837 = vsel %vm291, %v826, 0
      %v840 = vsel %vm291, %v827, 0
      %v843 = vsel %vm361, %v829, 0
      %845 = vmatprep.subr.bf16.mxu0 0
      %846 = vmatpush1.bf16.msra.mxu0 %v843
      %847 = vmatprep.subr.bf16.mxu0 0
      %848 = vmatpush1.bf16.msra.mxu0 0
      %849 = vmatprep.subr.bf16.mxu0 0
      %850 = vmatpush1.bf16.msra.mxu0 0
      %851 = vmatprep.subr.bf16.mxu0 0
      %852 = vmatpush1.bf16.msra.mxu0 0
      %853 = vmatprep.subr.bf16.mxu0 0
      %854 = vmatpush1.bf16.msra.mxu0 0
      %855 = vmatprep.subr.bf16.mxu0 0
      %856 = vmatpush1.bf16.msra.mxu0 0
      %857 = vmatprep.subr.bf16.mxu0 0
      %858 = vmatpush1.bf16.msra.mxu0 0
      %859 = vmatprep.subr.bf16.mxu0 0
      %860 = vmatpush1.bf16.msra.mxu0 0
      %861 = vmatprep.subr.bf16.mxu0 0
      %862 = vmatpush1.bf16.msra.mxu0 0
      %863 = vmatprep.subr.bf16.mxu0 0
      %864 = vmatpush1.bf16.msra.mxu0 0
      %865 = vmatprep.subr.bf16.mxu0 0
      %866 = vmatpush1.bf16.msra.mxu0 0
      %867 = vmatprep.subr.bf16.mxu0 0
      %868 = vmatpush1.bf16.msra.mxu0 0
      %869 = vmatprep.subr.bf16.mxu0 0
      %870 = vmatpush1.bf16.msra.mxu0 0
      %871 = vmatprep.subr.bf16.mxu0 0
      %872 = vmatpush1.bf16.msra.mxu0 0
      %873 = vmatprep.subr.bf16.mxu0 0
      %874 = vmatpush1.bf16.msra.mxu0 0
      %875 = vmatprep.subr.bf16.mxu0 0
      %876 = vmatpush1.bf16.msra.mxu0 0
      %877 = vmatprep.mubr.bf16.mxu0 0
      %878 = vmatmul.mubr.bf16.gmra.mrb[0].mxu0 %v831
      %v879 = vpop.f32.mrb[0].mxu0
      %v880 = vadd.f32 0.0, %v879
      %v881 = vpop.f32.mrb[0].mxu0
      %v882 = vpop.f32.mrb[0].mxu0
      %v883 = vadd.f32 0.0, %v882
      %v884 = vpop.f32.mrb[0].mxu0
      %885 = vmatprep.mubr.bf16.mxu0 0
      %886 = vmatmul.mubr.bf16.gmra.mrb[0].mxu0 %v834
      %v887 = vpop.f32.mrb[0].mxu0
      %v888 = vadd.f32 0.0, %v887
      %v889 = vpop.f32.mrb[0].mxu0
      %v890 = vpop.f32.mrb[0].mxu0
      %v891 = vadd.f32 0.0, %v890
      %v892 = vpop.f32.mrb[0].mxu0
      %893 = vmatprep.mubr.bf16.mxu0 0
      %894 = vmatmul.mubr.bf16.gmra.mrb[0].mxu0 %v837
      %v895 = vpop.f32.mrb[0].mxu0
      %v896 = vadd.f32 0.0, %v895
      %v897 = vpop.f32.mrb[0].mxu0
      %v898 = vpop.f32.mrb[0].mxu0
      %v899 = vadd.f32 0.0, %v898
      %v900 = vpop.f32.mrb[0].mxu0
      %901 = vmatprep.mubr.bf16.mxu0 0
      %902 = vmatmul.mubr.bf16.gmra.mrb[0].mxu0 %v840
      %v903 = vpop.f32.mrb[0].mxu0
      %v904 = vadd.f32 0.0, %v903
      %v905 = vpop.f32.mrb[0].mxu0
      %v906 = vpop.f32.mrb[0].mxu0
      %v907 = vadd.f32 0.0, %v906
      %v908 = vpop.f32.mrb[0].mxu0
      %909 = vdwg.mxu0
      %v910 = vadd.f32 %v808, %v880
      %v911 = vadd.f32 %v809, %v883
      %v912 = vadd.f32 %v810, %v888
      %v913 = vadd.f32 %v811, %v891
      %v914 = vadd.f32 %v812, %v896
      %v915 = vadd.f32 %v813, %v899
      %v916 = vadd.f32 %v814, %v904
      %v917 = vadd.f32 %v815, %v907
      %s918 = scalar_lea.vmem [#allocation2], 32
      %v919 = vld [vmem:[%s918] sm:$0xff]
      %v920 = vld [vmem:[%s918 + $0x10] sm:$0xff]
      %v921 = vld [vmem:[%s918 + $0x20] sm:$0xff]
      %v922 = vld [vmem:[%s918 + $0x30] sm:$0xff]
      %v923 = vld [vmem:[%s918 + $0x40] sm:$0xff]
      %v924 = vld [vmem:[%s918 + $0x50] sm:$0xff]
      %v925 = vld [vmem:[%s918 + $0x60] sm:$0xff]
      %v926 = vld [vmem:[%s918 + $0x70] sm:$0xff]
      %v927 = vpack.c.bf16 %v920, %v919
      %v928 = vpack.c.bf16 %v922, %v921
      %v929 = vpack.c.bf16 %v924, %v923
      %v930 = vpack.c.bf16 %v926, %v925
      %s931 = scalar_lea.vmem %s1, 24
      %v932 = vld [vmem:[%s931] sm:$0xf]
      %v934 = vsel %vm291, %v927, 0
      %v937 = vsel %vm291, %v928, 0
      %v940 = vsel %vm291, %v929, 0
      %v943 = vsel %vm291, %v930, 0
      %v946 = vsel %vm361, %v932, 0
      %948 = vmatprep.subr.bf16.mxu0 0
      %949 = vmatpush1.bf16.msra.mxu0 %v946
      %950 = vmatprep.subr.bf16.mxu0 0
      %951 = vmatpush1.bf16.msra.mxu0 0
      %952 = vmatprep.subr.bf16.mxu0 0
      %953 = vmatpush1.bf16.msra.mxu0 0
      %954 = vmatprep.subr.bf16.mxu0 0
      %955 = vmatpush1.bf16.msra.mxu0 0
      %956 = vmatprep.subr.bf16.mxu0 0
      %957 = vmatpush1.bf16.msra.mxu0 0
      %958 = vmatprep.subr.bf16.mxu0 0
      %959 = vmatpush1.bf16.msra.mxu0 0
      %960 = vmatprep.subr.bf16.mxu0 0
      %961 = vmatpush1.bf16.msra.mxu0 0
      %962 = vmatprep.subr.bf16.mxu0 0
      %963 = vmatpush1.bf16.msra.mxu0 0
      %964 = vmatprep.subr.bf16.mxu0 0
      %965 = vmatpush1.bf16.msra.mxu0 0
      %966 = vmatprep.subr.bf16.mxu0 0
      %967 = vmatpush1.bf16.msra.mxu0 0
      %968 = vmatprep.subr.bf16.mxu0 0
      %969 = vmatpush1.bf16.msra.mxu0 0
      %970 = vmatprep.subr.bf16.mxu0 0
      %971 = vmatpush1.bf16.msra.mxu0 0
      %972 = vmatprep.subr.bf16.mxu0 0
      %973 = vmatpush1.bf16.msra.mxu0 0
      %974 = vmatprep.subr.bf16.mxu0 0
      %975 = vmatpush1.bf16.msra.mxu0 0
      %976 = vmatprep.subr.bf16.mxu0 0
      %977 = vmatpush1.bf16.msra.mxu0 0
      %978 = vmatprep.subr.bf16.mxu0 0
      %979 = vmatpush1.bf16.msra.mxu0 0
      %980 = vmatprep.mubr.bf16.mxu0 0
      %981 = vmatmul.mubr.bf16.gmra.mrb[0].mxu0 %v934
      %v982 = vpop.f32.mrb[0].mxu0
      %v983 = vadd.f32 0.0, %v982
      %v984 = vpop.f32.mrb[0].mxu0
      %v985 = vpop.f32.mrb[0].mxu0
      %v986 = vadd.f32 0.0, %v985
      %v987 = vpop.f32.mrb[0].mxu0
      %988 = vmatprep.mubr.bf16.mxu0 0
      %989 = vmatmul.mubr.bf16.gmra.mrb[0].mxu0 %v937
      %v990 = vpop.f32.mrb[0].mxu0
      %v991 = vadd.f32 0.0, %v990
      %v992 = vpop.f32.mrb[0].mxu0
      %v993 = vpop.f32.mrb[0].mxu0
      %v994 = vadd.f32 0.0, %v993
      %v995 = vpop.f32.mrb[0].mxu0
      %996 = vmatprep.mubr.bf16.mxu0 0
      %997 = vmatmul.mubr.bf16.gmra.mrb[0].mxu0 %v940
      %v998 = vpop.f32.mrb[0].mxu0
      %v999 = vadd.f32 0.0, %v998
      %v1000 = vpop.f32.mrb[0].mxu0
      %v1001 = vpop.f32.mrb[0].mxu0
      %v1002 = vadd.f32 0.0, %v1001
      %v1003 = vpop.f32.mrb[0].mxu0
      %1004 = vmatprep.mubr.bf16.mxu0 0
      %1005 = vmatmul.mubr.bf16.gmra.mrb[0].mxu0 %v943
      %v1006 = vpop.f32.mrb[0].mxu0
      %v1007 = vadd.f32 0.0, %v1006
      %v1008 = vpop.f32.mrb[0].mxu0
      %v1009 = vpop.f32.mrb[0].mxu0
      %v1010 = vadd.f32 0.0, %v1009
      %v1011 = vpop.f32.mrb[0].mxu0
      %1012 = vdwg.mxu0
      %v1013 = vadd.f32 %v910, %v983
      %v1014 = vadd.f32 %v911, %v986
      %v1015 = vadd.f32 %v912, %v991
      %v1016 = vadd.f32 %v913, %v994
      %v1017 = vadd.f32 %v914, %v999
      %v1018 = vadd.f32 %v915, %v1002
      %v1019 = vadd.f32 %v916, %v1007
      %v1020 = vadd.f32 %v917, %v1010
      %v1021 = vld [vmem:[%s918 + $0x1] sm:$0xff]
      %v1022 = vld [vmem:[%s918 + $0x11] sm:$0xff]
      %v1023 = vld [vmem:[%s918 + $0x21] sm:$0xff]
      %v1024 = vld [vmem:[%s918 + $0x31] sm:$0xff]
      %v1025 = vld [vmem:[%s918 + $0x41] sm:$0xff]
      %v1026 = vld [vmem:[%s918 + $0x51] sm:$0xff]
      %v1027 = vld [vmem:[%s918 + $0x61] sm:$0xff]
      %v1028 = vld [vmem:[%s918 + $0x71] sm:$0xff]
      %v1029 = vpack.c.bf16 %v1022, %v1021
      %v1030 = vpack.c.bf16 %v1024, %v1023
      %v1031 = vpack.c.bf16 %v1026, %v1025
      %v1032 = vpack.c.bf16 %v1028, %v1027
      %s1033 = scalar_lea.vmem %s1, 28
      %v1034 = vld [vmem:[%s1033] sm:$0xf]
      %v1036 = vsel %vm291, %v1029, 0
      %v1039 = vsel %vm291, %v1030, 0
      %v1042 = vsel %vm291, %v1031, 0
      %v1045 = vsel %vm291, %v1032, 0
      %v1048 = vsel %vm361, %v1034, 0
      %1050 = vmatprep.subr.bf16.mxu0 0
      %1051 = vmatpush1.bf16.msra.mxu0 %v1048
      %1052 = vmatprep.subr.bf16.mxu0 0
      %1053 = vmatpush1.bf16.msra.mxu0 0
      %1054 = vmatprep.subr.bf16.mxu0 0
      %1055 = vmatpush1.bf16.msra.mxu0 0
      %1056 = vmatprep.subr.bf16.mxu0 0
      %1057 = vmatpush1.bf16.msra.mxu0 0
      %1058 = vmatprep.subr.bf16.mxu0 0
      %1059 = vmatpush1.bf16.msra.mxu0 0
      %1060 = vmatprep.subr.bf16.mxu0 0
      %1061 = vmatpush1.bf16.msra.mxu0 0
      %1062 = vmatprep.subr.bf16.mxu0 0
      %1063 = vmatpush1.bf16.msra.mxu0 0
      %1064 = vmatprep.subr.bf16.mxu0 0
      %1065 = vmatpush1.bf16.msra.mxu0 0
      %1066 = vmatprep.subr.bf16.mxu0 0
      %1067 = vmatpush1.bf16.msra.mxu0 0
      %1068 = vmatprep.subr.bf16.mxu0 0
      %1069 = vmatpush1.bf16.msra.mxu0 0
      %1070 = vmatprep.subr.bf16.mxu0 0
      %1071 = vmatpush1.bf16.msra.mxu0 0
      %1072 = vmatprep.subr.bf16.mxu0 0
      %1073 = vmatpush1.bf16.msra.mxu0 0
      %1074 = vmatprep.subr.bf16.mxu0 0
      %1075 = vmatpush1.bf16.msra.mxu0 0
      %1076 = vmatprep.subr.bf16.mxu0 0
      %1077 = vmatpush1.bf16.msra.mxu0 0
      %1078 = vmatprep.subr.bf16.mxu0 0
      %1079 = vmatpush1.bf16.msra.mxu0 0
      %1080 = vmatprep.subr.bf16.mxu0 0
      %1081 = vmatpush1.bf16.msra.mxu0 0
      %1082 = vmatprep.mubr.bf16.mxu0 0
      %1083 = vmatmul.mubr.bf16.gmra.mrb[0].mxu0 %v1036
      %v1084 = vpop.f32.mrb[0].mxu0
      %v1085 = vadd.f32 0.0, %v1084
      %v1086 = vpop.f32.mrb[0].mxu0
      %v1087 = vpop.f32.mrb[0].mxu0
      %v1088 = vadd.f32 0.0, %v1087
      %v1089 = vpop.f32.mrb[0].mxu0
      %1090 = vmatprep.mubr.bf16.mxu0 0
      %1091 = vmatmul.mubr.bf16.gmra.mrb[0].mxu0 %v1039
      %v1092 = vpop.f32.mrb[0].mxu0
      %v1093 = vadd.f32 0.0, %v1092
      %v1094 = vpop.f32.mrb[0].mxu0
      %v1095 = vpop.f32.mrb[0].mxu0
      %v1096 = vadd.f32 0.0, %v1095
      %v1097 = vpop.f32.mrb[0].mxu0
      %1098 = vmatprep.mubr.bf16.mxu0 0
      %1099 = vmatmul.mubr.bf16.gmra.mrb[0].mxu0 %v1042
      %v1100 = vpop.f32.mrb[0].mxu0
      %v1101 = vadd.f32 0.0, %v1100
      %v1102 = vpop.f32.mrb[0].mxu0
      %v1103 = vpop.f32.mrb[0].mxu0
      %v1104 = vadd.f32 0.0, %v1103
      %v1105 = vpop.f32.mrb[0].mxu0
      %1106 = vmatprep.mubr.bf16.mxu0 0
      %1107 = vmatmul.mubr.bf16.gmra.mrb[0].mxu0 %v1045
      %v1108 = vpop.f32.mrb[0].mxu0
      %v1109 = vadd.f32 0.0, %v1108
      %v1110 = vpop.f32.mrb[0].mxu0
      %v1111 = vpop.f32.mrb[0].mxu0
      %v1112 = vadd.f32 0.0, %v1111
      %v1113 = vpop.f32.mrb[0].mxu0
      %1114 = vdwg.mxu0
      %v1115 = vadd.f32 %v1013, %v1085
      %v1116 = vadd.f32 %v1014, %v1088
      %v1117 = vadd.f32 %v1015, %v1093
      %v1118 = vadd.f32 %v1016, %v1096
      %v1119 = vadd.f32 %v1017, %v1101
      %v1120 = vadd.f32 %v1018, %v1104
      %v1121 = vadd.f32 %v1019, %v1109
      %v1122 = vadd.f32 %v1020, %v1112
      %v1123 = vld [vmem:[%s918 + $0x2] sm:$0xff]
      %v1124 = vld [vmem:[%s918 + $0x12] sm:$0xff]
      %v1125 = vld [vmem:[%s918 + $0x22] sm:$0xff]
      %v1126 = vld [vmem:[%s918 + $0x32] sm:$0xff]
      %v1127 = vld [vmem:[%s918 + $0x42] sm:$0xff]
      %v1128 = vld [vmem:[%s918 + $0x52] sm:$0xff]
      %v1129 = vld [vmem:[%s918 + $0x62] sm:$0xff]
      %v1130 = vld [vmem:[%s918 + $0x72] sm:$0xff]
      %v1131 = vpack.c.bf16 %v1124, %v1123
      %v1132 = vpack.c.bf16 %v1126, %v1125
      %v1133 = vpack.c.bf16 %v1128, %v1127
      %v1134 = vpack.c.bf16 %v1130, %v1129
      %s1135 = scalar_lea.vmem %s1, 32
      %v1136 = vld [vmem:[%s1135] sm:$0xf]
      %v1138 = vsel %vm291, %v1131, 0
      %v1141 = vsel %vm291, %v1132, 0
      %v1144 = vsel %vm291, %v1133, 0
      %v1147 = vsel %vm291, %v1134, 0
      %v1150 = vsel %vm361, %v1136, 0
      %1152 = vmatprep.subr.bf16.mxu0 0
      %1153 = vmatpush1.bf16.msra.mxu0 %v1150
      %1154 = vmatprep.subr.bf16.mxu0 0
      %1155 = vmatpush1.bf16.msra.mxu0 0
      %1156 = vmatprep.subr.bf16.mxu0 0
      %1157 = vmatpush1.bf16.msra.mxu0 0
      %1158 = vmatprep.subr.bf16.mxu0 0
      %1159 = vmatpush1.bf16.msra.mxu0 0
      %1160 = vmatprep.subr.bf16.mxu0 0
      %1161 = vmatpush1.bf16.msra.mxu0 0
      %1162 = vmatprep.subr.bf16.mxu0 0
      %1163 = vmatpush1.bf16.msra.mxu0 0
      %1164 = vmatprep.subr.bf16.mxu0 0
      %1165 = vmatpush1.bf16.msra.mxu0 0
      %1166 = vmatprep.subr.bf16.mxu0 0
      %1167 = vmatpush1.bf16.msra.mxu0 0
      %1168 = vmatprep.subr.bf16.mxu0 0
      %1169 = vmatpush1.bf16.msra.mxu0 0
      %1170 = vmatprep.subr.bf16.mxu0 0
      %1171 = vmatpush1.bf16.msra.mxu0 0
      %1172 = vmatprep.subr.bf16.mxu0 0
      %1173 = vmatpush1.bf16.msra.mxu0 0
      %1174 = vmatprep.subr.bf16.mxu0 0
      %1175 = vmatpush1.bf16.msra.mxu0 0
      %1176 = vmatprep.subr.bf16.mxu0 0
      %1177 = vmatpush1.bf16.msra.mxu0 0
      %1178 = vmatprep.subr.bf16.mxu0 0
      %1179 = vmatpush1.bf16.msra.mxu0 0
      %1180 = vmatprep.subr.bf16.mxu0 0
      %1181 = vmatpush1.bf16.msra.mxu0 0
      %1182 = vmatprep.subr.bf16.mxu0 0
      %1183 = vmatpush1.bf16.msra.mxu0 0
      %1184 = vmatprep.mubr.bf16.mxu0 0
      %1185 = vmatmul.mubr.bf16.gmra.mrb[0].mxu0 %v1138
      %v1186 = vpop.f32.mrb[0].mxu0
      %v1187 = vadd.f32 0.0, %v1186
      %v1188 = vpop.f32.mrb[0].mxu0
      %v1189 = vpop.f32.mrb[0].mxu0
      %v1190 = vadd.f32 0.0, %v1189
      %v1191 = vpop.f32.mrb[0].mxu0
      %1192 = vmatprep.mubr.bf16.mxu0 0
      %1193 = vmatmul.mubr.bf16.gmra.mrb[0].mxu0 %v1141
      %v1194 = vpop.f32.mrb[0].mxu0
      %v1195 = vadd.f32 0.0, %v1194
      %v1196 = vpop.f32.mrb[0].mxu0
      %v1197 = vpop.f32.mrb[0].mxu0
      %v1198 = vadd.f32 0.0, %v1197
      %v1199 = vpop.f32.mrb[0].mxu0
      %1200 = vmatprep.mubr.bf16.mxu0 0
      %1201 = vmatmul.mubr.bf16.gmra.mrb[0].mxu0 %v1144
      %v1202 = vpop.f32.mrb[0].mxu0
      %v1203 = vadd.f32 0.0, %v1202
      %v1204 = vpop.f32.mrb[0].mxu0
      %v1205 = vpop.f32.mrb[0].mxu0
      %v1206 = vadd.f32 0.0, %v1205
      %v1207 = vpop.f32.mrb[0].mxu0
      %1208 = vmatprep.mubr.bf16.mxu0 0
      %1209 = vmatmul.mubr.bf16.gmra.mrb[0].mxu0 %v1147
      %v1210 = vpop.f32.mrb[0].mxu0
      %v1211 = vadd.f32 0.0, %v1210
      %v1212 = vpop.f32.mrb[0].mxu0
      %v1213 = vpop.f32.mrb[0].mxu0
      %v1214 = vadd.f32 0.0, %v1213
      %v1215 = vpop.f32.mrb[0].mxu0
      %1216 = vdwg.mxu0
      %v1217 = vadd.f32 %v1115, %v1187
      %v1218 = vadd.f32 %v1116, %v1190
      %v1219 = vadd.f32 %v1117, %v1195
      %v1220 = vadd.f32 %v1118, %v1198
      %v1221 = vadd.f32 %v1119, %v1203
      %v1222 = vadd.f32 %v1120, %v1206
      %v1223 = vadd.f32 %v1121, %v1211
      %v1224 = vadd.f32 %v1122, %v1214
      %1225 = vst.msk [vmem:[%s231] sm:$0xff] %vm291, %v1217
      %1226 = vst.msk [vmem:[%s231 + $0x8] sm:$0xff] %vm291, %v1218
      %1227 = vst.msk [vmem:[%s231 + $0x10] sm:$0xff] %vm291, %v1219
      %1228 = vst.msk [vmem:[%s231 + $0x18] sm:$0xff] %vm291, %v1220
      %1229 = vst.msk [vmem:[%s231 + $0x20] sm:$0xff] %vm291, %v1221
      %1230 = vst.msk [vmem:[%s231 + $0x28] sm:$0xff] %vm291, %v1222
      %1231 = vst.msk [vmem:[%s231 + $0x30] sm:$0xff] %vm291, %v1223
      %1232 = vst.msk [vmem:[%s231 + $0x38] sm:$0xff] %vm291, %v1224
      %v1233 = vsel %vm291, %v1217, 0.0
      %v1234 = vsel %vm291, %v1218, 0.0
      %v1235 = vadd.f32 %v1233, %v1234
      %v1236 = vsel %vm291, %v1219, 0.0
      %v1237 = vadd.f32 %v1235, %v1236
      %v1238 = vsel %vm291, %v1220, 0.0
      %v1239 = vadd.f32 %v1237, %v1238
      %v1240 = vsel %vm291, %v1221, 0.0
      %v1241 = vadd.f32 %v1239, %v1240
      %v1242 = vsel %vm291, %v1222, 0.0
      %v1243 = vadd.f32 %v1241, %v1242
      %v1244 = vsel %vm291, %v1223, 0.0
      %v1245 = vadd.f32 %v1243, %v1244
      %v1246 = vsel %vm291, %v1224, 0.0
      %v1247 = vadd.f32 %v1245, %v1246
      %v1248 = vrot.slane %v1247, 4
      %v1249 = vadd.f32 %v1247, %v1248
      %v1250 = vrot.slane %v1249, 2
      %v1251 = vadd.f32 %v1249, %v1250
      %v1252 = vrot.slane %v1251, 1
      %v1253 = vadd.f32 %v1251, %v1252
      %vm1254 = vcmask 57344
      %1255 = vst.msk [vmem:[%s235] sm:$0x1] %vm1254, %v1253
      %v1256 = vmul.f32 %v1217, %v1217
      %v1257 = vmul.f32 %v1218, %v1218
      %v1258 = vmul.f32 %v1219, %v1219
      %v1259 = vmul.f32 %v1220, %v1220
      %v1260 = vmul.f32 %v1221, %v1221
      %v1261 = vmul.f32 %v1222, %v1222
      %v1262 = vmul.f32 %v1223, %v1223
      %v1263 = vmul.f32 %v1224, %v1224
      %v1264 = vsel %vm291, %v1256, 0.0
      %v1265 = vsel %vm291, %v1257, 0.0
      %v1266 = vadd.f32 %v1264, %v1265
      %v1267 = vsel %vm291, %v1258, 0.0
      %v1268 = vadd.f32 %v1266, %v1267
      %v1269 = vsel %vm291, %v1259, 0.0
      %v1270 = vadd.f32 %v1268, %v1269
      %v1271 = vsel %vm291, %v1260, 0.0
      %v1272 = vadd.f32 %v1270, %v1271
      %v1273 = vsel %vm291, %v1261, 0.0
      %v1274 = vadd.f32 %v1272, %v1273
      %v1275 = vsel %vm291, %v1262, 0.0
      %v1276 = vadd.f32 %v1274, %v1275
      %v1277 = vsel %vm291, %v1263, 0.0
      %v1278 = vadd.f32 %v1276, %v1277
      %v1279 = vrot.slane %v1278, 4
      %v1280 = vadd.f32 %v1278, %v1279
      %v1281 = vrot.slane %v1280, 2
      %v1282 = vadd.f32 %v1280, %v1281
      %v1283 = vrot.slane %v1282, 1
      %v1284 = vadd.f32 %v1282, %v1283
      %1285 = vst.msk [vmem:[%s235 + $0x1] sm:$0x1] %vm1254, %v1284
      %p1286 = scmp.lt.s32.totalorder %s17, 1
      %s1287 = scalar_select %p1286, %s17, 1
      %s1288 = smul.addr %s1287, 8
      %s1289 = smul.addr %s1288, 8
      %s1290 = scalar_lea.vmem %s4, %s1289
      %p1291 = scmp.lt.s32.totalorder %s17, 1
      %s1292 = scalar_select %p1291, %s17, 1
      %s1293 = smul.addr %s1292, 2
      %s1294 = scalar_lea.vmem %s5, %s1293
      // Predicated region
      $region37: #{res_block_forward.4} parent=35 // pred_check
        %p1295 = pneg %p124
      $region38: #{res_block_forward.4} parent=35 // pred_check_branch
        %1297 = sbr.rel (%p1295) target = $region40
      $region39: #{res_block_forward.4} parent=35 // pred_region
        _
      $region40: #{res_block_forward.4} parent=35 // pred_fallthru
        _
      // Predicated region
      $region41: #{res_block_forward.4} parent=35 // pred_check
        %p1298 = pneg %p150
      $region42: #{res_block_forward.4} parent=35 // pred_check_branch
        %1300 = sbr.rel (%p1298) target = $region44
      $region43: #{res_block_forward.4} parent=35 // pred_region
        _
      $region44: #{res_block_forward.4} parent=35 // pred_fallthru
        _
    $region36: #{res_block_forward.4} parent=5 // pred_fallthru
      _
    %p1301 = scmp.le.s32.totalorder 2, %s12
    // Predicated region
    $region45: #{res_block_forward.4} parent=5 // pred_check
      %p1302 = pneg %p1301
    $region46: #{res_block_forward.4} parent=5 // pred_check_branch
      %1304 = sbr.rel (%p1302) target = $region48
    $region47: #{res_block_forward.4} parent=5 // pred_region
      %s1305 = ssub.s32 %s12, 2
      // Predicated region
      $region49: #{res_block_forward.4} parent=47 // pred_check
        %p1306 = pneg %p130
      $region50: #{res_block_forward.4} parent=47 // pred_check_branch
        %1308 = sbr.rel (%p1306) target = $region52
      $region51: #{res_block_forward.4} parent=47 // pred_region
        %p1309 = scmp.lt.s32.totalorder %s18, 1
        %s1310 = scalar_select %p1309, %s18, 1
        %s1311 = smul.addr %s1310, 8
        %s1312 = smul.addr %s1311, 8
        %s1313 = scalar_lea.vmem %s4, %s1312
      $region52: #{res_block_forward.4} parent=47 // pred_fallthru
        _
      // Predicated region
      $region53: #{res_block_forward.4} parent=47 // pred_check
        %p1314 = pneg %p156
      $region54: #{res_block_forward.4} parent=47 // pred_check_branch
        %1316 = sbr.rel (%p1314) target = $region56
      $region55: #{res_block_forward.4} parent=47 // pred_region
        %p1317 = scmp.lt.s32.totalorder %s18, 1
        %s1318 = scalar_select %p1317, %s18, 1
        %s1319 = smul.addr %s1318, 2
        %s1320 = scalar_lea.vmem %s5, %s1319
      $region56: #{res_block_forward.4} parent=47 // pred_fallthru
        _
    $region48: #{res_block_forward.4} parent=5 // pred_fallthru
      _
  $region6: #{res_block_forward.4} parent=0 // loop_footer
    %s16 = sadd.s32 1, %s12
  $region7: #{res_block_forward.4} parent=0 // loop_footer_branch
    %11 = sbr.rel target = $region3
  $region8: #{res_block_forward.4} parent=0 // loop_exit
    _

// kernel: res_block_forward.3
$region0: #{res_block_forward.3}
  #allocation0 [shape = 'u32[]', space=smem, size = 0x4, offset = 0x4, fixed_abs, tag = 'smem constant byte address 0x4 - core index']
  #allocation1 [shape = 'u32[144,128]{1,0:T(1,128)}', space=vmem, size = 0x12000, scoped, tag = 'internal scratch']
  %s0 = inlined_call_operand.vmem [shape: bf16[8,9,9,4], index: 0, kind: input, shape index: {}]
  %s1 = inlined_call_operand.vmem [shape: bf16[9,4,8], index: 1, kind: input, shape index: {}]
  %s2 = inlined_call_operand.vmem [shape: bf16[4,8], index: 2, kind: input, shape index: {}]
  %s3 = inlined_call_operand.vmem [shape: bf16[2,8,8,8], index: 3, kind: output, shape index: {0}]
  %s4 = inlined_call_operand.vmem [shape: f32[2,2,8], index: 4, kind: output, shape index: {1}]
  %s5 = inlined_call_operand.vmem [shape: f32[2,8,8,8], index: 5, kind: output, shape index: {2}]
  %s6 = inlined_call_operand.vmem [shape: f32[2,2,8], index: 6, kind: output, shape index: {3}]
  %7 = xla_tuple %s3, %s4, %s5, %s6
  %s8 = sld [smem:[#allocation0]]
  $region69: #{res_block_forward.3} parent=0
    _
  %s10 = ssub.s32 1, %s8
  %s11 = scalar_select 0, %s10, %s8
  loop: start=0, step=1, limit=4
  $region2: #{res_block_forward.3} parent=0 // loop_pre_header
    _
  $region3: #{res_block_forward.3} parent=0 // loop_header
    %s13 = sphi 0, %s17
    %p14 = scmp.ge.s32.totalorder %s13, 4
    %s23 = sphi 0, %s25
    %s26 = sphi 0, %s23
    %s27 = sphi 0, %s26
    %s43 = sphi 0, %s27
    %s47 = sphi 0, %s47
    %s49 = sphi 0, %s47
    %s50 = sphi 0, %s49
    %s64 = sphi 0, %s50
    %s68 = sphi 0, %s68
    %s70 = sphi 0, %s68
    %s71 = sphi 0, %s70
    %s85 = sphi 0, %s71
    %s91 = sphi 0, %s93
    %s94 = sphi 0, %s91
    %s95 = sphi 0, %s94
    %s111 = sphi 0, %s95
    %s117 = sphi 0, %s119
    %s120 = sphi 0, %s117
    %s121 = sphi 0, %s120
    %s137 = sphi 0, %s121
    %s143 = sphi 0, %s145
    %s146 = sphi 0, %s143
    %s147 = sphi 0, %s146
    %s163 = sphi 0, %s147
    %s169 = sphi 0, %s171
    %s172 = sphi 0, %s169
    %s173 = sphi 0, %s172
    %s189 = sphi 0, %s173
  $region4: #{res_block_forward.3} parent=0 // loop_header_branch
    %16 = sbr.rel (%p14) target = $region8
  $region5: #{res_block_forward.3} parent=0 // loop_body
    %s18 = ssub.s32 %s13, 1
    %s19 = ssub.s32 %s13, 2
    %s20 = sadd.s32 %s13, 1
    %s21 = ssub.s32 %s13, %s20
    %p22 = scmp.eq.s32.totalorder %s21, 0
    %s24 = sadd.s32 %s23, 1
    %s25 = scalar_select %p22, %s23, %s24
    %p28 = pneg %p22
    %p29 = scmp.eq.s32.totalorder %s13, 1
    %p30 = por %p28, %p29
    %p31 = scmp.ne.s32.totalorder %s23, %s26
    %p32 = scmp.eq.s32.totalorder %s13, 0
    %p33 = por %p31, %p32
    %p34 = scmp.ne.s32.totalorder %s23, %s26
    %p35 = scmp.eq.s32.totalorder %s18, 1
    %p36 = por %p34, %p35
    %p37 = scmp.ne.s32.totalorder %s26, %s27
    %p38 = scmp.eq.s32.totalorder %s18, 0
    %p39 = por %p37, %p38
    %p40 = scmp.ne.s32.totalorder %s26, %s27
    %p41 = scmp.eq.s32.totalorder %s19, 1
    %p42 = por %p40, %p41
    %p44 = scmp.ne.s32.totalorder %s27, %s43
    %p45 = scmp.eq.s32.totalorder %s19, 0
    %p46 = por %p44, %p45
    %s48 = sadd.s32 %s47, 1
    %p51 = scmp.eq.s32.totalorder %s13, 1
    %p52 = scmp.ne.s32.totalorder %s47, %s49
    %p53 = scmp.eq.s32.totalorder %s13, 0
    %p54 = por %p52, %p53
    %p55 = scmp.ne.s32.totalorder %s47, %s49
    %p56 = scmp.eq.s32.totalorder %s18, 1
    %p57 = por %p55, %p56
    %p58 = scmp.ne.s32.totalorder %s49, %s50
    %p59 = scmp.eq.s32.totalorder %s18, 0
    %p60 = por %p58, %p59
    %p61 = scmp.ne.s32.totalorder %s49, %s50
    %p62 = scmp.eq.s32.totalorder %s19, 1
    %p63 = por %p61, %p62
    %p65 = scmp.ne.s32.totalorder %s50, %s64
    %p66 = scmp.eq.s32.totalorder %s19, 0
    %p67 = por %p65, %p66
    %s69 = sadd.s32 %s68, 1
    %p72 = scmp.eq.s32.totalorder %s13, 1
    %p73 = scmp.ne.s32.totalorder %s68, %s70
    %p74 = scmp.eq.s32.totalorder %s13, 0
    %p75 = por %p73, %p74
    %p76 = scmp.ne.s32.totalorder %s68, %s70
    %p77 = scmp.eq.s32.totalorder %s18, 1
    %p78 = por %p76, %p77
    %p79 = scmp.ne.s32.totalorder %s70, %s71
    %p80 = scmp.eq.s32.totalorder %s18, 0
    %p81 = por %p79, %p80
    %p82 = scmp.ne.s32.totalorder %s70, %s71
    %p83 = scmp.eq.s32.totalorder %s19, 1
    %p84 = por %p82, %p83
    %p86 = scmp.ne.s32.totalorder %s71, %s85
    %p87 = scmp.eq.s32.totalorder %s19, 0
    %p88 = por %p86, %p87
    %s89 = ssub.s32 %s13, %s20
    %p90 = scmp.eq.s32.totalorder %s89, 0
    %s92 = sadd.s32 %s91, 1
    %s93 = scalar_select %p90, %s91, %s92
    %p96 = pneg %p90
    %p97 = scmp.eq.s32.totalorder %s13, 1
    %p98 = por %p96, %p97
    %p99 = scmp.ne.s32.totalorder %s91, %s94
    %p100 = scmp.eq.s32.totalorder %s13, 0
    %p101 = por %p99, %p100
    %p102 = scmp.ne.s32.totalorder %s91, %s94
    %p103 = scmp.eq.s32.totalorder %s18, 1
    %p104 = por %p102, %p103
    %p105 = scmp.ne.s32.totalorder %s94, %s95
    %p106 = scmp.eq.s32.totalorder %s18, 0
    %p107 = por %p105, %p106
    %p108 = scmp.ne.s32.totalorder %s94, %s95
    %p109 = scmp.eq.s32.totalorder %s19, 1
    %p110 = por %p108, %p109
    %p112 = scmp.ne.s32.totalorder %s95, %s111
    %p113 = scmp.eq.s32.totalorder %s19, 0
    %p114 = por %p112, %p113
    %s115 = ssub.s32 %s13, %s20
    %p116 = scmp.eq.s32.totalorder %s115, 0
    %s118 = sadd.s32 %s117, 1
    %s119 = scalar_select %p116, %s117, %s118
    %p122 = pneg %p116
    %p123 = scmp.eq.s32.totalorder %s13, 1
    %p124 = por %p122, %p123
    %p125 = scmp.ne.s32.totalorder %s117, %s120
    %p126 = scmp.eq.s32.totalorder %s13, 0
    %p127 = por %p125, %p126
    %p128 = scmp.ne.s32.totalorder %s117, %s120
    %p129 = scmp.eq.s32.totalorder %s18, 1
    %p130 = por %p128, %p129
    %p131 = scmp.ne.s32.totalorder %s120, %s121
    %p132 = scmp.eq.s32.totalorder %s18, 0
    %p133 = por %p131, %p132
    %p134 = scmp.ne.s32.totalorder %s120, %s121
    %p135 = scmp.eq.s32.totalorder %s19, 1
    %p136 = por %p134, %p135
    %p138 = scmp.ne.s32.totalorder %s121, %s137
    %p139 = scmp.eq.s32.totalorder %s19, 0
    %p140 = por %p138, %p139
    %s141 = ssub.s32 %s13, %s20
    %p142 = scmp.eq.s32.totalorder %s141, 0
    %s144 = sadd.s32 %s143, 1
    %s145 = scalar_select %p142, %s143, %s144
    %p148 = pneg %p142
    %p149 = scmp.eq.s32.totalorder %s13, 1
    %p150 = por %p148, %p149
    %p151 = scmp.ne.s32.totalorder %s143, %s146
    %p152 = scmp.eq.s32.totalorder %s13, 0
    %p153 = por %p151, %p152
    %p154 = scmp.ne.s32.totalorder %s143, %s146
    %p155 = scmp.eq.s32.totalorder %s18, 1
    %p156 = por %p154, %p155
    %p157 = scmp.ne.s32.totalorder %s146, %s147
    %p158 = scmp.eq.s32.totalorder %s18, 0
    %p159 = por %p157, %p158
    %p160 = scmp.ne.s32.totalorder %s146, %s147
    %p161 = scmp.eq.s32.totalorder %s19, 1
    %p162 = por %p160, %p161
    %p164 = scmp.ne.s32.totalorder %s147, %s163
    %p165 = scmp.eq.s32.totalorder %s19, 0
    %p166 = por %p164, %p165
    %s167 = ssub.s32 %s13, %s20
    %p168 = scmp.eq.s32.totalorder %s167, 0
    %s170 = sadd.s32 %s169, 1
    %s171 = scalar_select %p168, %s169, %s170
    %p174 = pneg %p168
    %p175 = scmp.eq.s32.totalorder %s13, 1
    %p176 = por %p174, %p175
    %p177 = scmp.ne.s32.totalorder %s169, %s172
    %p178 = scmp.eq.s32.totalorder %s13, 0
    %p179 = por %p177, %p178
    %p180 = scmp.ne.s32.totalorder %s169, %s172
    %p181 = scmp.eq.s32.totalorder %s18, 1
    %p182 = por %p180, %p181
    %p183 = scmp.ne.s32.totalorder %s172, %s173
    %p184 = scmp.eq.s32.totalorder %s18, 0
    %p185 = por %p183, %p184
    %p186 = scmp.ne.s32.totalorder %s172, %s173
    %p187 = scmp.eq.s32.totalorder %s19, 1
    %p188 = por %p186, %p187
    %p190 = scmp.ne.s32.totalorder %s173, %s189
    %p191 = scmp.eq.s32.totalorder %s19, 0
    %p192 = por %p190, %p191
    %p193 = scmp.le.s32.totalorder 1, %s13
    %p194 = scmp.lt.s32.totalorder %s13, 3
    %p195 = pnand %p193, %p194
    %p196 = pneg %p195
    // Predicated region
    $region9: #{res_block_forward.3} parent=5 // pred_check
      _
    $region10: #{res_block_forward.3} parent=5 // pred_check_branch
      %198 = sbr.rel (%p195) target = $region12
    $region11: #{res_block_forward.3} parent=5 // pred_region
      %s199 = ssub.s32 %s13, 1
      // Predicated region
      $region13: #{res_block_forward.3} parent=11 // pred_check
        %p200 = pneg %p60
      $region14: #{res_block_forward.3} parent=11 // pred_check_branch
        %202 = sbr.rel (%p200) target = $region16
      $region15: #{res_block_forward.3} parent=11 // pred_region
        _
      $region16: #{res_block_forward.3} parent=11 // pred_fallthru
        _
      // Predicated region
      $region17: #{res_block_forward.3} parent=11 // pred_check
        %p203 = pneg %p81
      $region18: #{res_block_forward.3} parent=11 // pred_check_branch
        %205 = sbr.rel (%p203) target = $region20
      $region19: #{res_block_forward.3} parent=11 // pred_region
        _
      $region20: #{res_block_forward.3} parent=11 // pred_fallthru
        _
    $region12: #{res_block_forward.3} parent=5 // pred_fallthru
      _
    %p206 = scmp.lt.s32.totalorder %s13, 2
    // Predicated region
    $region21: #{res_block_forward.3} parent=5 // pred_check
      %p207 = pneg %p206
    $region22: #{res_block_forward.3} parent=5 // pred_check_branch
      %209 = sbr.rel (%p207) target = $region24
    $region23: #{res_block_forward.3} parent=5 // pred_region
      // Predicated region
      $region25: #{res_block_forward.3} parent=23 // pred_check
        %p210 = pneg %p33
      $region26: #{res_block_forward.3} parent=23 // pred_check_branch
        %212 = sbr.rel (%p210) target = $region28
      $region27: #{res_block_forward.3} parent=23 // pred_region
        %s213 = smul.u32 4, %s13
        %p214 = scmp.lt.s32.totalorder %s213, 7
        %s215 = scalar_select %p214, %s213, 7
        %s216 = smul.addr %s215, 18
        %s217 = smul.addr %s216, 4
        %s218 = scalar_lea.vmem %s0, %s217
        %s219 = smul.u32 4, %s13
      $region28: #{res_block_forward.3} parent=23 // pred_fallthru
        _
    $region24: #{res_block_forward.3} parent=5 // pred_fallthru
      _
    %p220 = scmp.le.s32.totalorder 1, %s13
    %p221 = scmp.lt.s32.totalorder %s13, 3
    %p222 = pnand %p220, %p221
    %p223 = pneg %p222
    // Predicated region
    $region29: #{res_block_forward.3} parent=5 // pred_check
      _
    $region30: #{res_block_forward.3} parent=5 // pred_check_branch
      %225 = sbr.rel (%p222) target = $region32
    $region31: #{res_block_forward.3} parent=5 // pred_region
      %s226 = ssub.s32 %s13, 1
      %s227 = smul.u32 4, %s18
      %p228 = scmp.lt.s32.totalorder %s227, 7
      %s229 = scalar_select %p228, %s227, 7
      %s230 = smul.addr %s229, 18
      %s231 = smul.addr %s230, 4
      %s232 = scalar_lea.vmem %s0, %s231
      %p233 = pneg %p39
      %p234 = pneg %p36
      %p235 = pneg %p60
      %p236 = pneg %p57
      %p237 = pneg %p81
      %p238 = pneg %p78
      %p239 = pneg %p107
      %p240 = pneg %p104
      %p241 = scmp.lt.s32.totalorder %s18, 1
      %s242 = scalar_select %p241, %s18, 1
      %s243 = smul.addr %s242, 8
      %s244 = smul.addr %s243, 4
      %s245 = scalar_lea.vmem %s3, %s244
      %p246 = pneg %p133
      %p247 = pneg %p130
      %p248 = scmp.lt.s32.totalorder %s18, 1
      %s249 = scalar_select %p248, %s18, 1
      %s250 = smul.addr %s249, 2
      %s251 = scalar_lea.vmem %s4, %s250
      %p252 = pneg %p159
      %p253 = pneg %p156
      %p254 = scmp.lt.s32.totalorder %s18, 1
      %s255 = scalar_select %p254, %s18, 1
      %s256 = smul.addr %s255, 8
      %s257 = smul.addr %s256, 8
      %s258 = scalar_lea.vmem %s5, %s257
      %p259 = pneg %p185
      %p260 = pneg %p182
      %p261 = scmp.lt.s32.totalorder %s18, 1
      %s262 = scalar_select %p261, %s18, 1
      %s263 = smul.addr %s262, 2
      %s264 = scalar_lea.vmem %s6, %s263
      %s265 = smul.u32 4, %s18
      %p266 = scmp.lt.s32.totalorder %s265, 7
      %s267 = scalar_select %p266, %s265, 7
      %s268 = smul.addr %s267, 18
      %s269 = smul.addr %s268, 4
      %s270 = scalar_lea.vmem %s0, %s269
      %s271 = smul.u32 4, %s18
      %p272 = scmp.lt.s32.totalorder %s18, 1
      %s273 = scalar_select %p272, %s18, 1
      %s274 = smul.addr %s273, 8
      %s275 = smul.addr %s274, 4
      %s276 = scalar_lea.vmem %s3, %s275
      %p277 = scmp.lt.s32.totalorder %s18, 1
      %s278 = scalar_select %p277, %s18, 1
      %s279 = smul.addr %s278, 2
      %s280 = scalar_lea.vmem %s4, %s279
      %p281 = scmp.lt.s32.totalorder %s18, 1
      %s282 = scalar_select %p281, %s18, 1
      %s283 = smul.addr %s282, 8
      %s284 = smul.addr %s283, 8
      %s285 = scalar_lea.vmem %s5, %s284
      %p286 = scmp.lt.s32.totalorder %s18, 1
      %s287 = scalar_select %p286, %s18, 1
      %s288 = smul.addr %s287, 2
      %s289 = scalar_lea.vmem %s6, %s288
      %v291 = vld [vmem:[%s270] sm:$0xf]
      %v292 = vld [vmem:[%s270 + $0x8] sm:$0xf]
      %v293 = vld [vmem:[%s270 + $0x10] sm:$0xf]
      %v294 = vld [vmem:[%s270 + $0x18] sm:$0xf]
      %v295 = vld [vmem:[%s270 + $0x20] sm:$0xf]
      %v296 = vld [vmem:[%s270 + $0x28] sm:$0xf]
      %v297 = vld [vmem:[%s270 + $0x30] sm:$0xf]
      %v298 = vld [vmem:[%s270 + $0x38] sm:$0xf]
      %v299 = vld [vmem:[%s1] sm:$0x3]
      %s300 = scalar_lea.vmem %s270, 72
      %v301 = vld [vmem:[%s300] sm:$0xf]
      %v302 = vld [vmem:[%s300 + $0x8] sm:$0xf]
      %v303 = vld [vmem:[%s300 + $0x10] sm:$0xf]
      %v304 = vld [vmem:[%s300 + $0x18] sm:$0xf]
      %v305 = vld [vmem:[%s300 + $0x20] sm:$0xf]
      %v306 = vld [vmem:[%s300 + $0x28] sm:$0xf]
      %v307 = vld [vmem:[%s300 + $0x30] sm:$0xf]
      %v308 = vld [vmem:[%s300 + $0x38] sm:$0xf]
      %s309 = scalar_lea.vmem %s1, 2
      %v310 = vld [vmem:[%s309] sm:$0x3]
      %v319 = vunpack.c.l.b16 %v301
      %v320 = vunpack.c.l.b16 %v302
      %v321 = vunpack.c.l.b16 %v303
      %v322 = vunpack.c.l.b16 %v304
      %v323 = vunpack.c.l.b16 %v305
      %v324 = vunpack.c.l.b16 %v306
      %v325 = vunpack.c.l.b16 %v307
      %v326 = vunpack.c.l.b16 %v308
      %v327 = vpack.c.b16 %v320, %v319
      %v328 = vpack.c.b16 %v322, %v321
      %v329 = vpack.c.b16 %v324, %v323
      %v330 = vpack.c.b16 %v326, %v325
      %vm331 = vcmask 31744
      %v333 = vsel %vm331, %v327, 0
      %v336 = vsel %vm331, %v328, 0
      %v339 = vsel %vm331, %v329, 0
      %v342 = vsel %vm331, %v330, 0
      %vm344 = vcmask 1041408
      %v346 = vsel %vm344, %v310, 0
      %348 = vmatprep.subr.bf16.mxu0 0
      %349 = vmatpush1.bf16.msra.mxu0 %v346
      %350 = vmatprep.subr.bf16.mxu0 0
      %351 = vmatpush1.bf16.msra.mxu0 0
      %352 = vmatprep.subr.bf16.mxu0 0
      %353 = vmatpush1.bf16.msra.mxu0 0
      %354 = vmatprep.subr.bf16.mxu0 0
      %355 = vmatpush1.bf16.msra.mxu0 0
      %356 = vmatprep.subr.bf16.mxu0 0
      %357 = vmatpush1.bf16.msra.mxu0 0
      %358 = vmatprep.subr.bf16.mxu0 0
      %359 = vmatpush1.bf16.msra.mxu0 0
      %360 = vmatprep.subr.bf16.mxu0 0
      %361 = vmatpush1.bf16.msra.mxu0 0
      %362 = vmatprep.subr.bf16.mxu0 0
      %363 = vmatpush1.bf16.msra.mxu0 0
      %364 = vmatprep.subr.bf16.mxu0 0
      %365 = vmatpush1.bf16.msra.mxu0 0
      %366 = vmatprep.subr.bf16.mxu0 0
      %367 = vmatpush1.bf16.msra.mxu0 0
      %368 = vmatprep.subr.bf16.mxu0 0
      %369 = vmatpush1.bf16.msra.mxu0 0
      %370 = vmatprep.subr.bf16.mxu0 0
      %371 = vmatpush1.bf16.msra.mxu0 0
      %372 = vmatprep.subr.bf16.mxu0 0
      %373 = vmatpush1.bf16.msra.mxu0 0
      %374 = vmatprep.subr.bf16.mxu0 0
      %375 = vmatpush1.bf16.msra.mxu0 0
      %376 = vmatprep.subr.bf16.mxu0 0
      %377 = vmatpush1.bf16.msra.mxu0 0
      %378 = vmatprep.subr.bf16.mxu0 0
      %379 = vmatpush1.bf16.msra.mxu0 0
      %380 = vmatprep.mubr.bf16.mxu0 0
      %381 = vmatmul.mubr.bf16.gmra.mrb[0].mxu0 %v333
      %v382 = vpop.f32.mrb[0].mxu0
      %v383 = vadd.f32 0.0, %v382
      %v384 = vpop.f32.mrb[0].mxu0
      %v385 = vpop.f32.mrb[0].mxu0
      %v386 = vadd.f32 0.0, %v385
      %v387 = vpop.f32.mrb[0].mxu0
      %388 = vmatprep.mubr.bf16.mxu0 0
      %389 = vmatmul.mubr.bf16.gmra.mrb[0].mxu0 %v336
      %v390 = vpop.f32.mrb[0].mxu0
      %v391 = vadd.f32 0.0, %v390
      %v392 = vpop.f32.mrb[0].mxu0
      %v393 = vpop.f32.mrb[0].mxu0
      %v394 = vadd.f32 0.0, %v393
      %v395 = vpop.f32.mrb[0].mxu0
      %396 = vmatprep.mubr.bf16.mxu0 0
      %397 = vmatmul.mubr.bf16.gmra.mrb[0].mxu0 %v339
      %v398 = vpop.f32.mrb[0].mxu0
      %v399 = vadd.f32 0.0, %v398
      %v400 = vpop.f32.mrb[0].mxu0
      %v401 = vpop.f32.mrb[0].mxu0
      %v402 = vadd.f32 0.0, %v401
      %v403 = vpop.f32.mrb[0].mxu0
      %404 = vmatprep.mubr.bf16.mxu0 0
      %405 = vmatmul.mubr.bf16.gmra.mrb[0].mxu0 %v342
      %v406 = vpop.f32.mrb[0].mxu0
      %v407 = vadd.f32 0.0, %v406
      %v408 = vpop.f32.mrb[0].mxu0
      %v409 = vpop.f32.mrb[0].mxu0
      %v410 = vadd.f32 0.0, %v409
      %v411 = vpop.f32.mrb[0].mxu0
      %412 = vdwg.mxu0
      %v421 = vunpack.c.l.b16 %v291
      %v422 = vunpack.c.l.b16 %v292
      %v423 = vunpack.c.l.b16 %v293
      %v424 = vunpack.c.l.b16 %v294
      %v425 = vunpack.c.l.b16 %v295
      %v426 = vunpack.c.l.b16 %v296
      %v427 = vunpack.c.l.b16 %v297
      %v428 = vunpack.c.l.b16 %v298
      %v429 = vpack.c.b16 %v422, %v421
      %v430 = vpack.c.b16 %v424, %v423
      %v431 = vpack.c.b16 %v426, %v425
      %v432 = vpack.c.b16 %v428, %v427
      %v434 = vsel %vm331, %v429, 0
      %v437 = vsel %vm331, %v430, 0
      %v440 = vsel %vm331, %v431, 0
      %v443 = vsel %vm331, %v432, 0
      %v446 = vsel %vm344, %v299, 0
      %448 = vmatprep.subr.bf16.mxu0 0
      %449 = vmatpush1.bf16.msra.mxu0 %v446
      %450 = vmatprep.subr.bf16.mxu0 0
      %451 = vmatpush1.bf16.msra.mxu0 0
      %452 = vmatprep.subr.bf16.mxu0 0
      %453 = vmatpush1.bf16.msra.mxu0 0
      %454 = vmatprep.subr.bf16.mxu0 0
      %455 = vmatpush1.bf16.msra.mxu0 0
      %456 = vmatprep.subr.bf16.mxu0 0
      %457 = vmatpush1.bf16.msra.mxu0 0
      %458 = vmatprep.subr.bf16.mxu0 0
      %459 = vmatpush1.bf16.msra.mxu0 0
      %460 = vmatprep.subr.bf16.mxu0 0
      %461 = vmatpush1.bf16.msra.mxu0 0
      %462 = vmatprep.subr.bf16.mxu0 0
      %463 = vmatpush1.bf16.msra.mxu0 0
      %464 = vmatprep.subr.bf16.mxu0 0
      %465 = vmatpush1.bf16.msra.mxu0 0
      %466 = vmatprep.subr.bf16.mxu0 0
      %467 = vmatpush1.bf16.msra.mxu0 0
      %468 = vmatprep.subr.bf16.mxu0 0
      %469 = vmatpush1.bf16.msra.mxu0 0
      %470 = vmatprep.subr.bf16.mxu0 0
      %471 = vmatpush1.bf16.msra.mxu0 0
      %472 = vmatprep.subr.bf16.mxu0 0
      %473 = vmatpush1.bf16.msra.mxu0 0
      %474 = vmatprep.subr.bf16.mxu0 0
      %475 = vmatpush1.bf16.msra.mxu0 0
      %476 = vmatprep.subr.bf16.mxu0 0
      %477 = vmatpush1.bf16.msra.mxu0 0
      %478 = vmatprep.subr.bf16.mxu0 0
      %479 = vmatpush1.bf16.msra.mxu0 0
      %480 = vmatprep.mubr.bf16.mxu0 0
      %481 = vmatmul.mubr.bf16.gmra.mrb[0].mxu0 %v434
      %v482 = vpop.f32.mrb[0].mxu0
      %v483 = vadd.f32 %v383, %v482
      %v484 = vpop.f32.mrb[0].mxu0
      %v485 = vpop.f32.mrb[0].mxu0
      %v486 = vadd.f32 %v386, %v485
      %v487 = vpop.f32.mrb[0].mxu0
      %488 = vmatprep.mubr.bf16.mxu0 0
      %489 = vmatmul.mubr.bf16.gmra.mrb[0].mxu0 %v437
      %v490 = vpop.f32.mrb[0].mxu0
      %v491 = vadd.f32 %v391, %v490
      %v492 = vpop.f32.mrb[0].mxu0
      %v493 = vpop.f32.mrb[0].mxu0
      %v494 = vadd.f32 %v394, %v493
      %v495 = vpop.f32.mrb[0].mxu0
      %496 = vmatprep.mubr.bf16.mxu0 0
      %497 = vmatmul.mubr.bf16.gmra.mrb[0].mxu0 %v440
      %v498 = vpop.f32.mrb[0].mxu0
      %v499 = vadd.f32 %v399, %v498
      %v500 = vpop.f32.mrb[0].mxu0
      %v501 = vpop.f32.mrb[0].mxu0
      %v502 = vadd.f32 %v402, %v501
      %v503 = vpop.f32.mrb[0].mxu0
      %504 = vmatprep.mubr.bf16.mxu0 0
      %505 = vmatmul.mubr.bf16.gmra.mrb[0].mxu0 %v443
      %v506 = vpop.f32.mrb[0].mxu0
      %v507 = vadd.f32 %v407, %v506
      %v508 = vpop.f32.mrb[0].mxu0
      %v509 = vpop.f32.mrb[0].mxu0
      %v510 = vadd.f32 %v410, %v509
      %v511 = vpop.f32.mrb[0].mxu0
      %512 = vdwg.mxu0
      %v513 = vld [vmem:[%s270] sm:$0xf]
      %v514 = vld [vmem:[%s270 + $0x4] sm:$0x1]
      %v515 = vld [vmem:[%s270 + $0x8] sm:$0xf]
      %v516 = vld [vmem:[%s270 + $0xc] sm:$0x1]
      %v517 = vld [vmem:[%s270 + $0x10] sm:$0xf]
      %v518 = vld [vmem:[%s270 + $0x14] sm:$0x1]
      %v519 = vld [vmem:[%s270 + $0x18] sm:$0xf]
      %v520 = vld [vmem:[%s270 + $0x1c] sm:$0x1]
      %v521 = vld [vmem:[%s270 + $0x20] sm:$0xf]
      %v522 = vld [vmem:[%s270 + $0x24] sm:$0x1]
      %v523 = vld [vmem:[%s270 + $0x28] sm:$0xf]
      %v524 = vld [vmem:[%s270 + $0x2c] sm:$0x1]
      %v525 = vld [vmem:[%s270 + $0x30] sm:$0xf]
      %v526 = vld [vmem:[%s270 + $0x34] sm:$0x1]
      %v527 = vld [vmem:[%s270 + $0x38] sm:$0xf]
      %v528 = vld [vmem:[%s270 + $0x3c] sm:$0x1]
      %vm529 = vsmask.f32 3328
      %vm530 = vsmask.f32 7440
      %vm531 = vmor %vm529, %vm530
      %v533 = vshrl.u32 %v513, 16
      %v535 = vrot.slane %v533, 4
      %v536 = vshll.u32 %v513, 16
      %v538 = vrot.slane %v536, 5
      %v539 = vor.u32 %v535, %v538
      %v540 = vrot.slane %v539, 4
      %v542 = vshll.u32 %v514, 16
      %v544 = vrot.slane %v542, 5
      %v545 = vsel %vm531, %v540, %v544
      %v547 = vshrl.u32 %v515, 16
      %v549 = vrot.slane %v547, 4
      %v550 = vshll.u32 %v515, 16
      %v552 = vrot.slane %v550, 5
      %v553 = vor.u32 %v549, %v552
      %v554 = vrot.slane %v553, 4
      %v556 = vshll.u32 %v516, 16
      %v558 = vrot.slane %v556, 5
      %v559 = vsel %vm531, %v554, %v558
      %v561 = vshrl.u32 %v517, 16
      %v563 = vrot.slane %v561, 4
      %v564 = vshll.u32 %v517, 16
      %v566 = vrot.slane %v564, 5
      %v567 = vor.u32 %v563, %v566
      %v568 = vrot.slane %v567, 4
      %v570 = vshll.u32 %v518, 16
      %v572 = vrot.slane %v570, 5
      %v573 = vsel %vm531, %v568, %v572
      %v575 = vshrl.u32 %v519, 16
      %v577 = vrot.slane %v575, 4
      %v578 = vshll.u32 %v519, 16
      %v580 = vrot.slane %v578, 5
      %v581 = vor.u32 %v577, %v580
      %v582 = vrot.slane %v581, 4
      %v584 = vshll.u32 %v520, 16
      %v586 = vrot.slane %v584, 5
      %v587 = vsel %vm531, %v582, %v586
      %v589 = vshrl.u32 %v521, 16
      %v591 = vrot.slane %v589, 4
      %v592 = vshll.u32 %v521, 16
      %v594 = vrot.slane %v592, 5
      %v595 = vor.u32 %v591, %v594
      %v596 = vrot.slane %v595, 4
      %v598 = vshll.u32 %v522, 16
      %v600 = vrot.slane %v598, 5
      %v601 = vsel %vm531, %v596, %v600
      %v603 = vshrl.u32 %v523, 16
      %v605 = vrot.slane %v603, 4
      %v606 = vshll.u32 %v523, 16
      %v608 = vrot.slane %v606, 5
      %v609 = vor.u32 %v605, %v608
      %v610 = vrot.slane %v609, 4
      %v612 = vshll.u32 %v524, 16
      %v614 = vrot.slane %v612, 5
      %v615 = vsel %vm531, %v610, %v614
      %v617 = vshrl.u32 %v525, 16
      %v619 = vrot.slane %v617, 4
      %v620 = vshll.u32 %v525, 16
      %v622 = vrot.slane %v620, 5
      %v623 = vor.u32 %v619, %v622
      %v624 = vrot.slane %v623, 4
      %v626 = vshll.u32 %v526, 16
      %v628 = vrot.slane %v626, 5
      %v629 = vsel %vm531, %v624, %v628
      %v631 = vshrl.u32 %v527, 16
      %v633 = vrot.slane %v631, 4
      %v634 = vshll.u32 %v527, 16
      %v636 = vrot.slane %v634, 5
      %v637 = vor.u32 %v633, %v636
      %v638 = vrot.slane %v637, 4
      %v640 = vshll.u32 %v528, 16
      %v642 = vrot.slane %v640, 5
      %v643 = vsel %vm531, %v638, %v642
      %s644 = scalar_lea.vmem %s1, 4
      %v645 = vld [vmem:[%s644] sm:$0x3]
      %v646 = vunpack.c.l.b16 %v545
      %v647 = vunpack.c.l.b16 %v559
      %v648 = vunpack.c.l.b16 %v573
      %v649 = vunpack.c.l.b16 %v587
      %v650 = vunpack.c.l.b16 %v601
      %v651 = vunpack.c.l.b16 %v615
      %v652 = vunpack.c.l.b16 %v629
      %v653 = vunpack.c.l.b16 %v643
      %v654 = vpack.c.b16 %v647, %v646
      %v655 = vpack.c.b16 %v649, %v648
      %v656 = vpack.c.b16 %v651, %v650
      %v657 = vpack.c.b16 %v653, %v652
      %v659 = vsel %vm331, %v654, 0
      %v662 = vsel %vm331, %v655, 0
      %v665 = vsel %vm331, %v656, 0
      %v668 = vsel %vm331, %v657, 0
      %v671 = vsel %vm344, %v645, 0
      %673 = vmatprep.subr.bf16.mxu0 0
      %674 = vmatpush1.bf16.msra.mxu0 %v671
      %675 = vmatprep.subr.bf16.mxu0 0
      %676 = vmatpush1.bf16.msra.mxu0 0
      %677 = vmatprep.subr.bf16.mxu0 0
      %678 = vmatpush1.bf16.msra.mxu0 0
      %679 = vmatprep.subr.bf16.mxu0 0
      %680 = vmatpush1.bf16.msra.mxu0 0
      %681 = vmatprep.subr.bf16.mxu0 0
      %682 = vmatpush1.bf16.msra.mxu0 0
      %683 = vmatprep.subr.bf16.mxu0 0
      %684 = vmatpush1.bf16.msra.mxu0 0
      %685 = vmatprep.subr.bf16.mxu0 0
      %686 = vmatpush1.bf16.msra.mxu0 0
      %687 = vmatprep.subr.bf16.mxu0 0
      %688 = vmatpush1.bf16.msra.mxu0 0
      %689 = vmatprep.subr.bf16.mxu0 0
      %690 = vmatpush1.bf16.msra.mxu0 0
      %691 = vmatprep.subr.bf16.mxu0 0
      %692 = vmatpush1.bf16.msra.mxu0 0
      %693 = vmatprep.subr.bf16.mxu0 0
      %694 = vmatpush1.bf16.msra.mxu0 0
      %695 = vmatprep.subr.bf16.mxu0 0
      %696 = vmatpush1.bf16.msra.mxu0 0
      %697 = vmatprep.subr.bf16.mxu0 0
      %698 = vmatpush1.bf16.msra.mxu0 0
      %699 = vmatprep.subr.bf16.mxu0 0
      %700 = vmatpush1.bf16.msra.mxu0 0
      %701 = vmatprep.subr.bf16.mxu0 0
      %702 = vmatpush1.bf16.msra.mxu0 0
      %703 = vmatprep.subr.bf16.mxu0 0
      %704 = vmatpush1.bf16.msra.mxu0 0
      %705 = vmatprep.mubr.bf16.mxu0 0
      %706 = vmatmul.mubr.bf16.gmra.mrb[0].mxu0 %v659
      %v707 = vpop.f32.mrb[0].mxu0
      %v708 = vadd.f32 0.0, %v707
      %v709 = vpop.f32.mrb[0].mxu0
      %v710 = vpop.f32.mrb[0].mxu0
      %v711 = vadd.f32 0.0, %v710
      %v712 = vpop.f32.mrb[0].mxu0
      %713 = vmatprep.mubr.bf16.mxu0 0
      %714 = vmatmul.mubr.bf16.gmra.mrb[0].mxu0 %v662
      %v715 = vpop.f32.mrb[0].mxu0
      %v716 = vadd.f32 0.0, %v715
      %v717 = vpop.f32.mrb[0].mxu0
      %v718 = vpop.f32.mrb[0].mxu0
      %v719 = vadd.f32 0.0, %v718
      %v720 = vpop.f32.mrb[0].mxu0
      %721 = vmatprep.mubr.bf16.mxu0 0
      %722 = vmatmul.mubr.bf16.gmra.mrb[0].mxu0 %v665
      %v723 = vpop.f32.mrb[0].mxu0
      %v724 = vadd.f32 0.0, %v723
      %v725 = vpop.f32.mrb[0].mxu0
      %v726 = vpop.f32.mrb[0].mxu0
      %v727 = vadd.f32 0.0, %v726
      %v728 = vpop.f32.mrb[0].mxu0
      %729 = vmatprep.mubr.bf16.mxu0 0
      %730 = vmatmul.mubr.bf16.gmra.mrb[0].mxu0 %v668
      %v731 = vpop.f32.mrb[0].mxu0
      %v732 = vadd.f32 0.0, %v731
      %v733 = vpop.f32.mrb[0].mxu0
      %v734 = vpop.f32.mrb[0].mxu0
      %v735 = vadd.f32 0.0, %v734
      %v736 = vpop.f32.mrb[0].mxu0
      %737 = vdwg.mxu0
      %v738 = vadd.f32 %v483, %v708
      %v739 = vadd.f32 %v486, %v711
      %v740 = vadd.f32 %v491, %v716
      %v741 = vadd.f32 %v494, %v719
      %v742 = vadd.f32 %v499, %v724
      %v743 = vadd.f32 %v502, %v727
      %v744 = vadd.f32 %v507, %v732
      %v745 = vadd.f32 %v510, %v735
      %s746 = scalar_lea.vmem %s270, 144
      %v747 = vld [vmem:[%s746] sm:$0xf]
      %v748 = vld [vmem:[%s746 + $0x8] sm:$0xf]
      %v749 = vld [vmem:[%s746 + $0x10] sm:$0xf]
      %v750 = vld [vmem:[%s746 + $0x18] sm:$0xf]
      %v751 = vld [vmem:[%s746 + $0x20] sm:$0xf]
      %v752 = vld [vmem:[%s746 + $0x28] sm:$0xf]
      %v753 = vld [vmem:[%s746 + $0x30] sm:$0xf]
      %v754 = vld [vmem:[%s746 + $0x38] sm:$0xf]
      %s755 = scalar_lea.vmem %s1, 6
      %v756 = vld [vmem:[%s755] sm:$0x3]
      %v765 = vunpack.c.l.b16 %v747
      %v766 = vunpack.c.l.b16 %v748
      %v767 = vunpack.c.l.b16 %v749
      %v768 = vunpack.c.l.b16 %v750
      %v769 = vunpack.c.l.b16 %v751
      %v770 = vunpack.c.l.b16 %v752
      %v771 = vunpack.c.l.b16 %v753
      %v772 = vunpack.c.l.b16 %v754
      %v773 = vpack.c.b16 %v766, %v765
      %v774 = vpack.c.b16 %v768, %v767
      %v775 = vpack.c.b16 %v770, %v769
      %v776 = vpack.c.b16 %v772, %v771
      %v778 = vsel %vm331, %v773, 0
      %v781 = vsel %vm331, %v774, 0
      %v784 = vsel %vm331, %v775, 0
      %v787 = vsel %vm331, %v776, 0
      %v790 = vsel %vm344, %v756, 0
      %792 = vmatprep.subr.bf16.mxu0 0
      %793 = vmatpush1.bf16.msra.mxu0 %v790
      %794 = vmatprep.subr.bf16.mxu0 0
      %795 = vmatpush1.bf16.msra.mxu0 0
      %796 = vmatprep.subr.bf16.mxu0 0
      %797 = vmatpush1.bf16.msra.mxu0 0
      %798 = vmatprep.subr.bf16.mxu0 0
      %799 = vmatpush1.bf16.msra.mxu0 0
      %800 = vmatprep.subr.bf16.mxu0 0
      %801 = vmatpush1.bf16.msra.mxu0 0
      %802 = vmatprep.subr.bf16.mxu0 0
      %803 = vmatpush1.bf16.msra.mxu0 0
      %804 = vmatprep.subr.bf16.mxu0 0
      %805 = vmatpush1.bf16.msra.mxu0 0
      %806 = vmatprep.subr.bf16.mxu0 0
      %807 = vmatpush1.bf16.msra.mxu0 0
      %808 = vmatprep.subr.bf16.mxu0 0
      %809 = vmatpush1.bf16.msra.mxu0 0
      %810 = vmatprep.subr.bf16.mxu0 0
      %811 = vmatpush1.bf16.msra.mxu0 0
      %812 = vmatprep.subr.bf16.mxu0 0
      %813 = vmatpush1.bf16.msra.mxu0 0
      %814 = vmatprep.subr.bf16.mxu0 0
      %815 = vmatpush1.bf16.msra.mxu0 0
      %816 = vmatprep.subr.bf16.mxu0 0
      %817 = vmatpush1.bf16.msra.mxu0 0
      %818 = vmatprep.subr.bf16.mxu0 0
      %819 = vmatpush1.bf16.msra.mxu0 0
      %820 = vmatprep.subr.bf16.mxu0 0
      %821 = vmatpush1.bf16.msra.mxu0 0
      %822 = vmatprep.subr.bf16.mxu0 0
      %823 = vmatpush1.bf16.msra.mxu0 0
      %824 = vmatprep.mubr.bf16.mxu0 0
      %825 = vmatmul.mubr.bf16.gmra.mrb[0].mxu0 %v778
      %v826 = vpop.f32.mrb[0].mxu0
      %v827 = vadd.f32 0.0, %v826
      %v828 = vpop.f32.mrb[0].mxu0
      %v829 = vpop.f32.mrb[0].mxu0
      %v830 = vadd.f32 0.0, %v829
      %v831 = vpop.f32.mrb[0].mxu0
      %832 = vmatprep.mubr.bf16.mxu0 0
      %833 = vmatmul.mubr.bf16.gmra.mrb[0].mxu0 %v781
      %v834 = vpop.f32.mrb[0].mxu0
      %v835 = vadd.f32 0.0, %v834
      %v836 = vpop.f32.mrb[0].mxu0
      %v837 = vpop.f32.mrb[0].mxu0
      %v838 = vadd.f32 0.0, %v837
      %v839 = vpop.f32.mrb[0].mxu0
      %840 = vmatprep.mubr.bf16.mxu0 0
      %841 = vmatmul.mubr.bf16.gmra.mrb[0].mxu0 %v784
      %v842 = vpop.f32.mrb[0].mxu0
      %v843 = vadd.f32 0.0, %v842
      %v844 = vpop.f32.mrb[0].mxu0
      %v845 = vpop.f32.mrb[0].mxu0
      %v846 = vadd.f32 0.0, %v845
      %v847 = vpop.f32.mrb[0].mxu0
      %848 = vmatprep.mubr.bf16.mxu0 0
      %849 = vmatmul.mubr.bf16.gmra.mrb[0].mxu0 %v787
      %v850 = vpop.f32.mrb[0].mxu0
      %v851 = vadd.f32 0.0, %v850
      %v852 = vpop.f32.mrb[0].mxu0
      %v853 = vpop.f32.mrb[0].mxu0
      %v854 = vadd.f32 0.0, %v853
      %v855 = vpop.f32.mrb[0].mxu0
      %856 = vdwg.mxu0
      %v857 = vadd.f32 %v738, %v827
      %v858 = vadd.f32 %v739, %v830
      %v859 = vadd.f32 %v740, %v835
      %v860 = vadd.f32 %v741, %v838
      %v861 = vadd.f32 %v742, %v843
      %v862 = vadd.f32 %v743, %v846
      %v863 = vadd.f32 %v744, %v851
      %v864 = vadd.f32 %v745, %v854
      %s865 = scalar_lea.vmem %s270, 216
      %v866 = vld [vmem:[%s865] sm:$0xf]
      %v867 = vld [vmem:[%s865 + $0x8] sm:$0xf]
      %v868 = vld [vmem:[%s865 + $0x10] sm:$0xf]
      %v869 = vld [vmem:[%s865 + $0x18] sm:$0xf]
      %v870 = vld [vmem:[%s865 + $0x20] sm:$0xf]
      %v871 = vld [vmem:[%s865 + $0x28] sm:$0xf]
      %v872 = vld [vmem:[%s865 + $0x30] sm:$0xf]
      %v873 = vld [vmem:[%s865 + $0x38] sm:$0xf]
      %s874 = scalar_lea.vmem %s1, 8
      %v875 = vld [vmem:[%s874] sm:$0x3]
      %v884 = vunpack.c.l.b16 %v866
      %v885 = vunpack.c.l.b16 %v867
      %v886 = vunpack.c.l.b16 %v868
      %v887 = vunpack.c.l.b16 %v869
      %v888 = vunpack.c.l.b16 %v870
      %v889 = vunpack.c.l.b16 %v871
      %v890 = vunpack.c.l.b16 %v872
      %v891 = vunpack.c.l.b16 %v873
      %v892 = vpack.c.b16 %v885, %v884
      %v893 = vpack.c.b16 %v887, %v886
      %v894 = vpack.c.b16 %v889, %v888
      %v895 = vpack.c.b16 %v891, %v890
      %v897 = vsel %vm331, %v892, 0
      %v900 = vsel %vm331, %v893, 0
      %v903 = vsel %vm331, %v894, 0
      %v906 = vsel %vm331, %v895, 0
      %v909 = vsel %vm344, %v875, 0
      %911 = vmatprep.subr.bf16.mxu0 0
      %912 = vmatpush1.bf16.msra.mxu0 %v909
      %913 = vmatprep.subr.bf16.mxu0 0
      %914 = vmatpush1.bf16.msra.mxu0 0
      %915 = vmatprep.subr.bf16.mxu0 0
      %916 = vmatpush1.bf16.msra.mxu0 0
      %917 = vmatprep.subr.bf16.mxu0 0
      %918 = vmatpush1.bf16.msra.mxu0 0
      %919 = vmatprep.subr.bf16.mxu0 0
      %920 = vmatpush1.bf16.msra.mxu0 0
      %921 = vmatprep.subr.bf16.mxu0 0
      %922 = vmatpush1.bf16.msra.mxu0 0
      %923 = vmatprep.subr.bf16.mxu0 0
      %924 = vmatpush1.bf16.msra.mxu0 0
      %925 = vmatprep.subr.bf16.mxu0 0
      %926 = vmatpush1.bf16.msra.mxu0 0
      %927 = vmatprep.subr.bf16.mxu0 0
      %928 = vmatpush1.bf16.msra.mxu0 0
      %929 = vmatprep.subr.bf16.mxu0 0
      %930 = vmatpush1.bf16.msra.mxu0 0
      %931 = vmatprep.subr.bf16.mxu0 0
      %932 = vmatpush1.bf16.msra.mxu0 0
      %933 = vmatprep.subr.bf16.mxu0 0
      %934 = vmatpush1.bf16.msra.mxu0 0
      %935 = vmatprep.subr.bf16.mxu0 0
      %936 = vmatpush1.bf16.msra.mxu0 0
      %937 = vmatprep.subr.bf16.mxu0 0
      %938 = vmatpush1.bf16.msra.mxu0 0
      %939 = vmatprep.subr.bf16.mxu0 0
      %940 = vmatpush1.bf16.msra.mxu0 0
      %941 = vmatprep.subr.bf16.mxu0 0
      %942 = vmatpush1.bf16.msra.mxu0 0
      %943 = vmatprep.mubr.bf16.mxu0 0
      %944 = vmatmul.mubr.bf16.gmra.mrb[0].mxu0 %v897
      %v945 = vpop.f32.mrb[0].mxu0
      %v946 = vadd.f32 0.0, %v945
      %v947 = vpop.f32.mrb[0].mxu0
      %v948 = vpop.f32.mrb[0].mxu0
      %v949 = vadd.f32 0.0, %v948
      %v950 = vpop.f32.mrb[0].mxu0
      %951 = vmatprep.mubr.bf16.mxu0 0
      %952 = vmatmul.mubr.bf16.gmra.mrb[0].mxu0 %v900
      %v953 = vpop.f32.mrb[0].mxu0
      %v954 = vadd.f32 0.0, %v953
      %v955 = vpop.f32.mrb[0].mxu0
      %v956 = vpop.f32.mrb[0].mxu0
      %v957 = vadd.f32 0.0, %v956
      %v958 = vpop.f32.mrb[0].mxu0
      %959 = vmatprep.mubr.bf16.mxu0 0
      %960 = vmatmul.mubr.bf16.gmra.mrb[0].mxu0 %v903
      %v961 = vpop.f32.mrb[0].mxu0
      %v962 = vadd.f32 0.0, %v961
      %v963 = vpop.f32.mrb[0].mxu0
      %v964 = vpop.f32.mrb[0].mxu0
      %v965 = vadd.f32 0.0, %v964
      %v966 = vpop.f32.mrb[0].mxu0
      %967 = vmatprep.mubr.bf16.mxu0 0
      %968 = vmatmul.mubr.bf16.gmra.mrb[0].mxu0 %v906
      %v969 = vpop.f32.mrb[0].mxu0
      %v970 = vadd.f32 0.0, %v969
      %v971 = vpop.f32.mrb[0].mxu0
      %v972 = vpop.f32.mrb[0].mxu0
      %v973 = vadd.f32 0.0, %v972
      %v974 = vpop.f32.mrb[0].mxu0
      %975 = vdwg.mxu0
      %v976 = vadd.f32 %v857, %v946
      %v977 = vadd.f32 %v858, %v949
      %v978 = vadd.f32 %v859, %v954
      %v979 = vadd.f32 %v860, %v957
      %v980 = vadd.f32 %v861, %v962
      %v981 = vadd.f32 %v862, %v965
      %v982 = vadd.f32 %v863, %v970
      %v983 = vadd.f32 %v864, %v973
      %v984 = vld [vmem:[%s746] sm:$0xf]
      %v985 = vld [vmem:[%s746 + $0x4] sm:$0x1]
      %v986 = vld [vmem:[%s746 + $0x8] sm:$0xf]
      %v987 = vld [vmem:[%s746 + $0xc] sm:$0x1]
      %v988 = vld [vmem:[%s746 + $0x10] sm:$0xf]
      %v989 = vld [vmem:[%s746 + $0x14] sm:$0x1]
      %v990 = vld [vmem:[%s746 + $0x18] sm:$0xf]
      %v991 = vld [vmem:[%s746 + $0x1c] sm:$0x1]
      %v992 = vld [vmem:[%s746 + $0x20] sm:$0xf]
      %v993 = vld [vmem:[%s746 + $0x24] sm:$0x1]
      %v994 = vld [vmem:[%s746 + $0x28] sm:$0xf]
      %v995 = vld [vmem:[%s746 + $0x2c] sm:$0x1]
      %v996 = vld [vmem:[%s746 + $0x30] sm:$0xf]
      %v997 = vld [vmem:[%s746 + $0x34] sm:$0x1]
      %v998 = vld [vmem:[%s746 + $0x38] sm:$0xf]
      %v999 = vld [vmem:[%s746 + $0x3c] sm:$0x1]
      %v1001 = vshrl.u32 %v984, 16
      %v1003 = vrot.slane %v1001, 4
      %v1004 = vshll.u32 %v984, 16
      %v1006 = vrot.slane %v1004, 5
      %v1007 = vor.u32 %v1003, %v1006
      %v1008 = vrot.slane %v1007, 4
      %v1010 = vshll.u32 %v985, 16
      %v1012 = vrot.slane %v1010, 5
      %v1013 = vsel %vm531, %v1008, %v1012
      %v1015 = vshrl.u32 %v986, 16
      %v1017 = vrot.slane %v1015, 4
      %v1018 = vshll.u32 %v986, 16
      %v1020 = vrot.slane %v1018, 5
      %v1021 = vor.u32 %v1017, %v1020
      %v1022 = vrot.slane %v1021, 4
      %v1024 = vshll.u32 %v987, 16
      %v1026 = vrot.slane %v1024, 5
      %v1027 = vsel %vm531, %v1022, %v1026
      %v1029 = vshrl.u32 %v988, 16
      %v1031 = vrot.slane %v1029, 4
      %v1032 = vshll.u32 %v988, 16
      %v1034 = vrot.slane %v1032, 5
      %v1035 = vor.u32 %v1031, %v1034
      %v1036 = vrot.slane %v1035, 4
      %v1038 = vshll.u32 %v989, 16
      %v1040 = vrot.slane %v1038, 5
      %v1041 = vsel %vm531, %v1036, %v1040
      %v1043 = vshrl.u32 %v990, 16
      %v1045 = vrot.slane %v1043, 4
      %v1046 = vshll.u32 %v990, 16
      %v1048 = vrot.slane %v1046, 5
      %v1049 = vor.u32 %v1045, %v1048
      %v1050 = vrot.slane %v1049, 4
      %v1052 = vshll.u32 %v991, 16
      %v1054 = vrot.slane %v1052, 5
      %v1055 = vsel %vm531, %v1050, %v1054
      %v1057 = vshrl.u32 %v992, 16
      %v1059 = vrot.slane %v1057, 4
      %v1060 = vshll.u32 %v992, 16
      %v1062 = vrot.slane %v1060, 5
      %v1063 = vor.u32 %v1059, %v1062
      %v1064 = vrot.slane %v1063, 4
      %v1066 = vshll.u32 %v993, 16
      %v1068 = vrot.slane %v1066, 5
      %v1069 = vsel %vm531, %v1064, %v1068
      %v1071 = vshrl.u32 %v994, 16
      %v1073 = vrot.slane %v1071, 4
      %v1074 = vshll.u32 %v994, 16
      %v1076 = vrot.slane %v1074, 5
      %v1077 = vor.u32 %v1073, %v1076
      %v1078 = vrot.slane %v1077, 4
      %v1080 = vshll.u32 %v995, 16
      %v1082 = vrot.slane %v1080, 5
      %v1083 = vsel %vm531, %v1078, %v1082
      %v1085 = vshrl.u32 %v996, 16
      %v1087 = vrot.slane %v1085, 4
      %v1088 = vshll.u32 %v996, 16
      %v1090 = vrot.slane %v1088, 5
      %v1091 = vor.u32 %v1087, %v1090
      %v1092 = vrot.slane %v1091, 4
      %v1094 = vshll.u32 %v997, 16
      %v1096 = vrot.slane %v1094, 5
      %v1097 = vsel %vm531, %v1092, %v1096
      %v1099 = vshrl.u32 %v998, 16
      %v1101 = vrot.slane %v1099, 4
      %v1102 = vshll.u32 %v998, 16
      %v1104 = vrot.slane %v1102, 5
      %v1105 = vor.u32 %v1101, %v1104
      %v1106 = vrot.slane %v1105, 4
      %v1108 = vshll.u32 %v999, 16
      %v1110 = vrot.slane %v1108, 5
      %v1111 = vsel %vm531, %v1106, %v1110
      %s1112 = scalar_lea.vmem %s1, 10
      %v1113 = vld [vmem:[%s1112] sm:$0x3]
      %v1114 = vunpack.c.l.b16 %v1013
      %v1115 = vunpack.c.l.b16 %v1027
      %v1116 = vunpack.c.l.b16 %v1041
      %v1117 = vunpack.c.l.b16 %v1055
      %v1118 = vunpack.c.l.b16 %v1069
      %v1119 = vunpack.c.l.b16 %v1083
      %v1120 = vunpack.c.l.b16 %v1097
      %v1121 = vunpack.c.l.b16 %v1111
      %v1122 = vpack.c.b16 %v1115, %v1114
      %v1123 = vpack.c.b16 %v1117, %v1116
      %v1124 = vpack.c.b16 %v1119, %v1118
      %v1125 = vpack.c.b16 %v1121, %v1120
      %v1127 = vsel %vm331, %v1122, 0
      %v1130 = vsel %vm331, %v1123, 0
      %v1133 = vsel %vm331, %v1124, 0
      %v1136 = vsel %vm331, %v1125, 0
      %v1139 = vsel %vm344, %v1113, 0
      %1141 = vmatprep.subr.bf16.mxu0 0
      %1142 = vmatpush1.bf16.msra.mxu0 %v1139
      %1143 = vmatprep.subr.bf16.mxu0 0
      %1144 = vmatpush1.bf16.msra.mxu0 0
      %1145 = vmatprep.subr.bf16.mxu0 0
      %1146 = vmatpush1.bf16.msra.mxu0 0
      %1147 = vmatprep.subr.bf16.mxu0 0
      %1148 = vmatpush1.bf16.msra.mxu0 0
      %1149 = vmatprep.subr.bf16.mxu0 0
      %1150 = vmatpush1.bf16.msra.mxu0 0
      %1151 = vmatprep.subr.bf16.mxu0 0
      %1152 = vmatpush1.bf16.msra.mxu0 0
      %1153 = vmatprep.subr.bf16.mxu0 0
      %1154 = vmatpush1.bf16.msra.mxu0 0
      %1155 = vmatprep.subr.bf16.mxu0 0
      %1156 = vmatpush1.bf16.msra.mxu0 0
      %1157 = vmatprep.subr.bf16.mxu0 0
      %1158 = vmatpush1.bf16.msra.mxu0 0
      %1159 = vmatprep.subr.bf16.mxu0 0
      %1160 = vmatpush1.bf16.msra.mxu0 0
      %1161 = vmatprep.subr.bf16.mxu0 0
      %1162 = vmatpush1.bf16.msra.mxu0 0
      %1163 = vmatprep.subr.bf16.mxu0 0
      %1164 = vmatpush1.bf16.msra.mxu0 0
      %1165 = vmatprep.subr.bf16.mxu0 0
      %1166 = vmatpush1.bf16.msra.mxu0 0
      %1167 = vmatprep.subr.bf16.mxu0 0
      %1168 = vmatpush1.bf16.msra.mxu0 0
      %1169 = vmatprep.subr.bf16.mxu0 0
      %1170 = vmatpush1.bf16.msra.mxu0 0
      %1171 = vmatprep.subr.bf16.mxu0 0
      %1172 = vmatpush1.bf16.msra.mxu0 0
      %1173 = vmatprep.mubr.bf16.mxu0 0
      %1174 = vmatmul.mubr.bf16.gmra.mrb[0].mxu0 %v1127
      %v1175 = vpop.f32.mrb[0].mxu0
      %v1176 = vadd.f32 0.0, %v1175
      %v1177 = vpop.f32.mrb[0].mxu0
      %v1178 = vpop.f32.mrb[0].mxu0
      %v1179 = vadd.f32 0.0, %v1178
      %v1180 = vpop.f32.mrb[0].mxu0
      %1181 = vmatprep.mubr.bf16.mxu0 0
      %1182 = vmatmul.mubr.bf16.gmra.mrb[0].mxu0 %v1130
      %v1183 = vpop.f32.mrb[0].mxu0
      %v1184 = vadd.f32 0.0, %v1183
      %v1185 = vpop.f32.mrb[0].mxu0
      %v1186 = vpop.f32.mrb[0].mxu0
      %v1187 = vadd.f32 0.0, %v1186
      %v1188 = vpop.f32.mrb[0].mxu0
      %1189 = vmatprep.mubr.bf16.mxu0 0
      %1190 = vmatmul.mubr.bf16.gmra.mrb[0].mxu0 %v1133
      %v1191 = vpop.f32.mrb[0].mxu0
      %v1192 = vadd.f32 0.0, %v1191
      %v1193 = vpop.f32.mrb[0].mxu0
      %v1194 = vpop.f32.mrb[0].mxu0
      %v1195 = vadd.f32 0.0, %v1194
      %v1196 = vpop.f32.mrb[0].mxu0
      %1197 = vmatprep.mubr.bf16.mxu0 0
      %1198 = vmatmul.mubr.bf16.gmra.mrb[0].mxu0 %v1136
      %v1199 = vpop.f32.mrb[0].mxu0
      %v1200 = vadd.f32 0.0, %v1199
      %v1201 = vpop.f32.mrb[0].mxu0
      %v1202 = vpop.f32.mrb[0].mxu0
      %v1203 = vadd.f32 0.0, %v1202
      %v1204 = vpop.f32.mrb[0].mxu0
      %1205 = vdwg.mxu0
      %v1206 = vadd.f32 %v976, %v1176
      %v1207 = vadd.f32 %v977, %v1179
      %v1208 = vadd.f32 %v978, %v1184
      %v1209 = vadd.f32 %v979, %v1187
      %v1210 = vadd.f32 %v980, %v1192
      %v1211 = vadd.f32 %v981, %v1195
      %v1212 = vadd.f32 %v982, %v1200
      %v1213 = vadd.f32 %v983, %v1203
      %s1214 = scalar_lea.vmem %s270, 8
      %v1215 = vld [vmem:[%s1214] sm:$0xf]
      %v1216 = vld [vmem:[%s1214 + $0x8] sm:$0xf]
      %v1217 = vld [vmem:[%s1214 + $0x10] sm:$0xf]
      %v1218 = vld [vmem:[%s1214 + $0x18] sm:$0xf]
      %v1219 = vld [vmem:[%s1214 + $0x20] sm:$0xf]
      %v1220 = vld [vmem:[%s1214 + $0x28] sm:$0xf]
      %v1221 = vld [vmem:[%s1214 + $0x30] sm:$0xf]
      %v1222 = vld [vmem:[%s1214 + $0x38] sm:$0xf]
      %s1223 = scalar_lea.vmem %s1, 12
      %v1224 = vld [vmem:[%s1223] sm:$0x3]
      %v1233 = vunpack.c.l.b16 %v1215
      %v1234 = vunpack.c.l.b16 %v1216
      %v1235 = vunpack.c.l.b16 %v1217
      %v1236 = vunpack.c.l.b16 %v1218
      %v1237 = vunpack.c.l.b16 %v1219
      %v1238 = vunpack.c.l.b16 %v1220
      %v1239 = vunpack.c.l.b16 %v1221
      %v1240 = vunpack.c.l.b16 %v1222
      %v1241 = vpack.c.b16 %v1234, %v1233
      %v1242 = vpack.c.b16 %v1236, %v1235
      %v1243 = vpack.c.b16 %v1238, %v1237
      %v1244 = vpack.c.b16 %v1240, %v1239
      %v1246 = vsel %vm331, %v1241, 0
      %v1249 = vsel %vm331, %v1242, 0
      %v1252 = vsel %vm331, %v1243, 0
      %v1255 = vsel %vm331, %v1244, 0
      %v1258 = vsel %vm344, %v1224, 0
      %1260 = vmatprep.subr.bf16.mxu0 0
      %1261 = vmatpush1.bf16.msra.mxu0 %v1258
      %1262 = vmatprep.subr.bf16.mxu0 0
      %1263 = vmatpush1.bf16.msra.mxu0 0
      %1264 = vmatprep.subr.bf16.mxu0 0
      %1265 = vmatpush1.bf16.msra.mxu0 0
      %1266 = vmatprep.subr.bf16.mxu0 0
      %1267 = vmatpush1.bf16.msra.mxu0 0
      %1268 = vmatprep.subr.bf16.mxu0 0
      %1269 = vmatpush1.bf16.msra.mxu0 0
      %1270 = vmatprep.subr.bf16.mxu0 0
      %1271 = vmatpush1.bf16.msra.mxu0 0
      %1272 = vmatprep.subr.bf16.mxu0 0
      %1273 = vmatpush1.bf16.msra.mxu0 0
      %1274 = vmatprep.subr.bf16.mxu0 0
      %1275 = vmatpush1.bf16.msra.mxu0 0
      %1276 = vmatprep.subr.bf16.mxu0 0
      %1277 = vmatpush1.bf16.msra.mxu0 0
      %1278 = vmatprep.subr.bf16.mxu0 0
      %1279 = vmatpush1.bf16.msra.mxu0 0
      %1280 = vmatprep.subr.bf16.mxu0 0
      %1281 = vmatpush1.bf16.msra.mxu0 0
      %1282 = vmatprep.subr.bf16.mxu0 0
      %1283 = vmatpush1.bf16.msra.mxu0 0
      %1284 = vmatprep.subr.bf16.mxu0 0
      %1285 = vmatpush1.bf16.msra.mxu0 0
      %1286 = vmatprep.subr.bf16.mxu0 0
      %1287 = vmatpush1.bf16.msra.mxu0 0
      %1288 = vmatprep.subr.bf16.mxu0 0
      %1289 = vmatpush1.bf16.msra.mxu0 0
      %1290 = vmatprep.subr.bf16.mxu0 0
      %1291 = vmatpush1.bf16.msra.mxu0 0
      %1292 = vmatprep.mubr.bf16.mxu0 0
      %1293 = vmatmul.mubr.bf16.gmra.mrb[0].mxu0 %v1246
      %v1294 = vpop.f32.mrb[0].mxu0
      %v1295 = vadd.f32 0.0, %v1294
      %v1296 = vpop.f32.mrb[0].mxu0
      %v1297 = vpop.f32.mrb[0].mxu0
      %v1298 = vadd.f32 0.0, %v1297
      %v1299 = vpop.f32.mrb[0].mxu0
      %1300 = vmatprep.mubr.bf16.mxu0 0
      %1301 = vmatmul.mubr.bf16.gmra.mrb[0].mxu0 %v1249
      %v1302 = vpop.f32.mrb[0].mxu0
      %v1303 = vadd.f32 0.0, %v1302
      %v1304 = vpop.f32.mrb[0].mxu0
      %v1305 = vpop.f32.mrb[0].mxu0
      %v1306 = vadd.f32 0.0, %v1305
      %v1307 = vpop.f32.mrb[0].mxu0
      %1308 = vmatprep.mubr.bf16.mxu0 0
      %1309 = vmatmul.mubr.bf16.gmra.mrb[0].mxu0 %v1252
      %v1310 = vpop.f32.mrb[0].mxu0
      %v1311 = vadd.f32 0.0, %v1310
      %v1312 = vpop.f32.mrb[0].mxu0
      %v1313 = vpop.f32.mrb[0].mxu0
      %v1314 = vadd.f32 0.0, %v1313
      %v1315 = vpop.f32.mrb[0].mxu0
      %1316 = vmatprep.mubr.bf16.mxu0 0
      %1317 = vmatmul.mubr.bf16.gmra.mrb[0].mxu0 %v1255
      %v1318 = vpop.f32.mrb[0].mxu0
      %v1319 = vadd.f32 0.0, %v1318
      %v1320 = vpop.f32.mrb[0].mxu0
      %v1321 = vpop.f32.mrb[0].mxu0
      %v1322 = vadd.f32 0.0, %v1321
      %v1323 = vpop.f32.mrb[0].mxu0
      %1324 = vdwg.mxu0
      %v1325 = vadd.f32 %v1206, %v1295
      %v1326 = vadd.f32 %v1207, %v1298
      %v1327 = vadd.f32 %v1208, %v1303
      %v1328 = vadd.f32 %v1209, %v1306
      %v1329 = vadd.f32 %v1210, %v1311
      %v1330 = vadd.f32 %v1211, %v1314
      %v1331 = vadd.f32 %v1212, %v1319
      %v1332 = vadd.f32 %v1213, %v1322
      %s1333 = scalar_lea.vmem %s270, 80
      %v1334 = vld [vmem:[%s1333] sm:$0xf]
      %v1335 = vld [vmem:[%s1333 + $0x8] sm:$0xf]
      %v1336 = vld [vmem:[%s1333 + $0x10] sm:$0xf]
      %v1337 = vld [vmem:[%s1333 + $0x18] sm:$0xf]
      %v1338 = vld [vmem:[%s1333 + $0x20] sm:$0xf]
      %v1339 = vld [vmem:[%s1333 + $0x28] sm:$0xf]
      %v1340 = vld [vmem:[%s1333 + $0x30] sm:$0xf]
      %v1341 = vld [vmem:[%s1333 + $0x38] sm:$0xf]
      %s1342 = scalar_lea.vmem %s1, 14
      %v1343 = vld [vmem:[%s1342] sm:$0x3]
      %v1352 = vunpack.c.l.b16 %v1334
      %v1353 = vunpack.c.l.b16 %v1335
      %v1354 = vunpack.c.l.b16 %v1336
      %v1355 = vunpack.c.l.b16 %v1337
      %v1356 = vunpack.c.l.b16 %v1338
      %v1357 = vunpack.c.l.b16 %v1339
      %v1358 = vunpack.c.l.b16 %v1340
      %v1359 = vunpack.c.l.b16 %v1341
      %v1360 = vpack.c.b16 %v1353, %v1352
      %v1361 = vpack.c.b16 %v1355, %v1354
      %v1362 = vpack.c.b16 %v1357, %v1356
      %v1363 = vpack.c.b16 %v1359, %v1358
      %v1365 = vsel %vm331, %v1360, 0
      %v1368 = vsel %vm331, %v1361, 0
      %v1371 = vsel %vm331, %v1362, 0
      %v1374 = vsel %vm331, %v1363, 0
      %v1377 = vsel %vm344, %v1343, 0
      %1379 = vmatprep.subr.bf16.mxu0 0
      %1380 = vmatpush1.bf16.msra.mxu0 %v1377
      %1381 = vmatprep.subr.bf16.mxu0 0
      %1382 = vmatpush1.bf16.msra.mxu0 0
      %1383 = vmatprep.subr.bf16.mxu0 0
      %1384 = vmatpush1.bf16.msra.mxu0 0
      %1385 = vmatprep.subr.bf16.mxu0 0
      %1386 = vmatpush1.bf16.msra.mxu0 0
      %1387 = vmatprep.subr.bf16.mxu0 0
      %1388 = vmatpush1.bf16.msra.mxu0 0
      %1389 = vmatprep.subr.bf16.mxu0 0
      %1390 = vmatpush1.bf16.msra.mxu0 0
      %1391 = vmatprep.subr.bf16.mxu0 0
      %1392 = vmatpush1.bf16.msra.mxu0 0
      %1393 = vmatprep.subr.bf16.mxu0 0
      %1394 = vmatpush1.bf16.msra.mxu0 0
      %1395 = vmatprep.subr.bf16.mxu0 0
      %1396 = vmatpush1.bf16.msra.mxu0 0
      %1397 = vmatprep.subr.bf16.mxu0 0
      %1398 = vmatpush1.bf16.msra.mxu0 0
      %1399 = vmatprep.subr.bf16.mxu0 0
      %1400 = vmatpush1.bf16.msra.mxu0 0
      %1401 = vmatprep.subr.bf16.mxu0 0
      %1402 = vmatpush1.bf16.msra.mxu0 0
      %1403 = vmatprep.subr.bf16.mxu0 0
      %1404 = vmatpush1.bf16.msra.mxu0 0
      %1405 = vmatprep.subr.bf16.mxu0 0
      %1406 = vmatpush1.bf16.msra.mxu0 0
      %1407 = vmatprep.subr.bf16.mxu0 0
      %1408 = vmatpush1.bf16.msra.mxu0 0
      %1409 = vmatprep.subr.bf16.mxu0 0
      %1410 = vmatpush1.bf16.msra.mxu0 0
      %1411 = vmatprep.mubr.bf16.mxu0 0
      %1412 = vmatmul.mubr.bf16.gmra.mrb[0].mxu0 %v1365
      %v1413 = vpop.f32.mrb[0].mxu0
      %v1414 = vadd.f32 0.0, %v1413
      %v1415 = vpop.f32.mrb[0].mxu0
      %v1416 = vpop.f32.mrb[0].mxu0
      %v1417 = vadd.f32 0.0, %v1416
      %v1418 = vpop.f32.mrb[0].mxu0
      %1419 = vmatprep.mubr.bf16.mxu0 0
      %1420 = vmatmul.mubr.bf16.gmra.mrb[0].mxu0 %v1368
      %v1421 = vpop.f32.mrb[0].mxu0
      %v1422 = vadd.f32 0.0, %v1421
      %v1423 = vpop.f32.mrb[0].mxu0
      %v1424 = vpop.f32.mrb[0].mxu0
      %v1425 = vadd.f32 0.0, %v1424
      %v1426 = vpop.f32.mrb[0].mxu0
      %1427 = vmatprep.mubr.bf16.mxu0 0
      %1428 = vmatmul.mubr.bf16.gmra.mrb[0].mxu0 %v1371
      %v1429 = vpop.f32.mrb[0].mxu0
      %v1430 = vadd.f32 0.0, %v1429
      %v1431 = vpop.f32.mrb[0].mxu0
      %v1432 = vpop.f32.mrb[0].mxu0
      %v1433 = vadd.f32 0.0, %v1432
      %v1434 = vpop.f32.mrb[0].mxu0
      %1435 = vmatprep.mubr.bf16.mxu0 0
      %1436 = vmatmul.mubr.bf16.gmra.mrb[0].mxu0 %v1374
      %v1437 = vpop.f32.mrb[0].mxu0
      %v1438 = vadd.f32 0.0, %v1437
      %v1439 = vpop.f32.mrb[0].mxu0
      %v1440 = vpop.f32.mrb[0].mxu0
      %v1441 = vadd.f32 0.0, %v1440
      %v1442 = vpop.f32.mrb[0].mxu0
      %1443 = vdwg.mxu0
      %v1444 = vadd.f32 %v1325, %v1414
      %v1445 = vadd.f32 %v1326, %v1417
      %v1446 = vadd.f32 %v1327, %v1422
      %v1447 = vadd.f32 %v1328, %v1425
      %v1448 = vadd.f32 %v1329, %v1430
      %v1449 = vadd.f32 %v1330, %v1433
      %v1450 = vadd.f32 %v1331, %v1438
      %v1451 = vadd.f32 %v1332, %v1441
      %v1452 = vld [vmem:[%s1214] sm:$0xf]
      %v1453 = vld [vmem:[%s1214 + $0x4] sm:$0x1]
      %v1454 = vld [vmem:[%s1214 + $0x8] sm:$0xf]
      %v1455 = vld [vmem:[%s1214 + $0xc] sm:$0x1]
      %v1456 = vld [vmem:[%s1214 + $0x10] sm:$0xf]
      %v1457 = vld [vmem:[%s1214 + $0x14] sm:$0x1]
      %v1458 = vld [vmem:[%s1214 + $0x18] sm:$0xf]
      %v1459 = vld [vmem:[%s1214 + $0x1c] sm:$0x1]
      %v1460 = vld [vmem:[%s1214 + $0x20] sm:$0xf]
      %v1461 = vld [vmem:[%s1214 + $0x24] sm:$0x1]
      %v1462 = vld [vmem:[%s1214 + $0x28] sm:$0xf]
      %v1463 = vld [vmem:[%s1214 + $0x2c] sm:$0x1]
      %v1464 = vld [vmem:[%s1214 + $0x30] sm:$0xf]
      %v1465 = vld [vmem:[%s1214 + $0x34] sm:$0x1]
      %v1466 = vld [vmem:[%s1214 + $0x38] sm:$0xf]
      %v1467 = vld [vmem:[%s1214 + $0x3c] sm:$0x1]
      %v1469 = vshrl.u32 %v1452, 16
      %v1471 = vrot.slane %v1469, 4
      %v1472 = vshll.u32 %v1452, 16
      %v1474 = vrot.slane %v1472, 5
      %v1475 = vor.u32 %v1471, %v1474
      %v1476 = vrot.slane %v1475, 4
      %v1478 = vshll.u32 %v1453, 16
      %v1480 = vrot.slane %v1478, 5
      %v1481 = vsel %vm531, %v1476, %v1480
      %v1483 = vshrl.u32 %v1454, 16
      %v1485 = vrot.slane %v1483, 4
      %v1486 = vshll.u32 %v1454, 16
      %v1488 = vrot.slane %v1486, 5
      %v1489 = vor.u32 %v1485, %v1488
      %v1490 = vrot.slane %v1489, 4
      %v1492 = vshll.u32 %v1455, 16
      %v1494 = vrot.slane %v1492, 5
      %v1495 = vsel %vm531, %v1490, %v1494
      %v1497 = vshrl.u32 %v1456, 16
      %v1499 = vrot.slane %v1497, 4
      %v1500 = vshll.u32 %v1456, 16
      %v1502 = vrot.slane %v1500, 5
      %v1503 = vor.u32 %v1499, %v1502
      %v1504 = vrot.slane %v1503, 4
      %v1506 = vshll.u32 %v1457, 16
      %v1508 = vrot.slane %v1506, 5
      %v1509 = vsel %vm531, %v1504, %v1508
      %v1511 = vshrl.u32 %v1458, 16
      %v1513 = vrot.slane %v1511, 4
      %v1514 = vshll.u32 %v1458, 16
      %v1516 = vrot.slane %v1514, 5
      %v1517 = vor.u32 %v1513, %v1516
      %v1518 = vrot.slane %v1517, 4
      %v1520 = vshll.u32 %v1459, 16
      %v1522 = vrot.slane %v1520, 5
      %v1523 = vsel %vm531, %v1518, %v1522
      %v1525 = vshrl.u32 %v1460, 16
      %v1527 = vrot.slane %v1525, 4
      %v1528 = vshll.u32 %v1460, 16
      %v1530 = vrot.slane %v1528, 5
      %v1531 = vor.u32 %v1527, %v1530
      %v1532 = vrot.slane %v1531, 4
      %v1534 = vshll.u32 %v1461, 16
      %v1536 = vrot.slane %v1534, 5
      %v1537 = vsel %vm531, %v1532, %v1536
      %v1539 = vshrl.u32 %v1462, 16
      %v1541 = vrot.slane %v1539, 4
      %v1542 = vshll.u32 %v1462, 16
      %v1544 = vrot.slane %v1542, 5
      %v1545 = vor.u32 %v1541, %v1544
      %v1546 = vrot.slane %v1545, 4
      %v1548 = vshll.u32 %v1463, 16
      %v1550 = vrot.slane %v1548, 5
      %v1551 = vsel %vm531, %v1546, %v1550
      %v1553 = vshrl.u32 %v1464, 16
      %v1555 = vrot.slane %v1553, 4
      %v1556 = vshll.u32 %v1464, 16
      %v1558 = vrot.slane %v1556, 5
      %v1559 = vor.u32 %v1555, %v1558
      %v1560 = vrot.slane %v1559, 4
      %v1562 = vshll.u32 %v1465, 16
      %v1564 = vrot.slane %v1562, 5
      %v1565 = vsel %vm531, %v1560, %v1564
      %v1567 = vshrl.u32 %v1466, 16
      %v1569 = vrot.slane %v1567, 4
      %v1570 = vshll.u32 %v1466, 16
      %v1572 = vrot.slane %v1570, 5
      %v1573 = vor.u32 %v1569, %v1572
      %v1574 = vrot.slane %v1573, 4
      %v1576 = vshll.u32 %v1467, 16
      %v1578 = vrot.slane %v1576, 5
      %v1579 = vsel %vm531, %v1574, %v1578
      %s1580 = scalar_lea.vmem %s1, 16
      %v1581 = vld [vmem:[%s1580] sm:$0x3]
      %v1582 = vunpack.c.l.b16 %v1481
      %v1583 = vunpack.c.l.b16 %v1495
      %v1584 = vunpack.c.l.b16 %v1509
      %v1585 = vunpack.c.l.b16 %v1523
      %v1586 = vunpack.c.l.b16 %v1537
      %v1587 = vunpack.c.l.b16 %v1551
      %v1588 = vunpack.c.l.b16 %v1565
      %v1589 = vunpack.c.l.b16 %v1579
      %v1590 = vpack.c.b16 %v1583, %v1582
      %v1591 = vpack.c.b16 %v1585, %v1584
      %v1592 = vpack.c.b16 %v1587, %v1586
      %v1593 = vpack.c.b16 %v1589, %v1588
      %v1595 = vsel %vm331, %v1590, 0
      %v1598 = vsel %vm331, %v1591, 0
      %v1601 = vsel %vm331, %v1592, 0
      %v1604 = vsel %vm331, %v1593, 0
      %v1607 = vsel %vm344, %v1581, 0
      %1609 = vmatprep.subr.bf16.mxu0 0
      %1610 = vmatpush1.bf16.msra.mxu0 %v1607
      %1611 = vmatprep.subr.bf16.mxu0 0
      %1612 = vmatpush1.bf16.msra.mxu0 0
      %1613 = vmatprep.subr.bf16.mxu0 0
      %1614 = vmatpush1.bf16.msra.mxu0 0
      %1615 = vmatprep.subr.bf16.mxu0 0
      %1616 = vmatpush1.bf16.msra.mxu0 0
      %1617 = vmatprep.subr.bf16.mxu0 0
      %1618 = vmatpush1.bf16.msra.mxu0 0
      %1619 = vmatprep.subr.bf16.mxu0 0
      %1620 = vmatpush1.bf16.msra.mxu0 0
      %1621 = vmatprep.subr.bf16.mxu0 0
      %1622 = vmatpush1.bf16.msra.mxu0 0
      %1623 = vmatprep.subr.bf16.mxu0 0
      %1624 = vmatpush1.bf16.msra.mxu0 0
      %1625 = vmatprep.subr.bf16.mxu0 0
      %1626 = vmatpush1.bf16.msra.mxu0 0
      %1627 = vmatprep.subr.bf16.mxu0 0
      %1628 = vmatpush1.bf16.msra.mxu0 0
      %1629 = vmatprep.subr.bf16.mxu0 0
      %1630 = vmatpush1.bf16.msra.mxu0 0
      %1631 = vmatprep.subr.bf16.mxu0 0
      %1632 = vmatpush1.bf16.msra.mxu0 0
      %1633 = vmatprep.subr.bf16.mxu0 0
      %1634 = vmatpush1.bf16.msra.mxu0 0
      %1635 = vmatprep.subr.bf16.mxu0 0
      %1636 = vmatpush1.bf16.msra.mxu0 0
      %1637 = vmatprep.subr.bf16.mxu0 0
      %1638 = vmatpush1.bf16.msra.mxu0 0
      %1639 = vmatprep.subr.bf16.mxu0 0
      %1640 = vmatpush1.bf16.msra.mxu0 0
      %1641 = vmatprep.mubr.bf16.mxu0 0
      %1642 = vmatmul.mubr.bf16.gmra.mrb[0].mxu0 %v1595
      %v1643 = vpop.f32.mrb[0].mxu0
      %v1644 = vadd.f32 0.0, %v1643
      %v1645 = vpop.f32.mrb[0].mxu0
      %v1646 = vpop.f32.mrb[0].mxu0
      %v1647 = vadd.f32 0.0, %v1646
      %v1648 = vpop.f32.mrb[0].mxu0
      %1649 = vmatprep.mubr.bf16.mxu0 0
      %1650 = vmatmul.mubr.bf16.gmra.mrb[0].mxu0 %v1598
      %v1651 = vpop.f32.mrb[0].mxu0
      %v1652 = vadd.f32 0.0, %v1651
      %v1653 = vpop.f32.mrb[0].mxu0
      %v1654 = vpop.f32.mrb[0].mxu0
      %v1655 = vadd.f32 0.0, %v1654
      %v1656 = vpop.f32.mrb[0].mxu0
      %1657 = vmatprep.mubr.bf16.mxu0 0
      %1658 = vmatmul.mubr.bf16.gmra.mrb[0].mxu0 %v1601
      %v1659 = vpop.f32.mrb[0].mxu0
      %v1660 = vadd.f32 0.0, %v1659
      %v1661 = vpop.f32.mrb[0].mxu0
      %v1662 = vpop.f32.mrb[0].mxu0
      %v1663 = vadd.f32 0.0, %v1662
      %v1664 = vpop.f32.mrb[0].mxu0
      %1665 = vmatprep.mubr.bf16.mxu0 0
      %1666 = vmatmul.mubr.bf16.gmra.mrb[0].mxu0 %v1604
      %v1667 = vpop.f32.mrb[0].mxu0
      %v1668 = vadd.f32 0.0, %v1667
      %v1669 = vpop.f32.mrb[0].mxu0
      %v1670 = vpop.f32.mrb[0].mxu0
      %v1671 = vadd.f32 0.0, %v1670
      %v1672 = vpop.f32.mrb[0].mxu0
      %1673 = vdwg.mxu0
      %v1674 = vadd.f32 %v1444, %v1644
      %v1675 = vadd.f32 %v1445, %v1647
      %v1676 = vadd.f32 %v1446, %v1652
      %v1677 = vadd.f32 %v1447, %v1655
      %v1678 = vadd.f32 %v1448, %v1660
      %v1679 = vadd.f32 %v1449, %v1663
      %v1680 = vadd.f32 %v1450, %v1668
      %v1681 = vadd.f32 %v1451, %v1671
      %v1682 = vpack.c.bf16 %v1674, %v1674
      %v1683 = vpack.c.bf16 %v1675, %v1675
      %v1684 = vpack.c.bf16 %v1676, %v1676
      %v1685 = vpack.c.bf16 %v1677, %v1677
      %v1686 = vpack.c.bf16 %v1678, %v1678
      %v1687 = vpack.c.bf16 %v1679, %v1679
      %v1688 = vpack.c.bf16 %v1680, %v1680
      %v1689 = vpack.c.bf16 %v1681, %v1681
      %vm1690 = vcmask 60416
      %1691 = vst.msk [vmem:[%s276] sm:$0xf] %vm1690, %v1682
      %1692 = vst.msk [vmem:[%s276 + $0x4] sm:$0xf] %vm1690, %v1683
      %1693 = vst.msk [vmem:[%s276 + $0x8] sm:$0xf] %vm1690, %v1684
      %1694 = vst.msk [vmem:[%s276 + $0xc] sm:$0xf] %vm1690, %v1685
      %1695 = vst.msk [vmem:[%s276 + $0x10] sm:$0xf] %vm1690, %v1686
      %1696 = vst.msk [vmem:[%s276 + $0x14] sm:$0xf] %vm1690, %v1687
      %1697 = vst.msk [vmem:[%s276 + $0x18] sm:$0xf] %vm1690, %v1688
      %1698 = vst.msk [vmem:[%s276 + $0x1c] sm:$0xf] %vm1690, %v1689
      %vm1699 = vcmask 64512
      %v1700 = vsel %vm1699, %v1674, 0.0
      %v1701 = vsel %vm1699, %v1675, 0.0
      %v1702 = vadd.f32 %v1700, %v1701
      %v1703 = vsel %vm1699, %v1676, 0.0
      %v1704 = vadd.f32 %v1702, %v1703
      %v1705 = vsel %vm1699, %v1677, 0.0
      %v1706 = vadd.f32 %v1704, %v1705
      %v1707 = vsel %vm1699, %v1678, 0.0
      %v1708 = vadd.f32 %v1706, %v1707
      %v1709 = vsel %vm1699, %v1679, 0.0
      %v1710 = vadd.f32 %v1708, %v1709
      %v1711 = vsel %vm1699, %v1680, 0.0
      %v1712 = vadd.f32 %v1710, %v1711
      %v1713 = vsel %vm1699, %v1681, 0.0
      %v1714 = vadd.f32 %v1712, %v1713
      %v1715 = vrot.slane %v1714, 4
      %v1716 = vadd.f32 %v1714, %v1715
      %v1717 = vrot.slane %v1716, 2
      %v1718 = vadd.f32 %v1716, %v1717
      %v1719 = vrot.slane %v1718, 1
      %v1720 = vadd.f32 %v1718, %v1719
      %vm1721 = vcmask 57344
      %1722 = vst.msk [vmem:[%s280] sm:$0x1] %vm1721, %v1720
      %v1723 = vmul.f32 %v1674, %v1674
      %v1724 = vmul.f32 %v1675, %v1675
      %v1725 = vmul.f32 %v1676, %v1676
      %v1726 = vmul.f32 %v1677, %v1677
      %v1727 = vmul.f32 %v1678, %v1678
      %v1728 = vmul.f32 %v1679, %v1679
      %v1729 = vmul.f32 %v1680, %v1680
      %v1730 = vmul.f32 %v1681, %v1681
      %v1731 = vsel %vm1699, %v1723, 0.0
      %v1732 = vsel %vm1699, %v1724, 0.0
      %v1733 = vadd.f32 %v1731, %v1732
      %v1734 = vsel %vm1699, %v1725, 0.0
      %v1735 = vadd.f32 %v1733, %v1734
      %v1736 = vsel %vm1699, %v1726, 0.0
      %v1737 = vadd.f32 %v1735, %v1736
      %v1738 = vsel %vm1699, %v1727, 0.0
      %v1739 = vadd.f32 %v1737, %v1738
      %v1740 = vsel %vm1699, %v1728, 0.0
      %v1741 = vadd.f32 %v1739, %v1740
      %v1742 = vsel %vm1699, %v1729, 0.0
      %v1743 = vadd.f32 %v1741, %v1742
      %v1744 = vsel %vm1699, %v1730, 0.0
      %v1745 = vadd.f32 %v1743, %v1744
      %v1746 = vrot.slane %v1745, 4
      %v1747 = vadd.f32 %v1745, %v1746
      %v1748 = vrot.slane %v1747, 2
      %v1749 = vadd.f32 %v1747, %v1748
      %v1750 = vrot.slane %v1749, 1
      %v1751 = vadd.f32 %v1749, %v1750
      %1752 = vst.msk [vmem:[%s280 + $0x1] sm:$0x1] %vm1721, %v1751
      %v1753 = vld [vmem:[%s865] sm:$0xf]
      %v1754 = vld [vmem:[%s865 + $0x8] sm:$0xf]
      %v1755 = vld [vmem:[%s865 + $0x10] sm:$0xf]
      %v1756 = vld [vmem:[%s865 + $0x18] sm:$0xf]
      %v1757 = vld [vmem:[%s865 + $0x20] sm:$0xf]
      %v1758 = vld [vmem:[%s865 + $0x28] sm:$0xf]
      %v1759 = vld [vmem:[%s865 + $0x30] sm:$0xf]
      %v1760 = vld [vmem:[%s865 + $0x38] sm:$0xf]
      %v1761 = vld [vmem:[%s2] sm:$0x3]
      %v1770 = vunpack.c.l.b16 %v1753
      %v1771 = vunpack.c.l.b16 %v1754
      %v1772 = vunpack.c.l.b16 %v1755
      %v1773 = vunpack.c.l.b16 %v1756
      %v1774 = vunpack.c.l.b16 %v1757
      %v1775 = vunpack.c.l.b16 %v1758
      %v1776 = vunpack.c.l.b16 %v1759
      %v1777 = vunpack.c.l.b16 %v1760
      %v1778 = vpack.c.b16 %v1771, %v1770
      %v1779 = vpack.c.b16 %v1773, %v1772
      %v1780 = vpack.c.b16 %v1775, %v1774
      %v1781 = vpack.c.b16 %v1777, %v1776
      %v1783 = vsel %vm331, %v1778, 0
      %v1786 = vsel %vm331, %v1779, 0
      %v1789 = vsel %vm331, %v1780, 0
      %v1792 = vsel %vm331, %v1781, 0
      %v1795 = vsel %vm344, %v1761, 0
      %1797 = vmatprep.subr.bf16.mxu0 0
      %1798 = vmatpush1.bf16.msra.mxu0 %v1795
      %1799 = vmatprep.subr.bf16.mxu0 0
      %1800 = vmatpush1.bf16.msra.mxu0 0
      %1801 = vmatprep.subr.bf16.mxu0 0
      %1802 = vmatpush1.bf16.msra.mxu0 0
      %1803 = vmatprep.subr.bf16.mxu0 0
      %1804 = vmatpush1.bf16.msra.mxu0 0
      %1805 = vmatprep.subr.bf16.mxu0 0
      %1806 = vmatpush1.bf16.msra.mxu0 0
      %1807 = vmatprep.subr.bf16.mxu0 0
      %1808 = vmatpush1.bf16.msra.mxu0 0
      %1809 = vmatprep.subr.bf16.mxu0 0
      %1810 = vmatpush1.bf16.msra.mxu0 0
      %1811 = vmatprep.subr.bf16.mxu0 0
      %1812 = vmatpush1.bf16.msra.mxu0 0
      %1813 = vmatprep.subr.bf16.mxu0 0
      %1814 = vmatpush1.bf16.msra.mxu0 0
      %1815 = vmatprep.subr.bf16.mxu0 0
      %1816 = vmatpush1.bf16.msra.mxu0 0
      %1817 = vmatprep.subr.bf16.mxu0 0
      %1818 = vmatpush1.bf16.msra.mxu0 0
      %1819 = vmatprep.subr.bf16.mxu0 0
      %1820 = vmatpush1.bf16.msra.mxu0 0
      %1821 = vmatprep.subr.bf16.mxu0 0
      %1822 = vmatpush1.bf16.msra.mxu0 0
      %1823 = vmatprep.subr.bf16.mxu0 0
      %1824 = vmatpush1.bf16.msra.mxu0 0
      %1825 = vmatprep.subr.bf16.mxu0 0
      %1826 = vmatpush1.bf16.msra.mxu0 0
      %1827 = vmatprep.subr.bf16.mxu0 0
      %1828 = vmatpush1.bf16.msra.mxu0 0
      %1829 = vmatprep.mubr.bf16.mxu0 0
      %1830 = vmatmul.mubr.bf16.gmra.mrb[0].mxu0 %v1783
      %v1831 = vpop.f32.mrb[0].mxu0
      %v1832 = vadd.f32 0.0, %v1831
      %v1833 = vpop.f32.mrb[0].mxu0
      %v1834 = vpop.f32.mrb[0].mxu0
      %v1835 = vadd.f32 0.0, %v1834
      %v1836 = vpop.f32.mrb[0].mxu0
      %1837 = vmatprep.mubr.bf16.mxu0 0
      %1838 = vmatmul.mubr.bf16.gmra.mrb[0].mxu0 %v1786
      %v1839 = vpop.f32.mrb[0].mxu0
      %v1840 = vadd.f32 0.0, %v1839
      %v1841 = vpop.f32.mrb[0].mxu0
      %v1842 = vpop.f32.mrb[0].mxu0
      %v1843 = vadd.f32 0.0, %v1842
      %v1844 = vpop.f32.mrb[0].mxu0
      %1845 = vmatprep.mubr.bf16.mxu0 0
      %1846 = vmatmul.mubr.bf16.gmra.mrb[0].mxu0 %v1789
      %v1847 = vpop.f32.mrb[0].mxu0
      %v1848 = vadd.f32 0.0, %v1847
      %v1849 = vpop.f32.mrb[0].mxu0
      %v1850 = vpop.f32.mrb[0].mxu0
      %v1851 = vadd.f32 0.0, %v1850
      %v1852 = vpop.f32.mrb[0].mxu0
      %1853 = vmatprep.mubr.bf16.mxu0 0
      %1854 = vmatmul.mubr.bf16.gmra.mrb[0].mxu0 %v1792
      %v1855 = vpop.f32.mrb[0].mxu0
      %v1856 = vadd.f32 0.0, %v1855
      %v1857 = vpop.f32.mrb[0].mxu0
      %v1858 = vpop.f32.mrb[0].mxu0
      %v1859 = vadd.f32 0.0, %v1858
      %v1860 = vpop.f32.mrb[0].mxu0
      %1861 = vdwg.mxu0
      %1862 = vst.msk [vmem:[%s285] sm:$0xff] %vm1699, %v1832
      %1863 = vst.msk [vmem:[%s285 + $0x8] sm:$0xff] %vm1699, %v1835
      %1864 = vst.msk [vmem:[%s285 + $0x10] sm:$0xff] %vm1699, %v1840
      %1865 = vst.msk [vmem:[%s285 + $0x18] sm:$0xff] %vm1699, %v1843
      %1866 = vst.msk [vmem:[%s285 + $0x20] sm:$0xff] %vm1699, %v1848
      %1867 = vst.msk [vmem:[%s285 + $0x28] sm:$0xff] %vm1699, %v1851
      %1868 = vst.msk [vmem:[%s285 + $0x30] sm:$0xff] %vm1699, %v1856
      %1869 = vst.msk [vmem:[%s285 + $0x38] sm:$0xff] %vm1699, %v1859
      %v1870 = vsel %vm1699, %v1832, 0.0
      %v1871 = vsel %vm1699, %v1835, 0.0
      %v1872 = vadd.f32 %v1870, %v1871
      %v1873 = vsel %vm1699, %v1840, 0.0
      %v1874 = vadd.f32 %v1872, %v1873
      %v1875 = vsel %vm1699, %v1843, 0.0
      %v1876 = vadd.f32 %v1874, %v1875
      %v1877 = vsel %vm1699, %v1848, 0.0
      %v1878 = vadd.f32 %v1876, %v1877
      %v1879 = vsel %vm1699, %v1851, 0.0
      %v1880 = vadd.f32 %v1878, %v1879
      %v1881 = vsel %vm1699, %v1856, 0.0
      %v1882 = vadd.f32 %v1880, %v1881
      %v1883 = vsel %vm1699, %v1859, 0.0
      %v1884 = vadd.f32 %v1882, %v1883
      %v1885 = vrot.slane %v1884, 4
      %v1886 = vadd.f32 %v1884, %v1885
      %v1887 = vrot.slane %v1886, 2
      %v1888 = vadd.f32 %v1886, %v1887
      %v1889 = vrot.slane %v1888, 1
      %v1890 = vadd.f32 %v1888, %v1889
      %1891 = vst.msk [vmem:[%s289] sm:$0x1] %vm1721, %v1890
      %v1892 = vmul.f32 %v1832, %v1832
      %v1893 = vmul.f32 %v1835, %v1835
      %v1894 = vmul.f32 %v1840, %v1840
      %v1895 = vmul.f32 %v1843, %v1843
      %v1896 = vmul.f32 %v1848, %v1848
      %v1897 = vmul.f32 %v1851, %v1851
      %v1898 = vmul.f32 %v1856, %v1856
      %v1899 = vmul.f32 %v1859, %v1859
      %v1900 = vsel %vm1699, %v1892, 0.0
      %v1901 = vsel %vm1699, %v1893, 0.0
      %v1902 = vadd.f32 %v1900, %v1901
      %v1903 = vsel %vm1699, %v1894, 0.0
      %v1904 = vadd.f32 %v1902, %v1903
      %v1905 = vsel %vm1699, %v1895, 0.0
      %v1906 = vadd.f32 %v1904, %v1905
      %v1907 = vsel %vm1699, %v1896, 0.0
      %v1908 = vadd.f32 %v1906, %v1907
      %v1909 = vsel %vm1699, %v1897, 0.0
      %v1910 = vadd.f32 %v1908, %v1909
      %v1911 = vsel %vm1699, %v1898, 0.0
      %v1912 = vadd.f32 %v1910, %v1911
      %v1913 = vsel %vm1699, %v1899, 0.0
      %v1914 = vadd.f32 %v1912, %v1913
      %v1915 = vrot.slane %v1914, 4
      %v1916 = vadd.f32 %v1914, %v1915
      %v1917 = vrot.slane %v1916, 2
      %v1918 = vadd.f32 %v1916, %v1917
      %v1919 = vrot.slane %v1918, 1
      %v1920 = vadd.f32 %v1918, %v1919
      %1921 = vst.msk [vmem:[%s289 + $0x1] sm:$0x1] %vm1721, %v1920
      %p1922 = scmp.lt.s32.totalorder %s18, 1
      %s1923 = scalar_select %p1922, %s18, 1
      %s1924 = smul.addr %s1923, 8
      %s1925 = smul.addr %s1924, 4
      %s1926 = scalar_lea.vmem %s3, %s1925
      %p1927 = scmp.lt.s32.totalorder %s18, 1
      %s1928 = scalar_select %p1927, %s18, 1
      %s1929 = smul.addr %s1928, 2
      %s1930 = scalar_lea.vmem %s4, %s1929
      %p1931 = scmp.lt.s32.totalorder %s18, 1
      %s1932 = scalar_select %p1931, %s18, 1
      %s1933 = smul.addr %s1932, 8
      %s1934 = smul.addr %s1933, 8
      %s1935 = scalar_lea.vmem %s5, %s1934
      %p1936 = scmp.lt.s32.totalorder %s18, 1
      %s1937 = scalar_select %p1936, %s18, 1
      %s1938 = smul.addr %s1937, 2
      %s1939 = scalar_lea.vmem %s6, %s1938
      // Predicated region
      $region33: #{res_block_forward.3} parent=31 // pred_check
        %p1940 = pneg %p104
      $region34: #{res_block_forward.3} parent=31 // pred_check_branch
        %1942 = sbr.rel (%p1940) target = $region36
      $region35: #{res_block_forward.3} parent=31 // pred_region
        _
      $region36: #{res_block_forward.3} parent=31 // pred_fallthru
        _
      // Predicated region
      $region37: #{res_block_forward.3} parent=31 // pred_check
        %p1943 = pneg %p130
      $region38: #{res_block_forward.3} parent=31 // pred_check_branch
        %1945 = sbr.rel (%p1943) target = $region40
      $region39: #{res_block_forward.3} parent=31 // pred_region
        _
      $region40: #{res_block_forward.3} parent=31 // pred_fallthru
        _
      // Predicated region
      $region41: #{res_block_forward.3} parent=31 // pred_check
        %p1946 = pneg %p156
      $region42: #{res_block_forward.3} parent=31 // pred_check_branch
        %1948 = sbr.rel (%p1946) target = $region44
      $region43: #{res_block_forward.3} parent=31 // pred_region
        _
      $region44: #{res_block_forward.3} parent=31 // pred_fallthru
        _
      // Predicated region
      $region45: #{res_block_forward.3} parent=31 // pred_check
        %p1949 = pneg %p182
      $region46: #{res_block_forward.3} parent=31 // pred_check_branch
        %1951 = sbr.rel (%p1949) target = $region48
      $region47: #{res_block_forward.3} parent=31 // pred_region
        _
      $region48: #{res_block_forward.3} parent=31 // pred_fallthru
        _
    $region32: #{res_block_forward.3} parent=5 // pred_fallthru
      _
    %p1952 = scmp.le.s32.totalorder 2, %s13
    // Predicated region
    $region49: #{res_block_forward.3} parent=5 // pred_check
      %p1953 = pneg %p1952
    $region50: #{res_block_forward.3} parent=5 // pred_check_branch
      %1955 = sbr.rel (%p1953) target = $region52
    $region51: #{res_block_forward.3} parent=5 // pred_region
      %s1956 = ssub.s32 %s13, 2
      // Predicated region
      $region53: #{res_block_forward.3} parent=51 // pred_check
        %p1957 = pneg %p110
      $region54: #{res_block_forward.3} parent=51 // pred_check_branch
        %1959 = sbr.rel (%p1957) target = $region56
      $region55: #{res_block_forward.3} parent=51 // pred_region
        %p1960 = scmp.lt.s32.totalorder %s19, 1
        %s1961 = scalar_select %p1960, %s19, 1
        %s1962 = smul.addr %s1961, 8
        %s1963 = smul.addr %s1962, 4
        %s1964 = scalar_lea.vmem %s3, %s1963
      $region56: #{res_block_forward.3} parent=51 // pred_fallthru
        _
      // Predicated region
      $region57: #{res_block_forward.3} parent=51 // pred_check
        %p1965 = pneg %p136
      $region58: #{res_block_forward.3} parent=51 // pred_check_branch
        %1967 = sbr.rel (%p1965) target = $region60
      $region59: #{res_block_forward.3} parent=51 // pred_region
        %p1968 = scmp.lt.s32.totalorder %s19, 1
        %s1969 = scalar_select %p1968, %s19, 1
        %s1970 = smul.addr %s1969, 2
        %s1971 = scalar_lea.vmem %s4, %s1970
      $region60: #{res_block_forward.3} parent=51 // pred_fallthru
        _
      // Predicated region
      $region61: #{res_block_forward.3} parent=51 // pred_check
        %p1972 = pneg %p162
      $region62: #{res_block_forward.3} parent=51 // pred_check_branch
        %1974 = sbr.rel (%p1972) target = $region64
      $region63: #{res_block_forward.3} parent=51 // pred_region
        %p1975 = scmp.lt.s32.totalorder %s19, 1
        %s1976 = scalar_select %p1975, %s19, 1
        %s1977 = smul.addr %s1976, 8
        %s1978 = smul.addr %s1977, 8
        %s1979 = scalar_lea.vmem %s5, %s1978
      $region64: #{res_block_forward.3} parent=51 // pred_fallthru
        _
      // Predicated region
      $region65: #{res_block_forward.3} parent=51 // pred_check
        %p1980 = pneg %p188
      $region66: #{res_block_forward.3} parent=51 // pred_check_branch
        %1982 = sbr.rel (%p1980) target = $region68
      $region67: #{res_block_forward.3} parent=51 // pred_region
        %p1983 = scmp.lt.s32.totalorder %s19, 1
        %s1984 = scalar_select %p1983, %s19, 1
        %s1985 = smul.addr %s1984, 2
        %s1986 = scalar_lea.vmem %s6, %s1985
      $region68: #{res_block_forward.3} parent=51 // pred_fallthru
        _
    $region52: #{res_block_forward.3} parent=5 // pred_fallthru
      _
  $region6: #{res_block_forward.3} parent=0 // loop_footer
    %s17 = sadd.s32 1, %s13
  $region7: #{res_block_forward.3} parent=0 // loop_footer_branch
    %12 = sbr.rel target = $region3
  $region8: #{res_block_forward.3} parent=0 // loop_exit
    _

</llo_original>
